<compile_context>
chip_gen: v7x
topology: tpu7x:2x2x1
jax: 0.10.0
libtpu: 0.0.40
codegen_flags: <defaults>
</compile_context>

<pallas_src>
import functools
import math

import jax
import jax.numpy as jnp
from jax.experimental import pallas as pl
from jax.experimental.pallas import tpu as pltpu

_INV_SQRT_2PI = 1.0 / math.sqrt(2.0 * math.pi)
_LOG3 = math.log(3.0)


def _round_up(a, b):
    return ((a + b - 1) // b) * b


def _pick_tile(total, want):
    """Largest multiple-of-128 divisor of `total` (a multiple of 128) <= want."""
    want = max(128, min(want, total))
    t = (want // 128) * 128
    while total % t:
        t -= 128
    return t


def _vmem_limit_bytes():
    # Budget ~3/4 of physical VMEM (64 MiB on v7x, 128 MiB on v5e/v6e).
    try:
        cap = int(pltpu.get_tpu_info().vmem_capacity_bytes)
    except Exception:
        cap = 64 * 1024 * 1024          # real fallback, not None
    return min(100 * 1024 * 1024, (cap * 3) // 4)


# ------------------- kernel 1: fused QKV + sigma projection -------------------
def _proj_kernel(x_ref, w_ref, q_ref, k_ref, v_ref, sig_ref, *, d_model):
    # One MXU matmul: (TM, D) @ (D, C) where C packs [Wq^T | Wk^T | Wv^T | Ws^T | 0].
    res = jnp.dot(x_ref[...], w_ref[...], preferred_element_type=jnp.float32)
    d = d_model
    q_ref[...] = res[:, 0:d].astype(q_ref.dtype)
    k_ref[...] = res[:, d:2 * d].astype(k_ref.dtype)
    v_ref[...] = res[:, 2 * d:3 * d].astype(v_ref.dtype)
    # sigma activation fused here (per-row, negligible cost).
    sig_raw = res[:, 3 * d:3 * d + 1]
    s_act = jax.nn.sigmoid(sig_raw * 5.0) + 1e-5
    sigma = jnp.exp(s_act * jnp.float32(_LOG3)) - 1.0          # 3**s - 1
    sig_ref[...] = sigma.astype(sig_ref.dtype)


# --------------- kernel 2: series association + reconstruction ----------------
def _attn_z_kernel(q_ref, k_ref, v_ref, z_ref, acc_ref, *, scale):
    ki = pl.program_id(1)

    @pl.when(ki == 0)
    def _():
        acc_ref[...] = jnp.zeros_like(acc_ref)

    q = q_ref[...]                      # (B, TQ, D)  bf16
    k = k_ref[...]                      # (B, TK, D)  bf16
    v = v_ref[...]                      # (B, TK, D)  bf16

    scores = jnp.einsum('bqd,bkd->bqk', q, k,
                        preferred_element_type=jnp.float32)
    scores = scores * jnp.float32(scale)

    # softmax over the BATCH dimension (dim=0): per-(q,k) entry, so key tiles
    # are independent -> plain accumulation, no online softmax needed.
    m = jnp.max(scores, axis=0, keepdims=True)
    e = jnp.exp(scores - m)
    denom = jnp.sum(e, axis=0, keepdims=True)
    s = e * pl.reciprocal(denom, approx=True)                   # (B, TQ, TK)

    # Padded key rows of V are exactly zero (zero-padded x, no bias folded into
    # the fused weights), so padded keys contribute nothing to Z.
    acc_ref[...] += jnp.einsum('bqk,bkd->bqd', s.astype(v.dtype), v,
                               preferred_element_type=jnp.float32)

    @pl.when(ki == pl.num_programs(1) - 1)
    def _():
        z_ref[...] = acc_ref[...].astype(z_ref.dtype)


# -------- kernel 3a: prior association row sums (valid keys only) -------------
def _prior_rowsum_kernel(sigma_ref, rs_ref, *, n_valid, tk):
    ki = pl.program_id(1)

    @pl.when(ki == 0)
    def _():
        rs_ref[...] = jnp.zeros_like(rs_ref)

    tq = sigma_ref.shape[1]
    sigma = sigma_ref[...].astype(jnp.float32)                  # (B, TQ, 1)
    inv_sigma = pl.reciprocal(sigma, approx=False)              # exact: gets squared
    inv_norm = inv_sigma * jnp.float32(_INV_SQRT_2PI)
    coeff = -0.5 * inv_sigma * inv_sigma

    q0 = pl.program_id(0) * tq
    k0 = ki * tk
    row = jax.lax.broadcasted_iota(jnp.int32, (tq, tk), 0) + q0
    col = jax.lax.broadcasted_iota(jnp.int32, (tq, tk), 1) + k0
    diff = (row - col).astype(jnp.float32)
    dist2 = diff * diff                                         # |i-j|^2

    gauss = inv_norm * jnp.exp(coeff * dist2[None, :, :])       # (B, TQ, TK)
    gauss = jnp.where((col < n_valid)[None, :, :], gauss, 0.0)  # mask padded keys
    rs_ref[...] += jnp.sum(gauss, axis=2)                       # (B, TQ)


# -------- kernel 3b: prior association, normalize-on-write (single P pass) ----
def _prior_write_kernel(inv_ref, sigma_ref, p_ref):
    tq = p_ref.shape[1]
    tk = p_ref.shape[2]

    sigma = sigma_ref[...].astype(jnp.float32)                  # (B, TQ, 1)
    inv_sigma = pl.reciprocal(sigma, approx=False)
    inv_norm = inv_sigma * jnp.float32(_INV_SQRT_2PI)
    coeff = -0.5 * inv_sigma * inv_sigma

    q0 = pl.program_id(0) * tq
    k0 = pl.program_id(1) * tk
    row = jax.lax.broadcasted_iota(jnp.int32, (tq, tk), 0) + q0
    col = jax.lax.broadcasted_iota(jnp.int32, (tq, tk), 1) + k0
    diff = (row - col).astype(jnp.float32)
    dist2 = diff * diff

    gauss = inv_norm * jnp.exp(coeff * dist2[None, :, :])       # (B, TQ, TK)
    p_ref[...] = (gauss * inv_ref[...]).astype(p_ref.dtype)     # per-batch 1/total


# ------------------------------------ wrapper ---------------------------------
def anomaly_attention(x, wq, wk, wv, ws, *, tq=256, tk=512, tm=512):
    """x: (B, N, D); wq/wk/wv: (D, D); ws: (1, D) (nn.Linear weight layout).
    Returns (Z, P): Z (B, N, D), P (B, N, N)."""
    B, N, D = x.shape
    n_pad = _round_up(N, 128)           # lane-dense sequence dim
    tq = _pick_tile(n_pad, tq)
    tk = _pick_tile(n_pad, tk)

    vlim = _vmem_limit_bytes()
    cdt = jnp.bfloat16                  # MXU compute dtype (f32 accumulation)

    # ---- pad sequence dim (zero rows -> zero K/V rows, harmless for Z) ----
    x_p = jnp.pad(x, ((0, 0), (0, n_pad - N), (0, 0)))
    m_rows = B * n_pad
    tm = _pick_tile(m_rows, tm)
    x2d = x_p.reshape(m_rows, D).astype(cdt)

    # ---- fused, pre-transposed projection weight: [Wq^T | Wk^T | Wv^T | Ws^T | 0]
    w_fused = jnp.concatenate([wq.T, wk.T, wv.T, ws.T], axis=1)
    c_cols = _round_up(3 * D + 1, 128)
    w_fused = jnp.pad(w_fused, ((0, 0), (0, c_cols - (3 * D + 1)))).astype(cdt)

    # ---- kernel 1: single (B*Npad, D) x (D, C) matmul, 4 separate outputs ----
    q2d, k2d, v2d, sig2d = pl.pallas_call(
        functools.partial(_proj_kernel, d_model=D),
        grid=(m_rows // tm,),
        in_specs=[pl.BlockSpec((tm, D), lambda i: (i, 0)),
                  pl.BlockSpec((D, c_cols), lambda i: (0, 0))],
        out_specs=[pl.BlockSpec((tm, D), lambda i: (i, 0)),
                   pl.BlockSpec((tm, D), lambda i: (i, 0)),
                   pl.BlockSpec((tm, D), lambda i: (i, 0)),
                   pl.BlockSpec((tm, 1), lambda i: (i, 0))],
        out_shape=(jax.ShapeDtypeStruct((m_rows, D), cdt),
                   jax.ShapeDtypeStruct((m_rows, D), cdt),
                   jax.ShapeDtypeStruct((m_rows, D), cdt),
                   jax.ShapeDtypeStruct((m_rows, 1), jnp.float32)),
        compiler_params=pltpu.CompilerParams(
            dimension_semantics=("parallel",), vmem_limit_bytes=vlim),
    )(x2d, w_fused)

    q = q2d.reshape(B, n_pad, D)        # major-dim reshape: free
    k = k2d.reshape(B, n_pad, D)
    v = v2d.reshape(B, n_pad, D)
    sigma = sig2d.reshape(B, n_pad, 1)  # already activated: 3**(sigmoid+eps)-1

    # ---- kernel 2: Z path, grid over (query tile, key tile), VMEM accumulator
    z_pad = pl.pallas_call(
        functools.partial(_attn_z_kernel, scale=1.0 / math.sqrt(D)),
        grid=(n_pad // tq, n_pad // tk),
        in_specs=[pl.BlockSpec((B, tq, D), lambda qi, ki: (0, qi, 0)),
                  pl.BlockSpec((B, tk, D), lambda qi, ki: (0, ki, 0)),
                  pl.BlockSpec((B, tk, D), lambda qi, ki: (0, ki, 0))],
        out_specs=pl.BlockSpec((B, tq, D), lambda qi, ki: (0, qi, 0)),
        out_shape=jax.ShapeDtypeStruct((B, n_pad, D), x.dtype),
        scratch_shapes=[pltpu.VMEM((B, tq, D), jnp.float32)],
        compiler_params=pltpu.CompilerParams(
            dimension_semantics=("parallel", "arbitrary"), vmem_limit_bytes=vlim),
    )(q, k, v)

    # ---- kernel 3a: per-row prior sums (tiny output, key-masked to N) ----
    row_sums = pl.pallas_call(
        functools.partial(_prior_rowsum_kernel, n_valid=N, tk=tk),
        grid=(n_pad // tq, n_pad // tk),
        in_specs=[pl.BlockSpec((B, tq, 1), lambda qi, ki: (0, qi, 0))],
        out_specs=pl.BlockSpec((B, tq), lambda qi, ki: (0, qi)),
        out_shape=jax.ShapeDtypeStruct((B, n_pad), jnp.float32),
        compiler_params=pltpu.CompilerParams(
            dimension_semantics=("parallel", "arbitrary"), vmem_limit_bytes=vlim),
    )(sigma)

    # Per-batch (N,N)-slab totals from valid rows only; tiny reduction in XLA.
    inv_tot = (1.0 / jnp.sum(row_sums[:, :N], axis=1)).reshape(B, 1, 1)
    inv_tot = inv_tot.astype(jnp.float32)

    # ---- kernel 3b: normalized P written in a single HBM pass ----
    p_pad = pl.pallas_call(
        _prior_write_kernel,
        grid=(n_pad // tq, n_pad // tk),
        in_specs=[pl.BlockSpec((B, 1, 1), lambda qi, ki: (0, 0, 0)),
                  pl.BlockSpec((B, tq, 1), lambda qi, ki: (0, qi, 0))],
        out_specs=pl.BlockSpec((B, tq, tk), lambda qi, ki: (0, qi, ki)),
        out_shape=jax.ShapeDtypeStruct((B, n_pad, n_pad), x.dtype),
        compiler_params=pltpu.CompilerParams(
            dimension_semantics=("parallel", "parallel"), vmem_limit_bytes=vlim),
    )(inv_tot, sigma)

    # TODO(synk): if N is not a multiple of 128, the final [:N, :N] slice is an
    # unavoidable XLA copy of the padded P; it is identity when N % 128 == 0.
    z = z_pad[:, :N, :]
    p = p_pad[:, :N, :N]
    return z, p


# ------------------------------ pure-JAX reference ----------------------------
def _reference(x, wq, wk, wv, ws):
    B, N, D = x.shape
    q = jnp.einsum('bnd,ed->bne', x, wq)
    k = jnp.einsum('bnd,ed->bne', x, wk)
    v = jnp.einsum('bnd,ed->bne', x, wv)
    sigma = jnp.einsum('bnd,od->bno', x, ws)
    sigma = jax.nn.sigmoid(sigma * 5.0) + 1e-5
    sigma = jnp.power(3.0, sigma) - 1.0
    idx = jnp.arange(N, dtype=jnp.float32)
    dist = jnp.abs(idx[:, None] - idx[None, :])
    gauss = (1.0 / (jnp.sqrt(2.0 * jnp.pi) * sigma)) * jnp.exp(
        -0.5 * (dist[None, :, :] / sigma) ** 2)
    p = gauss / jnp.sum(gauss, axis=(1, 2), keepdims=True)
    scores = jnp.einsum('bnd,bmd->bnm', q, k) / jnp.sqrt(jnp.float32(D))
    s = jax.nn.softmax(scores, axis=0)
    z = jnp.einsum('bnm,bmd->bnd', s, v)
    return z, p


if __name__ == "__main__":
    B, N, D = 2, 8, 32   # batch, sequence length (module's N), d_model

    key = jax.random.PRNGKey(0)
    kx, kq, kk, kv, ks = jax.random.split(key, 5)
    scale = 1.0 / math.sqrt(D)

    x = jax.random.normal(kx, (B, N, D), dtype=jnp.float32)
    wq = jax.random.normal(kq, (D, D), dtype=jnp.float32) * scale   # (out, in)
    wk = jax.random.normal(kk, (D, D), dtype=jnp.float32) * scale
    wv = jax.random.normal(kv, (D, D), dtype=jnp.float32) * scale
    ws = jax.random.normal(ks, (1, D), dtype=jnp.float32) * scale   # Linear(D, 1)

    fwd = jax.jit(anomaly_attention)
    z, p = fwd(x, wq, wk, wv, ws)
    jax.block_until_ready((z, p))

    z_ref, p_ref = _reference(x, wq, wk, wv, ws)
    assert z.shape == (B, N, D) and p.shape == (B, N, N)
    # Tolerances cover bf16 MXU inputs (f32 accumulation).
    assert jnp.allclose(z, z_ref, atol=3e-2, rtol=3e-2), \
        float(jnp.max(jnp.abs(z - z_ref)))
    assert jnp.allclose(p, p_ref, atol=3e-2, rtol=3e-2), \
        float(jnp.max(jnp.abs(p - p_ref)))

    print("KERNEL_OK")
</pallas_src>

<mosaic_0001>
module attributes {stable_mosaic.version = 11 : i64} {
  func.func @_proj_kernel(%arg0: i32, %arg1: memref<256x32xbf16, #tpu.memory_space<vmem>>, %arg2: memref<32x128xbf16, #tpu.memory_space<vmem>>, %arg3: memref<256x32xbf16, #tpu.memory_space<vmem>>, %arg4: memref<256x32xbf16, #tpu.memory_space<vmem>>, %arg5: memref<256x32xbf16, #tpu.memory_space<vmem>>, %arg6: memref<256x1xf32, #tpu.memory_space<vmem>>) attributes {dimension_semantics = [#tpu.dimension_semantics<parallel>], iteration_bounds = array<i64: 1>, scalar_prefetch = 0 : i64, scratch_operands = 0 : i64, tpu.core_type = #tpu.core_type<tc>, window_params = [{transform_indices = @transform_0, window_bounds = array<i64: 256, 32>}, {pipeline_mode = #tpu.pipeline_mode<synchronous>, transform_indices = @transform_1, window_bounds = array<i64: 32, 128>}, {transform_indices = @transform_2, window_bounds = array<i64: 256, 32>}, {transform_indices = @transform_3, window_bounds = array<i64: 256, 32>}, {transform_indices = @transform_4, window_bounds = array<i64: 256, 32>}, {transform_indices = @transform_5, window_bounds = array<i64: 256, 1>}]} {
    %c0 = arith.constant 0 : index
    %c0_0 = arith.constant 0 : index
    %0 = vector.load %arg1[%c0, %c0_0] : memref<256x32xbf16, #tpu.memory_space<vmem>>, vector<256x32xbf16>
    %c0_1 = arith.constant 0 : index
    %c0_2 = arith.constant 0 : index
    %1 = vector.load %arg2[%c0_1, %c0_2] : memref<32x128xbf16, #tpu.memory_space<vmem>>, vector<32x128xbf16>
    %cst = arith.constant dense<0.000000e+00> : vector<256x128xf32>
    %2 = tpu.matmul %0, %1, %cst {dimension_numbers = #tpu.dot_dimension_numbers<[1], [0], [0], [1], [0, 0, 1, 1], [], []>} : vector<256x32xbf16>, vector<32x128xbf16>, vector<256x128xf32> -> vector<256x128xf32>
    %3 = vector.extract_strided_slice %2 {offsets = [0, 0], sizes = [256, 32], strides = [1, 1]} : vector<256x128xf32> to vector<256x32xf32>
    %4 = arith.truncf %3 : vector<256x32xf32> to vector<256x32xbf16>
    %c0_3 = arith.constant 0 : index
    %c0_4 = arith.constant 0 : index
    %5 = vector.load %arg3[%c0_3, %c0_4] : memref<256x32xbf16, #tpu.memory_space<vmem>>, vector<256x32xbf16>
    tpu.vector_store %arg3[%c0_3, %c0_4], %4 {strides = array<i32>} : memref<256x32xbf16, #tpu.memory_space<vmem>>, vector<256x32xbf16>,
    %6 = vector.extract_strided_slice %2 {offsets = [0, 32], sizes = [256, 32], strides = [1, 1]} : vector<256x128xf32> to vector<256x32xf32>
    %7 = arith.truncf %6 : vector<256x32xf32> to vector<256x32xbf16>
    %c0_5 = arith.constant 0 : index
    %c0_6 = arith.constant 0 : index
    %8 = vector.load %arg4[%c0_5, %c0_6] : memref<256x32xbf16, #tpu.memory_space<vmem>>, vector<256x32xbf16>
    tpu.vector_store %arg4[%c0_5, %c0_6], %7 {strides = array<i32>} : memref<256x32xbf16, #tpu.memory_space<vmem>>, vector<256x32xbf16>,
    %9 = vector.extract_strided_slice %2 {offsets = [0, 64], sizes = [256, 32], strides = [1, 1]} : vector<256x128xf32> to vector<256x32xf32>
    %10 = arith.truncf %9 : vector<256x32xf32> to vector<256x32xbf16>
    %c0_7 = arith.constant 0 : index
    %c0_8 = arith.constant 0 : index
    %11 = vector.load %arg5[%c0_7, %c0_8] : memref<256x32xbf16, #tpu.memory_space<vmem>>, vector<256x32xbf16>
    tpu.vector_store %arg5[%c0_7, %c0_8], %10 {strides = array<i32>} : memref<256x32xbf16, #tpu.memory_space<vmem>>, vector<256x32xbf16>,
    %12 = vector.extract_strided_slice %2 {offsets = [0, 96], sizes = [256, 1], strides = [1, 1]} : vector<256x128xf32> to vector<256x1xf32>
    %cst_9 = arith.constant 5.000000e+00 : f32
    %13 = vector.broadcast %cst_9 : f32 to vector<256x1xf32>
    %14 = arith.mulf %12, %13 : vector<256x1xf32>
    %15 = arith.negf %14 : vector<256x1xf32>
    %16 = math.exp %15 : vector<256x1xf32>
    %cst_10 = arith.constant 1.000000e+00 : f32
    %17 = vector.broadcast %cst_10 : f32 to vector<256x1xf32>
    %18 = arith.addf %17, %16 : vector<256x1xf32>
    %19 = arith.divf %17, %18 : vector<256x1xf32>
    %cst_11 = arith.constant 9.99999974E-6 : f32
    %20 = vector.broadcast %cst_11 : f32 to vector<256x1xf32>
    %21 = arith.addf %19, %20 : vector<256x1xf32>
    %cst_12 = arith.constant 1.09861231 : f32
    %22 = vector.broadcast %cst_12 : f32 to vector<256x1xf32>
    %23 = arith.mulf %21, %22 : vector<256x1xf32>
    %24 = math.exp %23 : vector<256x1xf32>
    %cst_13 = arith.constant 1.000000e+00 : f32
    %25 = vector.broadcast %cst_13 : f32 to vector<256x1xf32>
    %26 = arith.subf %24, %25 : vector<256x1xf32>
    %c0_14 = arith.constant 0 : index
    %c0_15 = arith.constant 0 : index
    %27 = vector.load %arg6[%c0_14, %c0_15] : memref<256x1xf32, #tpu.memory_space<vmem>>, vector<256x1xf32>
    tpu.vector_store %arg6[%c0_14, %c0_15], %26 {strides = array<i32>} : memref<256x1xf32, #tpu.memory_space<vmem>>, vector<256x1xf32>,
    return
  }
  func.func @transform_0(%arg0: i32) -> (i32, i32) {
    %c0_i32 = arith.constant 0 : i32
    %c0_i32_0 = arith.constant 0 : i32
    return %arg0, %c0_i32 : i32, i32
  }
  func.func @transform_1(%arg0: i32) -> (i32, i32) {
    %c0_i32 = arith.constant 0 : i32
    %c0_i32_0 = arith.constant 0 : i32
    %c0_i32_1 = arith.constant 0 : i32
    return %c0_i32, %c0_i32_0 : i32, i32
  }
  func.func @transform_2(%arg0: i32) -> (i32, i32) {
    %c0_i32 = arith.constant 0 : i32
    %c0_i32_0 = arith.constant 0 : i32
    return %arg0, %c0_i32 : i32, i32
  }
  func.func @transform_3(%arg0: i32) -> (i32, i32) {
    %c0_i32 = arith.constant 0 : i32
    %c0_i32_0 = arith.constant 0 : i32
    return %arg0, %c0_i32 : i32, i32
  }
  func.func @transform_4(%arg0: i32) -> (i32, i32) {
    %c0_i32 = arith.constant 0 : i32
    %c0_i32_0 = arith.constant 0 : i32
    return %arg0, %c0_i32 : i32, i32
  }
  func.func @transform_5(%arg0: i32) -> (i32, i32) {
    %c0_i32 = arith.constant 0 : i32
    %c0_i32_0 = arith.constant 0 : i32
    return %arg0, %c0_i32 : i32, i32
  }
}

module attributes {stable_mosaic.version = 11 : i64} {
  func.func @_prior_write_kernel(%arg0: i32, %arg1: i32, %arg2: memref<2x1x1xf32, #tpu.memory_space<vmem>>, %arg3: memref<2x128x1xf32, #tpu.memory_space<vmem>>, %arg4: memref<2x128x128xf32, #tpu.memory_space<vmem>>) attributes {dimension_semantics = [#tpu.dimension_semantics<parallel>, #tpu.dimension_semantics<parallel>], iteration_bounds = array<i64: 1, 1>, scalar_prefetch = 0 : i64, scratch_operands = 0 : i64, tpu.core_type = #tpu.core_type<tc>, window_params = [{pipeline_mode = #tpu.pipeline_mode<synchronous>, transform_indices = @transform_0, window_bounds = array<i64: 2, 1, 1>}, {transform_indices = @transform_1, window_bounds = array<i64: 2, 128, 1>}, {transform_indices = @transform_2, window_bounds = array<i64: 2, 128, 128>}]} {
    %c0 = arith.constant 0 : index
    %c0_0 = arith.constant 0 : index
    %c0_1 = arith.constant 0 : index
    %0 = vector.load %arg3[%c0, %c0_0, %c0_1] : memref<2x128x1xf32, #tpu.memory_space<vmem>>, vector<2x128x1xf32>
    %1 = tpu.reciprocal %0 : vector<2x128x1xf32> -> vector<2x128x1xf32>
    %cst = arith.constant 0.398942292 : f32
    %2 = vector.broadcast %cst : f32 to vector<2x128x1xf32>
    %3 = arith.mulf %1, %2 : vector<2x128x1xf32>
    %cst_2 = arith.constant -5.000000e-01 : f32
    %4 = vector.broadcast %cst_2 : f32 to vector<2x128x1xf32>
    %5 = arith.mulf %4, %1 : vector<2x128x1xf32>
    %6 = arith.mulf %5, %1 : vector<2x128x1xf32>
    %c128_i32 = arith.constant 128 : i32
    %7 = arith.muli %arg0, %c128_i32 : i32
    %c128_i32_3 = arith.constant 128 : i32
    %8 = arith.muli %arg1, %c128_i32_3 : i32
    %9 = tpu.iota {dimensions = array<i32: 0>} : vector<128x128xi32>
    %10 = vector.broadcast %7 : i32 to vector<128x128xi32>
    %11 = arith.addi %9, %10 : vector<128x128xi32>
    %12 = tpu.iota {dimensions = array<i32: 1>} : vector<128x128xi32>
    %13 = vector.broadcast %8 : i32 to vector<128x128xi32>
    %14 = arith.addi %12, %13 : vector<128x128xi32>
    %15 = arith.subi %11, %14 : vector<128x128xi32>
    %16 = arith.sitofp %15 : vector<128x128xi32> to vector<128x128xf32>
    %17 = arith.mulf %16, %16 : vector<128x128xf32>
    %18 = vector.shape_cast %17 : vector<128x128xf32> to vector<1x128x128xf32>
    %19 = vector.broadcast %6 : vector<2x128x1xf32> to vector<2x128x128xf32>
    %20 = vector.broadcast %18 : vector<1x128x128xf32> to vector<2x128x128xf32>
    %21 = arith.mulf %19, %20 : vector<2x128x128xf32>
    %22 = math.exp %21 : vector<2x128x128xf32>
    %23 = vector.broadcast %3 : vector<2x128x1xf32> to vector<2x128x128xf32>
    %24 = arith.mulf %23, %22 : vector<2x128x128xf32>
    %c0_4 = arith.constant 0 : index
    %c0_5 = arith.constant 0 : index
    %c0_6 = arith.constant 0 : index
    %25 = vector.load %arg2[%c0_4, %c0_5, %c0_6] : memref<2x1x1xf32, #tpu.memory_space<vmem>>, vector<2x1x1xf32>
    %26 = vector.broadcast %25 : vector<2x1x1xf32> to vector<2x128x128xf32>
    %27 = arith.mulf %24, %26 : vector<2x128x128xf32>
    %c0_7 = arith.constant 0 : index
    %c0_8 = arith.constant 0 : index
    %c0_9 = arith.constant 0 : index
    %28 = vector.load %arg4[%c0_7, %c0_8, %c0_9] : memref<2x128x128xf32, #tpu.memory_space<vmem>>, vector<2x128x128xf32>
    tpu.vector_store %arg4[%c0_7, %c0_8, %c0_9], %27 {strides = array<i32>} : memref<2x128x128xf32, #tpu.memory_space<vmem>>, vector<2x128x128xf32>,
    return
  }
  func.func @transform_0(%arg0: i32, %arg1: i32) -> (i32, i32, i32) {
    %c0_i32 = arith.constant 0 : i32
    %c0_i32_0 = arith.constant 0 : i32
    %c0_i32_1 = arith.constant 0 : i32
    %c0_i32_2 = arith.constant 0 : i32
    return %c0_i32, %c0_i32_0, %c0_i32_1 : i32, i32, i32
  }
  func.func @transform_1(%arg0: i32, %arg1: i32) -> (i32, i32, i32) {
    %c0_i32 = arith.constant 0 : i32
    %c0_i32_0 = arith.constant 0 : i32
    %c0_i32_1 = arith.constant 0 : i32
    return %c0_i32, %arg0, %c0_i32_0 : i32, i32, i32
  }
  func.func @transform_2(%arg0: i32, %arg1: i32) -> (i32, i32, i32) {
    %c0_i32 = arith.constant 0 : i32
    %c0_i32_0 = arith.constant 0 : i32
    return %c0_i32, %arg0, %arg1 : i32, i32, i32
  }
}

module attributes {stable_mosaic.version = 11 : i64} {
  func.func @_attn_z_kernel(%arg0: i32, %arg1: i32, %arg2: memref<2x128x32xbf16, #tpu.memory_space<vmem>>, %arg3: memref<2x128x32xbf16, #tpu.memory_space<vmem>>, %arg4: memref<2x128x32xbf16, #tpu.memory_space<vmem>>, %arg5: memref<2x128x32xf32, #tpu.memory_space<vmem>>, %arg6: memref<2x128x32xf32, #tpu.memory_space<vmem>>) attributes {dimension_semantics = [#tpu.dimension_semantics<parallel>, #tpu.dimension_semantics<arbitrary>], iteration_bounds = array<i64: 1, 1>, scalar_prefetch = 0 : i64, scratch_operands = 1 : i64, tpu.core_type = #tpu.core_type<tc>, window_params = [{transform_indices = @transform_0, window_bounds = array<i64: 2, 128, 32>}, {transform_indices = @transform_1, window_bounds = array<i64: 2, 128, 32>}, {transform_indices = @transform_2, window_bounds = array<i64: 2, 128, 32>}, {transform_indices = @transform_3, window_bounds = array<i64: 2, 128, 32>}]} {
    %c0_i32 = arith.constant 0 : i32
    %0 = arith.cmpi eq, %arg1, %c0_i32 : i32
    %1 = arith.extui %0 : i1 to i32
    %c0_i32_0 = arith.constant 0 : i32
    %2 = arith.cmpi ne, %1, %c0_i32_0 : i32
    scf.if %2 {
      %cst_21 = arith.constant 0.000000e+00 : f32
      %27 = vector.broadcast %cst_21 : f32 to vector<2x128x32xf32>
      %c0_22 = arith.constant 0 : index
      %c0_23 = arith.constant 0 : index
      %c0_24 = arith.constant 0 : index
      %28 = vector.load %arg6[%c0_22, %c0_23, %c0_24] : memref<2x128x32xf32, #tpu.memory_space<vmem>>, vector<2x128x32xf32>
      tpu.vector_store %arg6[%c0_22, %c0_23, %c0_24], %27 {strides = array<i32>} : memref<2x128x32xf32, #tpu.memory_space<vmem>>, vector<2x128x32xf32>,
    } else {
    }
    %c0 = arith.constant 0 : index
    %c0_1 = arith.constant 0 : index
    %c0_2 = arith.constant 0 : index
    %3 = vector.load %arg2[%c0, %c0_1, %c0_2] : memref<2x128x32xbf16, #tpu.memory_space<vmem>>, vector<2x128x32xbf16>
    %c0_3 = arith.constant 0 : index
    %c0_4 = arith.constant 0 : index
    %c0_5 = arith.constant 0 : index
    %4 = vector.load %arg3[%c0_3, %c0_4, %c0_5] : memref<2x128x32xbf16, #tpu.memory_space<vmem>>, vector<2x128x32xbf16>
    %c0_6 = arith.constant 0 : index
    %c0_7 = arith.constant 0 : index
    %c0_8 = arith.constant 0 : index
    %5 = vector.load %arg4[%c0_6, %c0_7, %c0_8] : memref<2x128x32xbf16, #tpu.memory_space<vmem>>, vector<2x128x32xbf16>
    "tpu.trace_start"() <{level = 10 : i32, message = "bqd,bkd->bqk"}> : () -> ()
    %cst = arith.constant dense<0.000000e+00> : vector<2x128x128xf32>
    %6 = tpu.matmul %3, %4, %cst {dimension_numbers = #tpu.dot_dimension_numbers<[2], [2], [1], [1], [0, 0, 0, 1, 1, 1], [0], [0]>} : vector<2x128x32xbf16>, vector<2x128x32xbf16>, vector<2x128x128xf32> -> vector<2x128x128xf32>
    "tpu.trace_stop"() : () -> ()
    %cst_9 = arith.constant 0.176776692 : f32
    %7 = vector.broadcast %cst_9 : f32 to vector<2x128x128xf32>
    %8 = arith.mulf %6, %7 : vector<2x128x128xf32>
    %cst_10 = arith.constant dense<0xFF800000> : vector<128x128xf32>
    %9 = vector.multi_reduction <maximumf>, %8, %cst_10 [0] : vector<2x128x128xf32> to vector<128x128xf32>
    %10 = vector.shape_cast %9 : vector<128x128xf32> to vector<1x128x128xf32>
    %11 = vector.broadcast %10 : vector<1x128x128xf32> to vector<2x128x128xf32>
    %12 = arith.subf %8, %11 : vector<2x128x128xf32>
    %13 = math.exp %12 : vector<2x128x128xf32>
    %cst_11 = arith.constant dense<0.000000e+00> : vector<128x128xf32>
    %14 = vector.multi_reduction <add>, %13, %cst_11 [0] : vector<2x128x128xf32> to vector<128x128xf32>
    %15 = vector.shape_cast %14 : vector<128x128xf32> to vector<1x128x128xf32>
    %16 = tpu.reciprocal %15 {approx = true} : vector<1x128x128xf32> -> vector<1x128x128xf32>
    %17 = vector.broadcast %16 : vector<1x128x128xf32> to vector<2x128x128xf32>
    %18 = arith.mulf %13, %17 : vector<2x128x128xf32>
    %c0_12 = arith.constant 0 : index
    %c0_13 = arith.constant 0 : index
    %c0_14 = arith.constant 0 : index
    %19 = vector.load %arg6[%c0_12, %c0_13, %c0_14] : memref<2x128x32xf32, #tpu.memory_space<vmem>>, vector<2x128x32xf32>
    %20 = arith.truncf %18 : vector<2x128x128xf32> to vector<2x128x128xbf16>
    "tpu.trace_start"() <{level = 10 : i32, message = "bqk,bkd->bqd"}> : () -> ()
    %cst_15 = arith.constant dense<0.000000e+00> : vector<2x128x32xf32>
    %21 = tpu.matmul %20, %5, %cst_15 {dimension_numbers = #tpu.dot_dimension_numbers<[2], [1], [1], [2], [0, 0, 0, 1, 1, 2], [0], [0]>} : vector<2x128x128xbf16>, vector<2x128x32xbf16>, vector<2x128x32xf32> -> vector<2x128x32xf32>
    "tpu.trace_stop"() : () -> ()
    %22 = arith.addf %19, %21 : vector<2x128x32xf32>
    %c0_16 = arith.constant 0 : index
    %c0_17 = arith.constant 0 : index
    %c0_18 = arith.constant 0 : index
    %23 = vector.load %arg6[%c0_16, %c0_17, %c0_18] : memref<2x128x32xf32, #tpu.memory_space<vmem>>, vector<2x128x32xf32>
    tpu.vector_store %arg6[%c0_16, %c0_17, %c0_18], %22 {strides = array<i32>} : memref<2x128x32xf32, #tpu.memory_space<vmem>>, vector<2x128x32xf32>,
    %c0_i32_19 = arith.constant 0 : i32
    %24 = arith.cmpi eq, %arg1, %c0_i32_19 : i32
    %25 = arith.extui %24 : i1 to i32
    %c0_i32_20 = arith.constant 0 : i32
    %26 = arith.cmpi ne, %25, %c0_i32_20 : i32
    scf.if %26 {
      %c0_21 = arith.constant 0 : index
      %c0_22 = arith.constant 0 : index
      %c0_23 = arith.constant 0 : index
      %27 = vector.load %arg6[%c0_21, %c0_22, %c0_23] : memref<2x128x32xf32, #tpu.memory_space<vmem>>, vector<2x128x32xf32>
      %c0_24 = arith.constant 0 : index
      %c0_25 = arith.constant 0 : index
      %c0_26 = arith.constant 0 : index
      %28 = vector.load %arg5[%c0_24, %c0_25, %c0_26] : memref<2x128x32xf32, #tpu.memory_space<vmem>>, vector<2x128x32xf32>
      tpu.vector_store %arg5[%c0_24, %c0_25, %c0_26], %27 {strides = array<i32>} : memref<2x128x32xf32, #tpu.memory_space<vmem>>, vector<2x128x32xf32>,
    } else {
    }
    return
  }
  func.func @transform_0(%arg0: i32, %arg1: i32) -> (i32, i32, i32) {
    %c0_i32 = arith.constant 0 : i32
    %c0_i32_0 = arith.constant 0 : i32
    %c0_i32_1 = arith.constant 0 : i32
    return %c0_i32, %arg0, %c0_i32_0 : i32, i32, i32
  }
  func.func @transform_1(%arg0: i32, %arg1: i32) -> (i32, i32, i32) {
    %c0_i32 = arith.constant 0 : i32
    %c0_i32_0 = arith.constant 0 : i32
    %c0_i32_1 = arith.constant 0 : i32
    return %c0_i32, %arg1, %c0_i32_0 : i32, i32, i32
  }
  func.func @transform_2(%arg0: i32, %arg1: i32) -> (i32, i32, i32) {
    %c0_i32 = arith.constant 0 : i32
    %c0_i32_0 = arith.constant 0 : i32
    %c0_i32_1 = arith.constant 0 : i32
    return %c0_i32, %arg1, %c0_i32_0 : i32, i32, i32
  }
  func.func @transform_3(%arg0: i32, %arg1: i32) -> (i32, i32, i32) {
    %c0_i32 = arith.constant 0 : i32
    %c0_i32_0 = arith.constant 0 : i32
    %c0_i32_1 = arith.constant 0 : i32
    return %c0_i32, %arg0, %c0_i32_0 : i32, i32, i32
  }
}

module attributes {stable_mosaic.version = 11 : i64} {
  func.func @_prior_rowsum_kernel(%arg0: i32, %arg1: i32, %arg2: memref<2x128x1xf32, #tpu.memory_space<vmem>>, %arg3: memref<2x128xf32, #tpu.memory_space<vmem>>) attributes {dimension_semantics = [#tpu.dimension_semantics<parallel>, #tpu.dimension_semantics<arbitrary>], iteration_bounds = array<i64: 1, 1>, scalar_prefetch = 0 : i64, scratch_operands = 0 : i64, tpu.core_type = #tpu.core_type<tc>, window_params = [{transform_indices = @transform_0, window_bounds = array<i64: 2, 128, 1>}, {transform_indices = @transform_1, window_bounds = array<i64: 2, 128>}]} {
    %c0_i32 = arith.constant 0 : i32
    %0 = arith.cmpi eq, %arg1, %c0_i32 : i32
    %1 = arith.extui %0 : i1 to i32
    %c0_i32_0 = arith.constant 0 : i32
    %2 = arith.cmpi ne, %1, %c0_i32_0 : i32
    scf.if %2 {
      %cst_11 = arith.constant 0.000000e+00 : f32
      %39 = vector.broadcast %cst_11 : f32 to vector<2x128xf32>
      %c0_12 = arith.constant 0 : index
      %c0_13 = arith.constant 0 : index
      %40 = vector.load %arg3[%c0_12, %c0_13] : memref<2x128xf32, #tpu.memory_space<vmem>>, vector<2x128xf32>
      tpu.vector_store %arg3[%c0_12, %c0_13], %39 {strides = array<i32>} : memref<2x128xf32, #tpu.memory_space<vmem>>, vector<2x128xf32>,
    } else {
    }
    %c0 = arith.constant 0 : index
    %c0_1 = arith.constant 0 : index
    %c0_2 = arith.constant 0 : index
    %3 = vector.load %arg2[%c0, %c0_1, %c0_2] : memref<2x128x1xf32, #tpu.memory_space<vmem>>, vector<2x128x1xf32>
    %4 = tpu.reciprocal %3 : vector<2x128x1xf32> -> vector<2x128x1xf32>
    %cst = arith.constant 0.398942292 : f32
    %5 = vector.broadcast %cst : f32 to vector<2x128x1xf32>
    %6 = arith.mulf %4, %5 : vector<2x128x1xf32>
    %cst_3 = arith.constant -5.000000e-01 : f32
    %7 = vector.broadcast %cst_3 : f32 to vector<2x128x1xf32>
    %8 = arith.mulf %7, %4 : vector<2x128x1xf32>
    %9 = arith.mulf %8, %4 : vector<2x128x1xf32>
    %c128_i32 = arith.constant 128 : i32
    %10 = arith.muli %arg0, %c128_i32 : i32
    %c128_i32_4 = arith.constant 128 : i32
    %11 = arith.muli %arg1, %c128_i32_4 : i32
    %12 = tpu.iota {dimensions = array<i32: 0>} : vector<128x128xi32>
    %13 = vector.broadcast %10 : i32 to vector<128x128xi32>
    %14 = arith.addi %12, %13 : vector<128x128xi32>
    %15 = tpu.iota {dimensions = array<i32: 1>} : vector<128x128xi32>
    %16 = vector.broadcast %11 : i32 to vector<128x128xi32>
    %17 = arith.addi %15, %16 : vector<128x128xi32>
    %18 = arith.subi %14, %17 : vector<128x128xi32>
    %19 = arith.sitofp %18 : vector<128x128xi32> to vector<128x128xf32>
    %20 = arith.mulf %19, %19 : vector<128x128xf32>
    %21 = vector.shape_cast %20 : vector<128x128xf32> to vector<1x128x128xf32>
    %22 = vector.broadcast %9 : vector<2x128x1xf32> to vector<2x128x128xf32>
    %23 = vector.broadcast %21 : vector<1x128x128xf32> to vector<2x128x128xf32>
    %24 = arith.mulf %22, %23 : vector<2x128x128xf32>
    %25 = math.exp %24 : vector<2x128x128xf32>
    %26 = vector.broadcast %6 : vector<2x128x1xf32> to vector<2x128x128xf32>
    %27 = arith.mulf %26, %25 : vector<2x128x128xf32>
    %c8_i32 = arith.constant 8 : i32
    %28 = vector.broadcast %c8_i32 : i32 to vector<128x128xi32>
    %29 = arith.cmpi slt, %17, %28 : vector<128x128xi32>
    %30 = vector.shape_cast %29 : vector<128x128xi1> to vector<1x128x128xi1>
    %cst_5 = arith.constant 0.000000e+00 : f32
    %31 = vector.shape_cast %30 : vector<1x128x128xi1> to vector<1x128x128xi1>
    %32 = vector.broadcast %31 : vector<1x128x128xi1> to vector<2x128x128xi1>
    %33 = vector.broadcast %cst_5 : f32 to vector<2x128x128xf32>
    %34 = arith.select %32, %27, %33 : vector<2x128x128xi1>, vector<2x128x128xf32>
    %c0_6 = arith.constant 0 : index
    %c0_7 = arith.constant 0 : index
    %35 = vector.load %arg3[%c0_6, %c0_7] : memref<2x128xf32, #tpu.memory_space<vmem>>, vector<2x128xf32>
    %cst_8 = arith.constant dense<0.000000e+00> : vector<2x128xf32>
    %36 = vector.multi_reduction <add>, %34, %cst_8 [2] : vector<2x128x128xf32> to vector<2x128xf32>
    %37 = arith.addf %35, %36 : vector<2x128xf32>
    %c0_9 = arith.constant 0 : index
    %c0_10 = arith.constant 0 : index
    %38 = vector.load %arg3[%c0_9, %c0_10] : memref<2x128xf32, #tpu.memory_space<vmem>>, vector<2x128xf32>
    tpu.vector_store %arg3[%c0_9, %c0_10], %37 {strides = array<i32>} : memref<2x128xf32, #tpu.memory_space<vmem>>, vector<2x128xf32>,
    return
  }
  func.func @transform_0(%arg0: i32, %arg1: i32) -> (i32, i32, i32) {
    %c0_i32 = arith.constant 0 : i32
    %c0_i32_0 = arith.constant 0 : i32
    %c0_i32_1 = arith.constant 0 : i32
    return %c0_i32, %arg0, %c0_i32_0 : i32, i32, i32
  }
  func.func @transform_1(%arg0: i32, %arg1: i32) -> (i32, i32) {
    %c0_i32 = arith.constant 0 : i32
    %c0_i32_0 = arith.constant 0 : i32
    return %c0_i32, %arg0 : i32, i32
  }
}

</mosaic_0001>

<llo_original>
// kernel: anomaly_attention.6
$region0: #{anomaly_attention.6}
  #allocation0 [shape = 'u32[]', space=smem, size = 0x4, offset = 0x4, fixed_abs, tag = 'smem constant byte address 0x4 - core index']
  #allocation1 [shape = 'u32[144,128]{1,0:T(1,128)}', space=vmem, size = 0x12000, scoped, tag = 'internal scratch']
  %s0 = inlined_call_operand.vmem [shape: f32[2,128,1], index: 0, kind: input, shape index: {}]
  %s1 = inlined_call_operand.vmem [shape: f32[2,128], index: 1, kind: output, shape index: {}]
  %s2 = sld [smem:[#allocation0]]
  $region18: #{anomaly_attention.6} parent=0
    _
  %s4 = ssub.s32 1, %s2
  %s5 = scalar_select 0, %s4, %s2
  // Predicated region
  $region2: #{anomaly_attention.6} parent=0 // pred_check
    _
  $region3: #{anomaly_attention.6} parent=0 // pred_check_branch
    %7 = sbr.rel (0) target = $region5
  $region4: #{anomaly_attention.6} parent=0 // pred_region
    _
  $region5: #{anomaly_attention.6} parent=0 // pred_fallthru
    _
  %p8 = scmp.eq.s32.totalorder 0, 0
  // Predicated region
  $region6: #{anomaly_attention.6} parent=0 // pred_check
    %p9 = pneg %p8
  $region7: #{anomaly_attention.6} parent=0 // pred_check_branch
    %11 = sbr.rel (%p9) target = $region9
  $region8: #{anomaly_attention.6} parent=0 // pred_region
    %12 = vst [vmem:[%s1] sm:$0x3] 0.0
  $region9: #{anomaly_attention.6} parent=0 // pred_fallthru
    _
  %v13 = vld [vmem:[%s0] sm:$0xff]
  %v14 = vld [vmem:[%s0 + $0x8] sm:$0xff]
  %v15 = vld [vmem:[%s0 + $0x10] sm:$0xff]
  %v16 = vld [vmem:[%s0 + $0x18] sm:$0xff]
  %v17 = vld [vmem:[%s0 + $0x20] sm:$0xff]
  %v18 = vld [vmem:[%s0 + $0x28] sm:$0xff]
  %v19 = vld [vmem:[%s0 + $0x30] sm:$0xff]
  %v20 = vld [vmem:[%s0 + $0x38] sm:$0xff]
  %v21 = vld [vmem:[%s0 + $0x40] sm:$0xff]
  %v22 = vld [vmem:[%s0 + $0x48] sm:$0xff]
  %v23 = vld [vmem:[%s0 + $0x50] sm:$0xff]
  %v24 = vld [vmem:[%s0 + $0x58] sm:$0xff]
  %v25 = vld [vmem:[%s0 + $0x60] sm:$0xff]
  %v26 = vld [vmem:[%s0 + $0x68] sm:$0xff]
  %v27 = vld [vmem:[%s0 + $0x70] sm:$0xff]
  %v28 = vld [vmem:[%s0 + $0x78] sm:$0xff]
  %v29 = vld [vmem:[%s0 + $0x80] sm:$0xff]
  %v30 = vld [vmem:[%s0 + $0x88] sm:$0xff]
  %v31 = vld [vmem:[%s0 + $0x90] sm:$0xff]
  %v32 = vld [vmem:[%s0 + $0x98] sm:$0xff]
  %v33 = vld [vmem:[%s0 + $0xa0] sm:$0xff]
  %v34 = vld [vmem:[%s0 + $0xa8] sm:$0xff]
  %v35 = vld [vmem:[%s0 + $0xb0] sm:$0xff]
  %v36 = vld [vmem:[%s0 + $0xb8] sm:$0xff]
  %v37 = vld [vmem:[%s0 + $0xc0] sm:$0xff]
  %v38 = vld [vmem:[%s0 + $0xc8] sm:$0xff]
  %v39 = vld [vmem:[%s0 + $0xd0] sm:$0xff]
  %v40 = vld [vmem:[%s0 + $0xd8] sm:$0xff]
  %v41 = vld [vmem:[%s0 + $0xe0] sm:$0xff]
  %v42 = vld [vmem:[%s0 + $0xe8] sm:$0xff]
  %v43 = vld [vmem:[%s0 + $0xf0] sm:$0xff]
  %v44 = vld [vmem:[%s0 + $0xf8] sm:$0xff]
  %v45 = vrcp.pop %v13
  %v46 = vrcp.pop %v14
  %v47 = vrcp.pop %v15
  %v48 = vrcp.pop %v16
  %v49 = vrcp.pop %v17
  %v50 = vrcp.pop %v18
  %v51 = vrcp.pop %v19
  %v52 = vrcp.pop %v20
  %v53 = vrcp.pop %v21
  %v54 = vrcp.pop %v22
  %v55 = vrcp.pop %v23
  %v56 = vrcp.pop %v24
  %v57 = vrcp.pop %v25
  %v58 = vrcp.pop %v26
  %v59 = vrcp.pop %v27
  %v60 = vrcp.pop %v28
  %v61 = vrcp.pop %v29
  %v62 = vrcp.pop %v30
  %v63 = vrcp.pop %v31
  %v64 = vrcp.pop %v32
  %v65 = vrcp.pop %v33
  %v66 = vrcp.pop %v34
  %v67 = vrcp.pop %v35
  %v68 = vrcp.pop %v36
  %v69 = vrcp.pop %v37
  %v70 = vrcp.pop %v38
  %v71 = vrcp.pop %v39
  %v72 = vrcp.pop %v40
  %v73 = vrcp.pop %v41
  %v74 = vrcp.pop %v42
  %v75 = vrcp.pop %v43
  %v76 = vrcp.pop %v44
  %v77 = vmul.f32 %v45, 0.3989423
  %v78 = vmul.f32 %v46, 0.3989423
  %v79 = vmul.f32 %v47, 0.3989423
  %v80 = vmul.f32 %v48, 0.3989423
  %v81 = vmul.f32 %v49, 0.3989423
  %v82 = vmul.f32 %v50, 0.3989423
  %v83 = vmul.f32 %v51, 0.3989423
  %v84 = vmul.f32 %v52, 0.3989423
  %v85 = vmul.f32 %v53, 0.3989423
  %v86 = vmul.f32 %v54, 0.3989423
  %v87 = vmul.f32 %v55, 0.3989423
  %v88 = vmul.f32 %v56, 0.3989423
  %v89 = vmul.f32 %v57, 0.3989423
  %v90 = vmul.f32 %v58, 0.3989423
  %v91 = vmul.f32 %v59, 0.3989423
  %v92 = vmul.f32 %v60, 0.3989423
  %v93 = vmul.f32 %v61, 0.3989423
  %v94 = vmul.f32 %v62, 0.3989423
  %v95 = vmul.f32 %v63, 0.3989423
  %v96 = vmul.f32 %v64, 0.3989423
  %v97 = vmul.f32 %v65, 0.3989423
  %v98 = vmul.f32 %v66, 0.3989423
  %v99 = vmul.f32 %v67, 0.3989423
  %v100 = vmul.f32 %v68, 0.3989423
  %v101 = vmul.f32 %v69, 0.3989423
  %v102 = vmul.f32 %v70, 0.3989423
  %v103 = vmul.f32 %v71, 0.3989423
  %v104 = vmul.f32 %v72, 0.3989423
  %v105 = vmul.f32 %v73, 0.3989423
  %v106 = vmul.f32 %v74, 0.3989423
  %v107 = vmul.f32 %v75, 0.3989423
  %v108 = vmul.f32 %v76, 0.3989423
  %v109 = vmul.f32 %v45, -0.5
  %v110 = vmul.f32 %v46, -0.5
  %v111 = vmul.f32 %v47, -0.5
  %v112 = vmul.f32 %v48, -0.5
  %v113 = vmul.f32 %v49, -0.5
  %v114 = vmul.f32 %v50, -0.5
  %v115 = vmul.f32 %v51, -0.5
  %v116 = vmul.f32 %v52, -0.5
  %v117 = vmul.f32 %v53, -0.5
  %v118 = vmul.f32 %v54, -0.5
  %v119 = vmul.f32 %v55, -0.5
  %v120 = vmul.f32 %v56, -0.5
  %v121 = vmul.f32 %v57, -0.5
  %v122 = vmul.f32 %v58, -0.5
  %v123 = vmul.f32 %v59, -0.5
  %v124 = vmul.f32 %v60, -0.5
  %v125 = vmul.f32 %v61, -0.5
  %v126 = vmul.f32 %v62, -0.5
  %v127 = vmul.f32 %v63, -0.5
  %v128 = vmul.f32 %v64, -0.5
  %v129 = vmul.f32 %v65, -0.5
  %v130 = vmul.f32 %v66, -0.5
  %v131 = vmul.f32 %v67, -0.5
  %v132 = vmul.f32 %v68, -0.5
  %v133 = vmul.f32 %v69, -0.5
  %v134 = vmul.f32 %v70, -0.5
  %v135 = vmul.f32 %v71, -0.5
  %v136 = vmul.f32 %v72, -0.5
  %v137 = vmul.f32 %v73, -0.5
  %v138 = vmul.f32 %v74, -0.5
  %v139 = vmul.f32 %v75, -0.5
  %v140 = vmul.f32 %v76, -0.5
  %v141 = vmul.f32 %v109, %v45
  %v142 = vmul.f32 %v110, %v46
  %v143 = vmul.f32 %v111, %v47
  %v144 = vmul.f32 %v112, %v48
  %v145 = vmul.f32 %v113, %v49
  %v146 = vmul.f32 %v114, %v50
  %v147 = vmul.f32 %v115, %v51
  %v148 = vmul.f32 %v116, %v52
  %v149 = vmul.f32 %v117, %v53
  %v150 = vmul.f32 %v118, %v54
  %v151 = vmul.f32 %v119, %v55
  %v152 = vmul.f32 %v120, %v56
  %v153 = vmul.f32 %v121, %v57
  %v154 = vmul.f32 %v122, %v58
  %v155 = vmul.f32 %v123, %v59
  %v156 = vmul.f32 %v124, %v60
  %v157 = vmul.f32 %v125, %v61
  %v158 = vmul.f32 %v126, %v62
  %v159 = vmul.f32 %v127, %v63
  %v160 = vmul.f32 %v128, %v64
  %v161 = vmul.f32 %v129, %v65
  %v162 = vmul.f32 %v130, %v66
  %v163 = vmul.f32 %v131, %v67
  %v164 = vmul.f32 %v132, %v68
  %v165 = vmul.f32 %v133, %v69
  %v166 = vmul.f32 %v134, %v70
  %v167 = vmul.f32 %v135, %v71
  %v168 = vmul.f32 %v136, %v72
  %v169 = vmul.f32 %v137, %v73
  %v170 = vmul.f32 %v138, %v74
  %v171 = vmul.f32 %v139, %v75
  %v172 = vmul.f32 %v140, %v76
  %s173 = smul.u32 0, 128
  %s174 = smul.u32 0, 128
  %v175 = vlaneseq
  %v176 = vshrl.u32 %v175, 7
  %v177 = vadd.s32 %v176, 8
  %v178 = vadd.s32 %v176, 16
  %v179 = vadd.s32 %v176, 24
  %v180 = vadd.s32 %v176, 32
  %v181 = vadd.s32 %v176, 40
  %v182 = vadd.s32 %v176, 48
  %v183 = vadd.s32 %v176, 56
  %v184 = vadd.s32 %v176, 64
  %v185 = vadd.s32 %v176, 72
  %v186 = vadd.s32 %v176, 80
  %v187 = vadd.s32 %v176, 88
  %v188 = vadd.s32 %v176, 96
  %v189 = vadd.s32 %v176, 104
  %v190 = vadd.s32 %v176, 112
  %v191 = vadd.s32 %v176, 120
  %v192 = vstv %s173
  %v193 = vadd.s32 %v176, %v192
  %v194 = vadd.s32 %v177, %v192
  %v195 = vadd.s32 %v178, %v192
  %v196 = vadd.s32 %v179, %v192
  %v197 = vadd.s32 %v180, %v192
  %v198 = vadd.s32 %v181, %v192
  %v199 = vadd.s32 %v182, %v192
  %v200 = vadd.s32 %v183, %v192
  %v201 = vadd.s32 %v184, %v192
  %v202 = vadd.s32 %v185, %v192
  %v203 = vadd.s32 %v186, %v192
  %v204 = vadd.s32 %v187, %v192
  %v205 = vadd.s32 %v188, %v192
  %v206 = vadd.s32 %v189, %v192
  %v207 = vadd.s32 %v190, %v192
  %v208 = vadd.s32 %v191, %v192
  %v209 = vlaneseq
  %v210 = vand.u32 %v209, 127
  %v211 = vstv %s174
  %v212 = vadd.s32 %v210, %v211
  %v213 = vsub.s32 %v193, %v212
  %v214 = vsub.s32 %v194, %v212
  %v215 = vsub.s32 %v195, %v212
  %v216 = vsub.s32 %v196, %v212
  %v217 = vsub.s32 %v197, %v212
  %v218 = vsub.s32 %v198, %v212
  %v219 = vsub.s32 %v199, %v212
  %v220 = vsub.s32 %v200, %v212
  %v221 = vsub.s32 %v201, %v212
  %v222 = vsub.s32 %v202, %v212
  %v223 = vsub.s32 %v203, %v212
  %v224 = vsub.s32 %v204, %v212
  %v225 = vsub.s32 %v205, %v212
  %v226 = vsub.s32 %v206, %v212
  %v227 = vsub.s32 %v207, %v212
  %v228 = vsub.s32 %v208, %v212
  %v229 = vcvt.s32.f32 %v213
  %v230 = vcvt.s32.f32 %v214
  %v231 = vcvt.s32.f32 %v215
  %v232 = vcvt.s32.f32 %v216
  %v233 = vcvt.s32.f32 %v217
  %v234 = vcvt.s32.f32 %v218
  %v235 = vcvt.s32.f32 %v219
  %v236 = vcvt.s32.f32 %v220
  %v237 = vcvt.s32.f32 %v221
  %v238 = vcvt.s32.f32 %v222
  %v239 = vcvt.s32.f32 %v223
  %v240 = vcvt.s32.f32 %v224
  %v241 = vcvt.s32.f32 %v225
  %v242 = vcvt.s32.f32 %v226
  %v243 = vcvt.s32.f32 %v227
  %v244 = vcvt.s32.f32 %v228
  %v245 = vmul.f32 %v229, %v229
  %v246 = vmul.f32 %v230, %v230
  %v247 = vmul.f32 %v231, %v231
  %v248 = vmul.f32 %v232, %v232
  %v249 = vmul.f32 %v233, %v233
  %v250 = vmul.f32 %v234, %v234
  %v251 = vmul.f32 %v235, %v235
  %v252 = vmul.f32 %v236, %v236
  %v253 = vmul.f32 %v237, %v237
  %v254 = vmul.f32 %v238, %v238
  %v255 = vmul.f32 %v239, %v239
  %v256 = vmul.f32 %v240, %v240
  %v257 = vmul.f32 %v241, %v241
  %v258 = vmul.f32 %v242, %v242
  %v259 = vmul.f32 %v243, %v243
  %v260 = vmul.f32 %v244, %v244
  %262 = vset.pattern.permute.xlu0 0
  %263 = vperm.xlu0 %262, %v141
  %v264 = vpop.permute.xlu0 %263
  %267 = vset.pattern.permute.xlu0 0
  %268 = vperm.xlu0 %267, %v142
  %v269 = vpop.permute.xlu0 %268
  %272 = vset.pattern.permute.xlu0 0
  %273 = vperm.xlu0 %272, %v143
  %v274 = vpop.permute.xlu0 %273
  %277 = vset.pattern.permute.xlu0 0
  %278 = vperm.xlu0 %277, %v144
  %v279 = vpop.permute.xlu0 %278
  %282 = vset.pattern.permute.xlu0 0
  %283 = vperm.xlu0 %282, %v145
  %v284 = vpop.permute.xlu0 %283
  %287 = vset.pattern.permute.xlu0 0
  %288 = vperm.xlu0 %287, %v146
  %v289 = vpop.permute.xlu0 %288
  %292 = vset.pattern.permute.xlu0 0
  %293 = vperm.xlu0 %292, %v147
  %v294 = vpop.permute.xlu0 %293
  %297 = vset.pattern.permute.xlu0 0
  %298 = vperm.xlu0 %297, %v148
  %v299 = vpop.permute.xlu0 %298
  %302 = vset.pattern.permute.xlu0 0
  %303 = vperm.xlu0 %302, %v149
  %v304 = vpop.permute.xlu0 %303
  %307 = vset.pattern.permute.xlu0 0
  %308 = vperm.xlu0 %307, %v150
  %v309 = vpop.permute.xlu0 %308
  %312 = vset.pattern.permute.xlu0 0
  %313 = vperm.xlu0 %312, %v151
  %v314 = vpop.permute.xlu0 %313
  %317 = vset.pattern.permute.xlu0 0
  %318 = vperm.xlu0 %317, %v152
  %v319 = vpop.permute.xlu0 %318
  %322 = vset.pattern.permute.xlu0 0
  %323 = vperm.xlu0 %322, %v153
  %v324 = vpop.permute.xlu0 %323
  %327 = vset.pattern.permute.xlu0 0
  %328 = vperm.xlu0 %327, %v154
  %v329 = vpop.permute.xlu0 %328
  %332 = vset.pattern.permute.xlu0 0
  %333 = vperm.xlu0 %332, %v155
  %v334 = vpop.permute.xlu0 %333
  %337 = vset.pattern.permute.xlu0 0
  %338 = vperm.xlu0 %337, %v156
  %v339 = vpop.permute.xlu0 %338
  %342 = vset.pattern.permute.xlu0 0
  %343 = vperm.xlu0 %342, %v157
  %v344 = vpop.permute.xlu0 %343
  %347 = vset.pattern.permute.xlu0 0
  %348 = vperm.xlu0 %347, %v158
  %v349 = vpop.permute.xlu0 %348
  %352 = vset.pattern.permute.xlu0 0
  %353 = vperm.xlu0 %352, %v159
  %v354 = vpop.permute.xlu0 %353
  %357 = vset.pattern.permute.xlu0 0
  %358 = vperm.xlu0 %357, %v160
  %v359 = vpop.permute.xlu0 %358
  %362 = vset.pattern.permute.xlu0 0
  %363 = vperm.xlu0 %362, %v161
  %v364 = vpop.permute.xlu0 %363
  %367 = vset.pattern.permute.xlu0 0
  %368 = vperm.xlu0 %367, %v162
  %v369 = vpop.permute.xlu0 %368
  %372 = vset.pattern.permute.xlu0 0
  %373 = vperm.xlu0 %372, %v163
  %v374 = vpop.permute.xlu0 %373
  %377 = vset.pattern.permute.xlu0 0
  %378 = vperm.xlu0 %377, %v164
  %v379 = vpop.permute.xlu0 %378
  %382 = vset.pattern.permute.xlu0 0
  %383 = vperm.xlu0 %382, %v165
  %v384 = vpop.permute.xlu0 %383
  %387 = vset.pattern.permute.xlu0 0
  %388 = vperm.xlu0 %387, %v166
  %v389 = vpop.permute.xlu0 %388
  %392 = vset.pattern.permute.xlu0 0
  %393 = vperm.xlu0 %392, %v167
  %v394 = vpop.permute.xlu0 %393
  %397 = vset.pattern.permute.xlu0 0
  %398 = vperm.xlu0 %397, %v168
  %v399 = vpop.permute.xlu0 %398
  %402 = vset.pattern.permute.xlu0 0
  %403 = vperm.xlu0 %402, %v169
  %v404 = vpop.permute.xlu0 %403
  %407 = vset.pattern.permute.xlu0 0
  %408 = vperm.xlu0 %407, %v170
  %v409 = vpop.permute.xlu0 %408
  %412 = vset.pattern.permute.xlu0 0
  %413 = vperm.xlu0 %412, %v171
  %v414 = vpop.permute.xlu0 %413
  %417 = vset.pattern.permute.xlu0 0
  %418 = vperm.xlu0 %417, %v172
  %v419 = vpop.permute.xlu0 %418
  %v421 = vmul.f32 %v264, %v245
  %v422 = vmul.f32 %v269, %v246
  %v423 = vmul.f32 %v274, %v247
  %v424 = vmul.f32 %v279, %v248
  %v425 = vmul.f32 %v284, %v249
  %v426 = vmul.f32 %v289, %v250
  %v427 = vmul.f32 %v294, %v251
  %v428 = vmul.f32 %v299, %v252
  %v429 = vmul.f32 %v304, %v253
  %v430 = vmul.f32 %v309, %v254
  %v431 = vmul.f32 %v314, %v255
  %v432 = vmul.f32 %v319, %v256
  %v433 = vmul.f32 %v324, %v257
  %v434 = vmul.f32 %v329, %v258
  %v435 = vmul.f32 %v334, %v259
  %v436 = vmul.f32 %v339, %v260
  %v437 = vmul.f32 %v344, %v245
  %v438 = vmul.f32 %v349, %v246
  %v439 = vmul.f32 %v354, %v247
  %v440 = vmul.f32 %v359, %v248
  %v441 = vmul.f32 %v364, %v249
  %v442 = vmul.f32 %v369, %v250
  %v443 = vmul.f32 %v374, %v251
  %v444 = vmul.f32 %v379, %v252
  %v445 = vmul.f32 %v384, %v253
  %v446 = vmul.f32 %v389, %v254
  %v447 = vmul.f32 %v394, %v255
  %v448 = vmul.f32 %v399, %v256
  %v449 = vmul.f32 %v404, %v257
  %v450 = vmul.f32 %v409, %v258
  %v451 = vmul.f32 %v414, %v259
  %v452 = vmul.f32 %v419, %v260
  %v453 = vmul.f32 %v421, 1.442695
  %v454 = vpow.pop %v453
  %v455 = vmul.f32 %v422, 1.442695
  %v456 = vpow.pop %v455
  %v457 = vmul.f32 %v423, 1.442695
  %v458 = vpow.pop %v457
  %v459 = vmul.f32 %v424, 1.442695
  %v460 = vpow.pop %v459
  %v461 = vmul.f32 %v425, 1.442695
  %v462 = vpow.pop %v461
  %v463 = vmul.f32 %v426, 1.442695
  %v464 = vpow.pop %v463
  %v465 = vmul.f32 %v427, 1.442695
  %v466 = vpow.pop %v465
  %v467 = vmul.f32 %v428, 1.442695
  %v468 = vpow.pop %v467
  %v469 = vmul.f32 %v429, 1.442695
  %v470 = vpow.pop %v469
  %v471 = vmul.f32 %v430, 1.442695
  %v472 = vpow.pop %v471
  %v473 = vmul.f32 %v431, 1.442695
  %v474 = vpow.pop %v473
  %v475 = vmul.f32 %v432, 1.442695
  %v476 = vpow.pop %v475
  %v477 = vmul.f32 %v433, 1.442695
  %v478 = vpow.pop %v477
  %v479 = vmul.f32 %v434, 1.442695
  %v480 = vpow.pop %v479
  %v481 = vmul.f32 %v435, 1.442695
  %v482 = vpow.pop %v481
  %v483 = vmul.f32 %v436, 1.442695
  %v484 = vpow.pop %v483
  %v485 = vmul.f32 %v437, 1.442695
  %v486 = vpow.pop %v485
  %v487 = vmul.f32 %v438, 1.442695
  %v488 = vpow.pop %v487
  %v489 = vmul.f32 %v439, 1.442695
  %v490 = vpow.pop %v489
  %v491 = vmul.f32 %v440, 1.442695
  %v492 = vpow.pop %v491
  %v493 = vmul.f32 %v441, 1.442695
  %v494 = vpow.pop %v493
  %v495 = vmul.f32 %v442, 1.442695
  %v496 = vpow.pop %v495
  %v497 = vmul.f32 %v443, 1.442695
  %v498 = vpow.pop %v497
  %v499 = vmul.f32 %v444, 1.442695
  %v500 = vpow.pop %v499
  %v501 = vmul.f32 %v445, 1.442695
  %v502 = vpow.pop %v501
  %v503 = vmul.f32 %v446, 1.442695
  %v504 = vpow.pop %v503
  %v505 = vmul.f32 %v447, 1.442695
  %v506 = vpow.pop %v505
  %v507 = vmul.f32 %v448, 1.442695
  %v508 = vpow.pop %v507
  %v509 = vmul.f32 %v449, 1.442695
  %v510 = vpow.pop %v509
  %v511 = vmul.f32 %v450, 1.442695
  %v512 = vpow.pop %v511
  %v513 = vmul.f32 %v451, 1.442695
  %v514 = vpow.pop %v513
  %v515 = vmul.f32 %v452, 1.442695
  %v516 = vpow.pop %v515
  %518 = vset.pattern.permute.xlu0 0
  %519 = vperm.xlu0 %518, %v77
  %v520 = vpop.permute.xlu0 %519
  %523 = vset.pattern.permute.xlu0 0
  %524 = vperm.xlu0 %523, %v78
  %v525 = vpop.permute.xlu0 %524
  %528 = vset.pattern.permute.xlu0 0
  %529 = vperm.xlu0 %528, %v79
  %v530 = vpop.permute.xlu0 %529
  %533 = vset.pattern.permute.xlu0 0
  %534 = vperm.xlu0 %533, %v80
  %v535 = vpop.permute.xlu0 %534
  %538 = vset.pattern.permute.xlu0 0
  %539 = vperm.xlu0 %538, %v81
  %v540 = vpop.permute.xlu0 %539
  %543 = vset.pattern.permute.xlu0 0
  %544 = vperm.xlu0 %543, %v82
  %v545 = vpop.permute.xlu0 %544
  %548 = vset.pattern.permute.xlu0 0
  %549 = vperm.xlu0 %548, %v83
  %v550 = vpop.permute.xlu0 %549
  %553 = vset.pattern.permute.xlu0 0
  %554 = vperm.xlu0 %553, %v84
  %v555 = vpop.permute.xlu0 %554
  %558 = vset.pattern.permute.xlu0 0
  %559 = vperm.xlu0 %558, %v85
  %v560 = vpop.permute.xlu0 %559
  %563 = vset.pattern.permute.xlu0 0
  %564 = vperm.xlu0 %563, %v86
  %v565 = vpop.permute.xlu0 %564
  %568 = vset.pattern.permute.xlu0 0
  %569 = vperm.xlu0 %568, %v87
  %v570 = vpop.permute.xlu0 %569
  %573 = vset.pattern.permute.xlu0 0
  %574 = vperm.xlu0 %573, %v88
  %v575 = vpop.permute.xlu0 %574
  %578 = vset.pattern.permute.xlu0 0
  %579 = vperm.xlu0 %578, %v89
  %v580 = vpop.permute.xlu0 %579
  %583 = vset.pattern.permute.xlu0 0
  %584 = vperm.xlu0 %583, %v90
  %v585 = vpop.permute.xlu0 %584
  %588 = vset.pattern.permute.xlu0 0
  %589 = vperm.xlu0 %588, %v91
  %v590 = vpop.permute.xlu0 %589
  %593 = vset.pattern.permute.xlu0 0
  %594 = vperm.xlu0 %593, %v92
  %v595 = vpop.permute.xlu0 %594
  %598 = vset.pattern.permute.xlu0 0
  %599 = vperm.xlu0 %598, %v93
  %v600 = vpop.permute.xlu0 %599
  %603 = vset.pattern.permute.xlu0 0
  %604 = vperm.xlu0 %603, %v94
  %v605 = vpop.permute.xlu0 %604
  %608 = vset.pattern.permute.xlu0 0
  %609 = vperm.xlu0 %608, %v95
  %v610 = vpop.permute.xlu0 %609
  %613 = vset.pattern.permute.xlu0 0
  %614 = vperm.xlu0 %613, %v96
  %v615 = vpop.permute.xlu0 %614
  %618 = vset.pattern.permute.xlu0 0
  %619 = vperm.xlu0 %618, %v97
  %v620 = vpop.permute.xlu0 %619
  %623 = vset.pattern.permute.xlu0 0
  %624 = vperm.xlu0 %623, %v98
  %v625 = vpop.permute.xlu0 %624
  %628 = vset.pattern.permute.xlu0 0
  %629 = vperm.xlu0 %628, %v99
  %v630 = vpop.permute.xlu0 %629
  %633 = vset.pattern.permute.xlu0 0
  %634 = vperm.xlu0 %633, %v100
  %v635 = vpop.permute.xlu0 %634
  %638 = vset.pattern.permute.xlu0 0
  %639 = vperm.xlu0 %638, %v101
  %v640 = vpop.permute.xlu0 %639
  %643 = vset.pattern.permute.xlu0 0
  %644 = vperm.xlu0 %643, %v102
  %v645 = vpop.permute.xlu0 %644
  %648 = vset.pattern.permute.xlu0 0
  %649 = vperm.xlu0 %648, %v103
  %v650 = vpop.permute.xlu0 %649
  %653 = vset.pattern.permute.xlu0 0
  %654 = vperm.xlu0 %653, %v104
  %v655 = vpop.permute.xlu0 %654
  %658 = vset.pattern.permute.xlu0 0
  %659 = vperm.xlu0 %658, %v105
  %v660 = vpop.permute.xlu0 %659
  %663 = vset.pattern.permute.xlu0 0
  %664 = vperm.xlu0 %663, %v106
  %v665 = vpop.permute.xlu0 %664
  %668 = vset.pattern.permute.xlu0 0
  %669 = vperm.xlu0 %668, %v107
  %v670 = vpop.permute.xlu0 %669
  %673 = vset.pattern.permute.xlu0 0
  %674 = vperm.xlu0 %673, %v108
  %v675 = vpop.permute.xlu0 %674
  %v677 = vmul.f32 %v520, %v454
  %v678 = vmul.f32 %v525, %v456
  %v679 = vmul.f32 %v530, %v458
  %v680 = vmul.f32 %v535, %v460
  %v681 = vmul.f32 %v540, %v462
  %v682 = vmul.f32 %v545, %v464
  %v683 = vmul.f32 %v550, %v466
  %v684 = vmul.f32 %v555, %v468
  %v685 = vmul.f32 %v560, %v470
  %v686 = vmul.f32 %v565, %v472
  %v687 = vmul.f32 %v570, %v474
  %v688 = vmul.f32 %v575, %v476
  %v689 = vmul.f32 %v580, %v478
  %v690 = vmul.f32 %v585, %v480
  %v691 = vmul.f32 %v590, %v482
  %v692 = vmul.f32 %v595, %v484
  %v693 = vmul.f32 %v600, %v486
  %v694 = vmul.f32 %v605, %v488
  %v695 = vmul.f32 %v610, %v490
  %v696 = vmul.f32 %v615, %v492
  %v697 = vmul.f32 %v620, %v494
  %v698 = vmul.f32 %v625, %v496
  %v699 = vmul.f32 %v630, %v498
  %v700 = vmul.f32 %v635, %v500
  %v701 = vmul.f32 %v640, %v502
  %v702 = vmul.f32 %v645, %v504
  %v703 = vmul.f32 %v650, %v506
  %v704 = vmul.f32 %v655, %v508
  %v705 = vmul.f32 %v660, %v510
  %v706 = vmul.f32 %v665, %v512
  %v707 = vmul.f32 %v670, %v514
  %v708 = vmul.f32 %v675, %v516
  %vm709 = vcmp.lt.s32.totalorder %v212, 8
  %v710 = vsel %vm709, 1, 0
  %vm711 = vcmp.eq.s32.totalorder %v710, 1
  %v712 = vsel %vm711, %v677, 0.0
  %v713 = vsel %vm711, %v678, 0.0
  %v714 = vsel %vm711, %v679, 0.0
  %v715 = vsel %vm711, %v680, 0.0
  %v716 = vsel %vm711, %v681, 0.0
  %v717 = vsel %vm711, %v682, 0.0
  %v718 = vsel %vm711, %v683, 0.0
  %v719 = vsel %vm711, %v684, 0.0
  %v720 = vsel %vm711, %v685, 0.0
  %v721 = vsel %vm711, %v686, 0.0
  %v722 = vsel %vm711, %v687, 0.0
  %v723 = vsel %vm711, %v688, 0.0
  %v724 = vsel %vm711, %v689, 0.0
  %v725 = vsel %vm711, %v690, 0.0
  %v726 = vsel %vm711, %v691, 0.0
  %v727 = vsel %vm711, %v692, 0.0
  %v728 = vsel %vm711, %v693, 0.0
  %v729 = vsel %vm711, %v694, 0.0
  %v730 = vsel %vm711, %v695, 0.0
  %v731 = vsel %vm711, %v696, 0.0
  %v732 = vsel %vm711, %v697, 0.0
  %v733 = vsel %vm711, %v698, 0.0
  %v734 = vsel %vm711, %v699, 0.0
  %v735 = vsel %vm711, %v700, 0.0
  %v736 = vsel %vm711, %v701, 0.0
  %v737 = vsel %vm711, %v702, 0.0
  %v738 = vsel %vm711, %v703, 0.0
  %v739 = vsel %vm711, %v704, 0.0
  %v740 = vsel %vm711, %v705, 0.0
  %v741 = vsel %vm711, %v706, 0.0
  %v742 = vsel %vm711, %v707, 0.0
  %v743 = vsel %vm711, %v708, 0.0
  %v744 = vld [vmem:[%s1] sm:$0x3]
  %745 = vadd.xlane.f32.xlu0 %v712
  %v746 = vpop.xlane.xlu0 %745
  %747 = vadd.xlane.f32.xlu0 %v713
  %v748 = vpop.xlane.xlu0 %747
  %749 = vadd.xlane.f32.xlu0 %v714
  %v750 = vpop.xlane.xlu0 %749
  %751 = vadd.xlane.f32.xlu0 %v715
  %v752 = vpop.xlane.xlu0 %751
  %753 = vadd.xlane.f32.xlu0 %v716
  %v754 = vpop.xlane.xlu0 %753
  %755 = vadd.xlane.f32.xlu0 %v717
  %v756 = vpop.xlane.xlu0 %755
  %757 = vadd.xlane.f32.xlu0 %v718
  %v758 = vpop.xlane.xlu0 %757
  %759 = vadd.xlane.f32.xlu0 %v719
  %v760 = vpop.xlane.xlu0 %759
  %761 = vadd.xlane.f32.xlu0 %v720
  %v762 = vpop.xlane.xlu0 %761
  %763 = vadd.xlane.f32.xlu0 %v721
  %v764 = vpop.xlane.xlu0 %763
  %765 = vadd.xlane.f32.xlu0 %v722
  %v766 = vpop.xlane.xlu0 %765
  %767 = vadd.xlane.f32.xlu0 %v723
  %v768 = vpop.xlane.xlu0 %767
  %769 = vadd.xlane.f32.xlu0 %v724
  %v770 = vpop.xlane.xlu0 %769
  %771 = vadd.xlane.f32.xlu0 %v725
  %v772 = vpop.xlane.xlu0 %771
  %773 = vadd.xlane.f32.xlu0 %v726
  %v774 = vpop.xlane.xlu0 %773
  %775 = vadd.xlane.f32.xlu0 %v727
  %v776 = vpop.xlane.xlu0 %775
  %777 = vadd.xlane.f32.xlu0 %v728
  %v778 = vpop.xlane.xlu0 %777
  %779 = vadd.xlane.f32.xlu0 %v729
  %v780 = vpop.xlane.xlu0 %779
  %781 = vadd.xlane.f32.xlu0 %v730
  %v782 = vpop.xlane.xlu0 %781
  %783 = vadd.xlane.f32.xlu0 %v731
  %v784 = vpop.xlane.xlu0 %783
  %785 = vadd.xlane.f32.xlu0 %v732
  %v786 = vpop.xlane.xlu0 %785
  %787 = vadd.xlane.f32.xlu0 %v733
  %v788 = vpop.xlane.xlu0 %787
  %789 = vadd.xlane.f32.xlu0 %v734
  %v790 = vpop.xlane.xlu0 %789
  %791 = vadd.xlane.f32.xlu0 %v735
  %v792 = vpop.xlane.xlu0 %791
  %793 = vadd.xlane.f32.xlu0 %v736
  %v794 = vpop.xlane.xlu0 %793
  %795 = vadd.xlane.f32.xlu0 %v737
  %v796 = vpop.xlane.xlu0 %795
  %797 = vadd.xlane.f32.xlu0 %v738
  %v798 = vpop.xlane.xlu0 %797
  %799 = vadd.xlane.f32.xlu0 %v739
  %v800 = vpop.xlane.xlu0 %799
  %801 = vadd.xlane.f32.xlu0 %v740
  %v802 = vpop.xlane.xlu0 %801
  %803 = vadd.xlane.f32.xlu0 %v741
  %v804 = vpop.xlane.xlu0 %803
  %805 = vadd.xlane.f32.xlu0 %v742
  %v806 = vpop.xlane.xlu0 %805
  %807 = vadd.xlane.f32.xlu0 %v743
  %v808 = vpop.xlane.xlu0 %807
  %v841 = vlaneseq
  %v842 = vshrl.u32 %v841, 7
  %v843 = vsub.s32 %v210, %v842
  %v844 = vrot.slane %v746, %v843
  %v845 = vadd.s32 %v210, 4294967288
  %v846 = vlaneseq
  %v847 = vshrl.u32 %v846, 7
  %v848 = vsub.s32 %v845, %v847
  %v849 = vrot.slane %v748, %v848
  %vm850 = vcmask 130112
  %v851 = vsel %vm850, %v849, %v844
  %v852 = vadd.s32 %v210, 4294967280
  %v853 = vlaneseq
  %v854 = vshrl.u32 %v853, 7
  %v855 = vsub.s32 %v852, %v854
  %v856 = vrot.slane %v750, %v855
  %vm857 = vcmask 195712
  %v858 = vsel %vm857, %v856, %v851
  %v859 = vadd.s32 %v210, 4294967272
  %v860 = vlaneseq
  %v861 = vshrl.u32 %v860, 7
  %v862 = vsub.s32 %v859, %v861
  %v863 = vrot.slane %v752, %v862
  %vm864 = vcmask 261312
  %v865 = vsel %vm864, %v863, %v858
  %v866 = vadd.s32 %v210, 4294967264
  %v867 = vlaneseq
  %v868 = vshrl.u32 %v867, 7
  %v869 = vsub.s32 %v866, %v868
  %v870 = vrot.slane %v754, %v869
  %vm871 = vcmask 326912
  %v872 = vsel %vm871, %v870, %v865
  %v873 = vadd.s32 %v210, 4294967256
  %v874 = vlaneseq
  %v875 = vshrl.u32 %v874, 7
  %v876 = vsub.s32 %v873, %v875
  %v877 = vrot.slane %v756, %v876
  %vm878 = vcmask 392512
  %v879 = vsel %vm878, %v877, %v872
  %v880 = vadd.s32 %v210, 4294967248
  %v881 = vlaneseq
  %v882 = vshrl.u32 %v881, 7
  %v883 = vsub.s32 %v880, %v882
  %v884 = vrot.slane %v758, %v883
  %vm885 = vcmask 458112
  %v886 = vsel %vm885, %v884, %v879
  %v887 = vadd.s32 %v210, 4294967240
  %v888 = vlaneseq
  %v889 = vshrl.u32 %v888, 7
  %v890 = vsub.s32 %v887, %v889
  %v891 = vrot.slane %v760, %v890
  %vm892 = vcmask 523712
  %v893 = vsel %vm892, %v891, %v886
  %v894 = vadd.s32 %v210, 4294967232
  %v895 = vlaneseq
  %v896 = vshrl.u32 %v895, 7
  %v897 = vsub.s32 %v894, %v896
  %v898 = vrot.slane %v762, %v897
  %vm899 = vcmask 589312
  %v900 = vsel %vm899, %v898, %v893
  %v901 = vadd.s32 %v210, 4294967224
  %v902 = vlaneseq
  %v903 = vshrl.u32 %v902, 7
  %v904 = vsub.s32 %v901, %v903
  %v905 = vrot.slane %v764, %v904
  %vm906 = vcmask 654912
  %v907 = vsel %vm906, %v905, %v900
  %v908 = vadd.s32 %v210, 4294967216
  %v909 = vlaneseq
  %v910 = vshrl.u32 %v909, 7
  %v911 = vsub.s32 %v908, %v910
  %v912 = vrot.slane %v766, %v911
  %vm913 = vcmask 720512
  %v914 = vsel %vm913, %v912, %v907
  %v915 = vadd.s32 %v210, 4294967208
  %v916 = vlaneseq
  %v917 = vshrl.u32 %v916, 7
  %v918 = vsub.s32 %v915, %v917
  %v919 = vrot.slane %v768, %v918
  %vm920 = vcmask 786112
  %v921 = vsel %vm920, %v919, %v914
  %v922 = vadd.s32 %v210, 4294967200
  %v923 = vlaneseq
  %v924 = vshrl.u32 %v923, 7
  %v925 = vsub.s32 %v922, %v924
  %v926 = vrot.slane %v770, %v925
  %vm927 = vcmask 851712
  %v928 = vsel %vm927, %v926, %v921
  %v929 = vadd.s32 %v210, 4294967192
  %v930 = vlaneseq
  %v931 = vshrl.u32 %v930, 7
  %v932 = vsub.s32 %v929, %v931
  %v933 = vrot.slane %v772, %v932
  %vm934 = vcmask 917312
  %v935 = vsel %vm934, %v933, %v928
  %v936 = vadd.s32 %v210, 4294967184
  %v937 = vlaneseq
  %v938 = vshrl.u32 %v937, 7
  %v939 = vsub.s32 %v936, %v938
  %v940 = vrot.slane %v774, %v939
  %vm941 = vcmask 982912
  %v942 = vsel %vm941, %v940, %v935
  %v943 = vadd.s32 %v210, 4294967176
  %v944 = vlaneseq
  %v945 = vshrl.u32 %v944, 7
  %v946 = vsub.s32 %v943, %v945
  %v947 = vrot.slane %v776, %v946
  %vm948 = vcmask 1048512
  %v949 = vsel %vm948, %v947, %v942
  %v950 = vlaneseq
  %v951 = vshrl.u32 %v950, 7
  %v952 = vsub.s32 %v210, %v951
  %v953 = vrot.slane %v778, %v952
  %v954 = vlaneseq
  %v955 = vshrl.u32 %v954, 7
  %v956 = vsub.s32 %v845, %v955
  %v957 = vrot.slane %v780, %v956
  %v958 = vsel %vm850, %v957, %v953
  %v959 = vlaneseq
  %v960 = vshrl.u32 %v959, 7
  %v961 = vsub.s32 %v852, %v960
  %v962 = vrot.slane %v782, %v961
  %v963 = vsel %vm857, %v962, %v958
  %v964 = vlaneseq
  %v965 = vshrl.u32 %v964, 7
  %v966 = vsub.s32 %v859, %v965
  %v967 = vrot.slane %v784, %v966
  %v968 = vsel %vm864, %v967, %v963
  %v969 = vlaneseq
  %v970 = vshrl.u32 %v969, 7
  %v971 = vsub.s32 %v866, %v970
  %v972 = vrot.slane %v786, %v971
  %v973 = vsel %vm871, %v972, %v968
  %v974 = vlaneseq
  %v975 = vshrl.u32 %v974, 7
  %v976 = vsub.s32 %v873, %v975
  %v977 = vrot.slane %v788, %v976
  %v978 = vsel %vm878, %v977, %v973
  %v979 = vlaneseq
  %v980 = vshrl.u32 %v979, 7
  %v981 = vsub.s32 %v880, %v980
  %v982 = vrot.slane %v790, %v981
  %v983 = vsel %vm885, %v982, %v978
  %v984 = vlaneseq
  %v985 = vshrl.u32 %v984, 7
  %v986 = vsub.s32 %v887, %v985
  %v987 = vrot.slane %v792, %v986
  %v988 = vsel %vm892, %v987, %v983
  %v989 = vlaneseq
  %v990 = vshrl.u32 %v989, 7
  %v991 = vsub.s32 %v894, %v990
  %v992 = vrot.slane %v794, %v991
  %v993 = vsel %vm899, %v992, %v988
  %v994 = vlaneseq
  %v995 = vshrl.u32 %v994, 7
  %v996 = vsub.s32 %v901, %v995
  %v997 = vrot.slane %v796, %v996
  %v998 = vsel %vm906, %v997, %v993
  %v999 = vlaneseq
  %v1000 = vshrl.u32 %v999, 7
  %v1001 = vsub.s32 %v908, %v1000
  %v1002 = vrot.slane %v798, %v1001
  %v1003 = vsel %vm913, %v1002, %v998
  %v1004 = vlaneseq
  %v1005 = vshrl.u32 %v1004, 7
  %v1006 = vsub.s32 %v915, %v1005
  %v1007 = vrot.slane %v800, %v1006
  %v1008 = vsel %vm920, %v1007, %v1003
  %v1009 = vlaneseq
  %v1010 = vshrl.u32 %v1009, 7
  %v1011 = vsub.s32 %v922, %v1010
  %v1012 = vrot.slane %v802, %v1011
  %v1013 = vsel %vm927, %v1012, %v1008
  %v1014 = vlaneseq
  %v1015 = vshrl.u32 %v1014, 7
  %v1016 = vsub.s32 %v929, %v1015
  %v1017 = vrot.slane %v804, %v1016
  %v1018 = vsel %vm934, %v1017, %v1013
  %v1019 = vlaneseq
  %v1020 = vshrl.u32 %v1019, 7
  %v1021 = vsub.s32 %v936, %v1020
  %v1022 = vrot.slane %v806, %v1021
  %v1023 = vsel %vm941, %v1022, %v1018
  %v1024 = vlaneseq
  %v1025 = vshrl.u32 %v1024, 7
  %v1026 = vsub.s32 %v943, %v1025
  %v1027 = vrot.slane %v808, %v1026
  %v1028 = vsel %vm948, %v1027, %v1023
  %vm1029 = vcmask 1041409
  %v1030 = vsel %vm1029, %v1028, %v949
  %v1032 = vadd.f32 %v744, %v1030
  %1033 = vst [vmem:[%s1] sm:$0x3] %v1032
  // Predicated region
  $region10: #{anomaly_attention.6} parent=0 // pred_check
    _
  $region11: #{anomaly_attention.6} parent=0 // pred_check_branch
    %1035 = sbr.rel (0) target = $region13
  $region12: #{anomaly_attention.6} parent=0 // pred_region
    _
  $region13: #{anomaly_attention.6} parent=0 // pred_fallthru
    _
  // Predicated region
  $region14: #{anomaly_attention.6} parent=0 // pred_check
    _
  $region15: #{anomaly_attention.6} parent=0 // pred_check_branch
    %1037 = sbr.rel (0) target = $region17
  $region16: #{anomaly_attention.6} parent=0 // pred_region
    _
  $region17: #{anomaly_attention.6} parent=0 // pred_fallthru
    _

// kernel: anomaly_attention.7
$region0: #{anomaly_attention.7}
  #allocation0 [shape = 'u32[]', space=smem, size = 0x4, offset = 0x4, fixed_abs, tag = 'smem constant byte address 0x4 - core index']
  #allocation1 [shape = 'u32[144,128]{1,0:T(1,128)}', space=vmem, size = 0x12000, scoped, tag = 'internal scratch']
  %s0 = inlined_call_operand.vmem [shape: f32[2,1,1], index: 0, kind: input, shape index: {}]
  %s1 = inlined_call_operand.vmem [shape: f32[2,128,1], index: 1, kind: input, shape index: {}]
  %s2 = inlined_call_operand.vmem [shape: f32[2,128,128], index: 2, kind: output, shape index: {}]
  %s3 = sld [smem:[#allocation0]]
  $region18: #{anomaly_attention.7} parent=0
    _
  %s5 = ssub.s32 1, %s3
  %s6 = scalar_select 0, %s5, %s3
  // Predicated region
  $region2: #{anomaly_attention.7} parent=0 // pred_check
    _
  $region3: #{anomaly_attention.7} parent=0 // pred_check_branch
    %8 = sbr.rel (0) target = $region5
  $region4: #{anomaly_attention.7} parent=0 // pred_region
    _
  $region5: #{anomaly_attention.7} parent=0 // pred_fallthru
    _
  // Predicated region
  $region6: #{anomaly_attention.7} parent=0 // pred_check
    _
  $region7: #{anomaly_attention.7} parent=0 // pred_check_branch
    %10 = sbr.rel (0) target = $region9
  $region8: #{anomaly_attention.7} parent=0 // pred_region
    _
  $region9: #{anomaly_attention.7} parent=0 // pred_fallthru
    _
  %v11 = vld [vmem:[%s1] sm:$0xff]
  %v12 = vld [vmem:[%s1 + $0x8] sm:$0xff]
  %v13 = vld [vmem:[%s1 + $0x10] sm:$0xff]
  %v14 = vld [vmem:[%s1 + $0x18] sm:$0xff]
  %v15 = vld [vmem:[%s1 + $0x20] sm:$0xff]
  %v16 = vld [vmem:[%s1 + $0x28] sm:$0xff]
  %v17 = vld [vmem:[%s1 + $0x30] sm:$0xff]
  %v18 = vld [vmem:[%s1 + $0x38] sm:$0xff]
  %v19 = vld [vmem:[%s1 + $0x40] sm:$0xff]
  %v20 = vld [vmem:[%s1 + $0x48] sm:$0xff]
  %v21 = vld [vmem:[%s1 + $0x50] sm:$0xff]
  %v22 = vld [vmem:[%s1 + $0x58] sm:$0xff]
  %v23 = vld [vmem:[%s1 + $0x60] sm:$0xff]
  %v24 = vld [vmem:[%s1 + $0x68] sm:$0xff]
  %v25 = vld [vmem:[%s1 + $0x70] sm:$0xff]
  %v26 = vld [vmem:[%s1 + $0x78] sm:$0xff]
  %v27 = vld [vmem:[%s1 + $0x80] sm:$0xff]
  %v28 = vld [vmem:[%s1 + $0x88] sm:$0xff]
  %v29 = vld [vmem:[%s1 + $0x90] sm:$0xff]
  %v30 = vld [vmem:[%s1 + $0x98] sm:$0xff]
  %v31 = vld [vmem:[%s1 + $0xa0] sm:$0xff]
  %v32 = vld [vmem:[%s1 + $0xa8] sm:$0xff]
  %v33 = vld [vmem:[%s1 + $0xb0] sm:$0xff]
  %v34 = vld [vmem:[%s1 + $0xb8] sm:$0xff]
  %v35 = vld [vmem:[%s1 + $0xc0] sm:$0xff]
  %v36 = vld [vmem:[%s1 + $0xc8] sm:$0xff]
  %v37 = vld [vmem:[%s1 + $0xd0] sm:$0xff]
  %v38 = vld [vmem:[%s1 + $0xd8] sm:$0xff]
  %v39 = vld [vmem:[%s1 + $0xe0] sm:$0xff]
  %v40 = vld [vmem:[%s1 + $0xe8] sm:$0xff]
  %v41 = vld [vmem:[%s1 + $0xf0] sm:$0xff]
  %v42 = vld [vmem:[%s1 + $0xf8] sm:$0xff]
  %v43 = vrcp.pop %v11
  %v44 = vrcp.pop %v12
  %v45 = vrcp.pop %v13
  %v46 = vrcp.pop %v14
  %v47 = vrcp.pop %v15
  %v48 = vrcp.pop %v16
  %v49 = vrcp.pop %v17
  %v50 = vrcp.pop %v18
  %v51 = vrcp.pop %v19
  %v52 = vrcp.pop %v20
  %v53 = vrcp.pop %v21
  %v54 = vrcp.pop %v22
  %v55 = vrcp.pop %v23
  %v56 = vrcp.pop %v24
  %v57 = vrcp.pop %v25
  %v58 = vrcp.pop %v26
  %v59 = vrcp.pop %v27
  %v60 = vrcp.pop %v28
  %v61 = vrcp.pop %v29
  %v62 = vrcp.pop %v30
  %v63 = vrcp.pop %v31
  %v64 = vrcp.pop %v32
  %v65 = vrcp.pop %v33
  %v66 = vrcp.pop %v34
  %v67 = vrcp.pop %v35
  %v68 = vrcp.pop %v36
  %v69 = vrcp.pop %v37
  %v70 = vrcp.pop %v38
  %v71 = vrcp.pop %v39
  %v72 = vrcp.pop %v40
  %v73 = vrcp.pop %v41
  %v74 = vrcp.pop %v42
  %v75 = vmul.f32 %v43, 0.3989423
  %v76 = vmul.f32 %v44, 0.3989423
  %v77 = vmul.f32 %v45, 0.3989423
  %v78 = vmul.f32 %v46, 0.3989423
  %v79 = vmul.f32 %v47, 0.3989423
  %v80 = vmul.f32 %v48, 0.3989423
  %v81 = vmul.f32 %v49, 0.3989423
  %v82 = vmul.f32 %v50, 0.3989423
  %v83 = vmul.f32 %v51, 0.3989423
  %v84 = vmul.f32 %v52, 0.3989423
  %v85 = vmul.f32 %v53, 0.3989423
  %v86 = vmul.f32 %v54, 0.3989423
  %v87 = vmul.f32 %v55, 0.3989423
  %v88 = vmul.f32 %v56, 0.3989423
  %v89 = vmul.f32 %v57, 0.3989423
  %v90 = vmul.f32 %v58, 0.3989423
  %v91 = vmul.f32 %v59, 0.3989423
  %v92 = vmul.f32 %v60, 0.3989423
  %v93 = vmul.f32 %v61, 0.3989423
  %v94 = vmul.f32 %v62, 0.3989423
  %v95 = vmul.f32 %v63, 0.3989423
  %v96 = vmul.f32 %v64, 0.3989423
  %v97 = vmul.f32 %v65, 0.3989423
  %v98 = vmul.f32 %v66, 0.3989423
  %v99 = vmul.f32 %v67, 0.3989423
  %v100 = vmul.f32 %v68, 0.3989423
  %v101 = vmul.f32 %v69, 0.3989423
  %v102 = vmul.f32 %v70, 0.3989423
  %v103 = vmul.f32 %v71, 0.3989423
  %v104 = vmul.f32 %v72, 0.3989423
  %v105 = vmul.f32 %v73, 0.3989423
  %v106 = vmul.f32 %v74, 0.3989423
  %v107 = vmul.f32 %v43, -0.5
  %v108 = vmul.f32 %v44, -0.5
  %v109 = vmul.f32 %v45, -0.5
  %v110 = vmul.f32 %v46, -0.5
  %v111 = vmul.f32 %v47, -0.5
  %v112 = vmul.f32 %v48, -0.5
  %v113 = vmul.f32 %v49, -0.5
  %v114 = vmul.f32 %v50, -0.5
  %v115 = vmul.f32 %v51, -0.5
  %v116 = vmul.f32 %v52, -0.5
  %v117 = vmul.f32 %v53, -0.5
  %v118 = vmul.f32 %v54, -0.5
  %v119 = vmul.f32 %v55, -0.5
  %v120 = vmul.f32 %v56, -0.5
  %v121 = vmul.f32 %v57, -0.5
  %v122 = vmul.f32 %v58, -0.5
  %v123 = vmul.f32 %v59, -0.5
  %v124 = vmul.f32 %v60, -0.5
  %v125 = vmul.f32 %v61, -0.5
  %v126 = vmul.f32 %v62, -0.5
  %v127 = vmul.f32 %v63, -0.5
  %v128 = vmul.f32 %v64, -0.5
  %v129 = vmul.f32 %v65, -0.5
  %v130 = vmul.f32 %v66, -0.5
  %v131 = vmul.f32 %v67, -0.5
  %v132 = vmul.f32 %v68, -0.5
  %v133 = vmul.f32 %v69, -0.5
  %v134 = vmul.f32 %v70, -0.5
  %v135 = vmul.f32 %v71, -0.5
  %v136 = vmul.f32 %v72, -0.5
  %v137 = vmul.f32 %v73, -0.5
  %v138 = vmul.f32 %v74, -0.5
  %v139 = vmul.f32 %v107, %v43
  %v140 = vmul.f32 %v108, %v44
  %v141 = vmul.f32 %v109, %v45
  %v142 = vmul.f32 %v110, %v46
  %v143 = vmul.f32 %v111, %v47
  %v144 = vmul.f32 %v112, %v48
  %v145 = vmul.f32 %v113, %v49
  %v146 = vmul.f32 %v114, %v50
  %v147 = vmul.f32 %v115, %v51
  %v148 = vmul.f32 %v116, %v52
  %v149 = vmul.f32 %v117, %v53
  %v150 = vmul.f32 %v118, %v54
  %v151 = vmul.f32 %v119, %v55
  %v152 = vmul.f32 %v120, %v56
  %v153 = vmul.f32 %v121, %v57
  %v154 = vmul.f32 %v122, %v58
  %v155 = vmul.f32 %v123, %v59
  %v156 = vmul.f32 %v124, %v60
  %v157 = vmul.f32 %v125, %v61
  %v158 = vmul.f32 %v126, %v62
  %v159 = vmul.f32 %v127, %v63
  %v160 = vmul.f32 %v128, %v64
  %v161 = vmul.f32 %v129, %v65
  %v162 = vmul.f32 %v130, %v66
  %v163 = vmul.f32 %v131, %v67
  %v164 = vmul.f32 %v132, %v68
  %v165 = vmul.f32 %v133, %v69
  %v166 = vmul.f32 %v134, %v70
  %v167 = vmul.f32 %v135, %v71
  %v168 = vmul.f32 %v136, %v72
  %v169 = vmul.f32 %v137, %v73
  %v170 = vmul.f32 %v138, %v74
  %s171 = smul.u32 0, 128
  %s172 = smul.u32 0, 128
  %v173 = vlaneseq
  %v174 = vshrl.u32 %v173, 7
  %v175 = vadd.s32 %v174, 8
  %v176 = vadd.s32 %v174, 16
  %v177 = vadd.s32 %v174, 24
  %v178 = vadd.s32 %v174, 32
  %v179 = vadd.s32 %v174, 40
  %v180 = vadd.s32 %v174, 48
  %v181 = vadd.s32 %v174, 56
  %v182 = vadd.s32 %v174, 64
  %v183 = vadd.s32 %v174, 72
  %v184 = vadd.s32 %v174, 80
  %v185 = vadd.s32 %v174, 88
  %v186 = vadd.s32 %v174, 96
  %v187 = vadd.s32 %v174, 104
  %v188 = vadd.s32 %v174, 112
  %v189 = vadd.s32 %v174, 120
  %v190 = vstv %s171
  %v191 = vadd.s32 %v174, %v190
  %v192 = vadd.s32 %v175, %v190
  %v193 = vadd.s32 %v176, %v190
  %v194 = vadd.s32 %v177, %v190
  %v195 = vadd.s32 %v178, %v190
  %v196 = vadd.s32 %v179, %v190
  %v197 = vadd.s32 %v180, %v190
  %v198 = vadd.s32 %v181, %v190
  %v199 = vadd.s32 %v182, %v190
  %v200 = vadd.s32 %v183, %v190
  %v201 = vadd.s32 %v184, %v190
  %v202 = vadd.s32 %v185, %v190
  %v203 = vadd.s32 %v186, %v190
  %v204 = vadd.s32 %v187, %v190
  %v205 = vadd.s32 %v188, %v190
  %v206 = vadd.s32 %v189, %v190
  %v207 = vlaneseq
  %v208 = vand.u32 %v207, 127
  %v209 = vstv %s172
  %v210 = vadd.s32 %v208, %v209
  %v211 = vsub.s32 %v191, %v210
  %v212 = vsub.s32 %v192, %v210
  %v213 = vsub.s32 %v193, %v210
  %v214 = vsub.s32 %v194, %v210
  %v215 = vsub.s32 %v195, %v210
  %v216 = vsub.s32 %v196, %v210
  %v217 = vsub.s32 %v197, %v210
  %v218 = vsub.s32 %v198, %v210
  %v219 = vsub.s32 %v199, %v210
  %v220 = vsub.s32 %v200, %v210
  %v221 = vsub.s32 %v201, %v210
  %v222 = vsub.s32 %v202, %v210
  %v223 = vsub.s32 %v203, %v210
  %v224 = vsub.s32 %v204, %v210
  %v225 = vsub.s32 %v205, %v210
  %v226 = vsub.s32 %v206, %v210
  %v227 = vcvt.s32.f32 %v211
  %v228 = vcvt.s32.f32 %v212
  %v229 = vcvt.s32.f32 %v213
  %v230 = vcvt.s32.f32 %v214
  %v231 = vcvt.s32.f32 %v215
  %v232 = vcvt.s32.f32 %v216
  %v233 = vcvt.s32.f32 %v217
  %v234 = vcvt.s32.f32 %v218
  %v235 = vcvt.s32.f32 %v219
  %v236 = vcvt.s32.f32 %v220
  %v237 = vcvt.s32.f32 %v221
  %v238 = vcvt.s32.f32 %v222
  %v239 = vcvt.s32.f32 %v223
  %v240 = vcvt.s32.f32 %v224
  %v241 = vcvt.s32.f32 %v225
  %v242 = vcvt.s32.f32 %v226
  %v243 = vmul.f32 %v227, %v227
  %v244 = vmul.f32 %v228, %v228
  %v245 = vmul.f32 %v229, %v229
  %v246 = vmul.f32 %v230, %v230
  %v247 = vmul.f32 %v231, %v231
  %v248 = vmul.f32 %v232, %v232
  %v249 = vmul.f32 %v233, %v233
  %v250 = vmul.f32 %v234, %v234
  %v251 = vmul.f32 %v235, %v235
  %v252 = vmul.f32 %v236, %v236
  %v253 = vmul.f32 %v237, %v237
  %v254 = vmul.f32 %v238, %v238
  %v255 = vmul.f32 %v239, %v239
  %v256 = vmul.f32 %v240, %v240
  %v257 = vmul.f32 %v241, %v241
  %v258 = vmul.f32 %v242, %v242
  %260 = vset.pattern.permute.xlu0 0
  %261 = vperm.xlu0 %260, %v139
  %v262 = vpop.permute.xlu0 %261
  %265 = vset.pattern.permute.xlu0 0
  %266 = vperm.xlu0 %265, %v140
  %v267 = vpop.permute.xlu0 %266
  %270 = vset.pattern.permute.xlu0 0
  %271 = vperm.xlu0 %270, %v141
  %v272 = vpop.permute.xlu0 %271
  %275 = vset.pattern.permute.xlu0 0
  %276 = vperm.xlu0 %275, %v142
  %v277 = vpop.permute.xlu0 %276
  %280 = vset.pattern.permute.xlu0 0
  %281 = vperm.xlu0 %280, %v143
  %v282 = vpop.permute.xlu0 %281
  %285 = vset.pattern.permute.xlu0 0
  %286 = vperm.xlu0 %285, %v144
  %v287 = vpop.permute.xlu0 %286
  %290 = vset.pattern.permute.xlu0 0
  %291 = vperm.xlu0 %290, %v145
  %v292 = vpop.permute.xlu0 %291
  %295 = vset.pattern.permute.xlu0 0
  %296 = vperm.xlu0 %295, %v146
  %v297 = vpop.permute.xlu0 %296
  %300 = vset.pattern.permute.xlu0 0
  %301 = vperm.xlu0 %300, %v147
  %v302 = vpop.permute.xlu0 %301
  %305 = vset.pattern.permute.xlu0 0
  %306 = vperm.xlu0 %305, %v148
  %v307 = vpop.permute.xlu0 %306
  %310 = vset.pattern.permute.xlu0 0
  %311 = vperm.xlu0 %310, %v149
  %v312 = vpop.permute.xlu0 %311
  %315 = vset.pattern.permute.xlu0 0
  %316 = vperm.xlu0 %315, %v150
  %v317 = vpop.permute.xlu0 %316
  %320 = vset.pattern.permute.xlu0 0
  %321 = vperm.xlu0 %320, %v151
  %v322 = vpop.permute.xlu0 %321
  %325 = vset.pattern.permute.xlu0 0
  %326 = vperm.xlu0 %325, %v152
  %v327 = vpop.permute.xlu0 %326
  %330 = vset.pattern.permute.xlu0 0
  %331 = vperm.xlu0 %330, %v153
  %v332 = vpop.permute.xlu0 %331
  %335 = vset.pattern.permute.xlu0 0
  %336 = vperm.xlu0 %335, %v154
  %v337 = vpop.permute.xlu0 %336
  %340 = vset.pattern.permute.xlu0 0
  %341 = vperm.xlu0 %340, %v155
  %v342 = vpop.permute.xlu0 %341
  %345 = vset.pattern.permute.xlu0 0
  %346 = vperm.xlu0 %345, %v156
  %v347 = vpop.permute.xlu0 %346
  %350 = vset.pattern.permute.xlu0 0
  %351 = vperm.xlu0 %350, %v157
  %v352 = vpop.permute.xlu0 %351
  %355 = vset.pattern.permute.xlu0 0
  %356 = vperm.xlu0 %355, %v158
  %v357 = vpop.permute.xlu0 %356
  %360 = vset.pattern.permute.xlu0 0
  %361 = vperm.xlu0 %360, %v159
  %v362 = vpop.permute.xlu0 %361
  %365 = vset.pattern.permute.xlu0 0
  %366 = vperm.xlu0 %365, %v160
  %v367 = vpop.permute.xlu0 %366
  %370 = vset.pattern.permute.xlu0 0
  %371 = vperm.xlu0 %370, %v161
  %v372 = vpop.permute.xlu0 %371
  %375 = vset.pattern.permute.xlu0 0
  %376 = vperm.xlu0 %375, %v162
  %v377 = vpop.permute.xlu0 %376
  %380 = vset.pattern.permute.xlu0 0
  %381 = vperm.xlu0 %380, %v163
  %v382 = vpop.permute.xlu0 %381
  %385 = vset.pattern.permute.xlu0 0
  %386 = vperm.xlu0 %385, %v164
  %v387 = vpop.permute.xlu0 %386
  %390 = vset.pattern.permute.xlu0 0
  %391 = vperm.xlu0 %390, %v165
  %v392 = vpop.permute.xlu0 %391
  %395 = vset.pattern.permute.xlu0 0
  %396 = vperm.xlu0 %395, %v166
  %v397 = vpop.permute.xlu0 %396
  %400 = vset.pattern.permute.xlu0 0
  %401 = vperm.xlu0 %400, %v167
  %v402 = vpop.permute.xlu0 %401
  %405 = vset.pattern.permute.xlu0 0
  %406 = vperm.xlu0 %405, %v168
  %v407 = vpop.permute.xlu0 %406
  %410 = vset.pattern.permute.xlu0 0
  %411 = vperm.xlu0 %410, %v169
  %v412 = vpop.permute.xlu0 %411
  %415 = vset.pattern.permute.xlu0 0
  %416 = vperm.xlu0 %415, %v170
  %v417 = vpop.permute.xlu0 %416
  %v419 = vmul.f32 %v262, %v243
  %v420 = vmul.f32 %v267, %v244
  %v421 = vmul.f32 %v272, %v245
  %v422 = vmul.f32 %v277, %v246
  %v423 = vmul.f32 %v282, %v247
  %v424 = vmul.f32 %v287, %v248
  %v425 = vmul.f32 %v292, %v249
  %v426 = vmul.f32 %v297, %v250
  %v427 = vmul.f32 %v302, %v251
  %v428 = vmul.f32 %v307, %v252
  %v429 = vmul.f32 %v312, %v253
  %v430 = vmul.f32 %v317, %v254
  %v431 = vmul.f32 %v322, %v255
  %v432 = vmul.f32 %v327, %v256
  %v433 = vmul.f32 %v332, %v257
  %v434 = vmul.f32 %v337, %v258
  %v435 = vmul.f32 %v342, %v243
  %v436 = vmul.f32 %v347, %v244
  %v437 = vmul.f32 %v352, %v245
  %v438 = vmul.f32 %v357, %v246
  %v439 = vmul.f32 %v362, %v247
  %v440 = vmul.f32 %v367, %v248
  %v441 = vmul.f32 %v372, %v249
  %v442 = vmul.f32 %v377, %v250
  %v443 = vmul.f32 %v382, %v251
  %v444 = vmul.f32 %v387, %v252
  %v445 = vmul.f32 %v392, %v253
  %v446 = vmul.f32 %v397, %v254
  %v447 = vmul.f32 %v402, %v255
  %v448 = vmul.f32 %v407, %v256
  %v449 = vmul.f32 %v412, %v257
  %v450 = vmul.f32 %v417, %v258
  %v451 = vmul.f32 %v419, 1.442695
  %v452 = vpow.pop %v451
  %v453 = vmul.f32 %v420, 1.442695
  %v454 = vpow.pop %v453
  %v455 = vmul.f32 %v421, 1.442695
  %v456 = vpow.pop %v455
  %v457 = vmul.f32 %v422, 1.442695
  %v458 = vpow.pop %v457
  %v459 = vmul.f32 %v423, 1.442695
  %v460 = vpow.pop %v459
  %v461 = vmul.f32 %v424, 1.442695
  %v462 = vpow.pop %v461
  %v463 = vmul.f32 %v425, 1.442695
  %v464 = vpow.pop %v463
  %v465 = vmul.f32 %v426, 1.442695
  %v466 = vpow.pop %v465
  %v467 = vmul.f32 %v427, 1.442695
  %v468 = vpow.pop %v467
  %v469 = vmul.f32 %v428, 1.442695
  %v470 = vpow.pop %v469
  %v471 = vmul.f32 %v429, 1.442695
  %v472 = vpow.pop %v471
  %v473 = vmul.f32 %v430, 1.442695
  %v474 = vpow.pop %v473
  %v475 = vmul.f32 %v431, 1.442695
  %v476 = vpow.pop %v475
  %v477 = vmul.f32 %v432, 1.442695
  %v478 = vpow.pop %v477
  %v479 = vmul.f32 %v433, 1.442695
  %v480 = vpow.pop %v479
  %v481 = vmul.f32 %v434, 1.442695
  %v482 = vpow.pop %v481
  %v483 = vmul.f32 %v435, 1.442695
  %v484 = vpow.pop %v483
  %v485 = vmul.f32 %v436, 1.442695
  %v486 = vpow.pop %v485
  %v487 = vmul.f32 %v437, 1.442695
  %v488 = vpow.pop %v487
  %v489 = vmul.f32 %v438, 1.442695
  %v490 = vpow.pop %v489
  %v491 = vmul.f32 %v439, 1.442695
  %v492 = vpow.pop %v491
  %v493 = vmul.f32 %v440, 1.442695
  %v494 = vpow.pop %v493
  %v495 = vmul.f32 %v441, 1.442695
  %v496 = vpow.pop %v495
  %v497 = vmul.f32 %v442, 1.442695
  %v498 = vpow.pop %v497
  %v499 = vmul.f32 %v443, 1.442695
  %v500 = vpow.pop %v499
  %v501 = vmul.f32 %v444, 1.442695
  %v502 = vpow.pop %v501
  %v503 = vmul.f32 %v445, 1.442695
  %v504 = vpow.pop %v503
  %v505 = vmul.f32 %v446, 1.442695
  %v506 = vpow.pop %v505
  %v507 = vmul.f32 %v447, 1.442695
  %v508 = vpow.pop %v507
  %v509 = vmul.f32 %v448, 1.442695
  %v510 = vpow.pop %v509
  %v511 = vmul.f32 %v449, 1.442695
  %v512 = vpow.pop %v511
  %v513 = vmul.f32 %v450, 1.442695
  %v514 = vpow.pop %v513
  %516 = vset.pattern.permute.xlu0 0
  %517 = vperm.xlu0 %516, %v75
  %v518 = vpop.permute.xlu0 %517
  %521 = vset.pattern.permute.xlu0 0
  %522 = vperm.xlu0 %521, %v76
  %v523 = vpop.permute.xlu0 %522
  %526 = vset.pattern.permute.xlu0 0
  %527 = vperm.xlu0 %526, %v77
  %v528 = vpop.permute.xlu0 %527
  %531 = vset.pattern.permute.xlu0 0
  %532 = vperm.xlu0 %531, %v78
  %v533 = vpop.permute.xlu0 %532
  %536 = vset.pattern.permute.xlu0 0
  %537 = vperm.xlu0 %536, %v79
  %v538 = vpop.permute.xlu0 %537
  %541 = vset.pattern.permute.xlu0 0
  %542 = vperm.xlu0 %541, %v80
  %v543 = vpop.permute.xlu0 %542
  %546 = vset.pattern.permute.xlu0 0
  %547 = vperm.xlu0 %546, %v81
  %v548 = vpop.permute.xlu0 %547
  %551 = vset.pattern.permute.xlu0 0
  %552 = vperm.xlu0 %551, %v82
  %v553 = vpop.permute.xlu0 %552
  %556 = vset.pattern.permute.xlu0 0
  %557 = vperm.xlu0 %556, %v83
  %v558 = vpop.permute.xlu0 %557
  %561 = vset.pattern.permute.xlu0 0
  %562 = vperm.xlu0 %561, %v84
  %v563 = vpop.permute.xlu0 %562
  %566 = vset.pattern.permute.xlu0 0
  %567 = vperm.xlu0 %566, %v85
  %v568 = vpop.permute.xlu0 %567
  %571 = vset.pattern.permute.xlu0 0
  %572 = vperm.xlu0 %571, %v86
  %v573 = vpop.permute.xlu0 %572
  %576 = vset.pattern.permute.xlu0 0
  %577 = vperm.xlu0 %576, %v87
  %v578 = vpop.permute.xlu0 %577
  %581 = vset.pattern.permute.xlu0 0
  %582 = vperm.xlu0 %581, %v88
  %v583 = vpop.permute.xlu0 %582
  %586 = vset.pattern.permute.xlu0 0
  %587 = vperm.xlu0 %586, %v89
  %v588 = vpop.permute.xlu0 %587
  %591 = vset.pattern.permute.xlu0 0
  %592 = vperm.xlu0 %591, %v90
  %v593 = vpop.permute.xlu0 %592
  %596 = vset.pattern.permute.xlu0 0
  %597 = vperm.xlu0 %596, %v91
  %v598 = vpop.permute.xlu0 %597
  %601 = vset.pattern.permute.xlu0 0
  %602 = vperm.xlu0 %601, %v92
  %v603 = vpop.permute.xlu0 %602
  %606 = vset.pattern.permute.xlu0 0
  %607 = vperm.xlu0 %606, %v93
  %v608 = vpop.permute.xlu0 %607
  %611 = vset.pattern.permute.xlu0 0
  %612 = vperm.xlu0 %611, %v94
  %v613 = vpop.permute.xlu0 %612
  %616 = vset.pattern.permute.xlu0 0
  %617 = vperm.xlu0 %616, %v95
  %v618 = vpop.permute.xlu0 %617
  %621 = vset.pattern.permute.xlu0 0
  %622 = vperm.xlu0 %621, %v96
  %v623 = vpop.permute.xlu0 %622
  %626 = vset.pattern.permute.xlu0 0
  %627 = vperm.xlu0 %626, %v97
  %v628 = vpop.permute.xlu0 %627
  %631 = vset.pattern.permute.xlu0 0
  %632 = vperm.xlu0 %631, %v98
  %v633 = vpop.permute.xlu0 %632
  %636 = vset.pattern.permute.xlu0 0
  %637 = vperm.xlu0 %636, %v99
  %v638 = vpop.permute.xlu0 %637
  %641 = vset.pattern.permute.xlu0 0
  %642 = vperm.xlu0 %641, %v100
  %v643 = vpop.permute.xlu0 %642
  %646 = vset.pattern.permute.xlu0 0
  %647 = vperm.xlu0 %646, %v101
  %v648 = vpop.permute.xlu0 %647
  %651 = vset.pattern.permute.xlu0 0
  %652 = vperm.xlu0 %651, %v102
  %v653 = vpop.permute.xlu0 %652
  %656 = vset.pattern.permute.xlu0 0
  %657 = vperm.xlu0 %656, %v103
  %v658 = vpop.permute.xlu0 %657
  %661 = vset.pattern.permute.xlu0 0
  %662 = vperm.xlu0 %661, %v104
  %v663 = vpop.permute.xlu0 %662
  %666 = vset.pattern.permute.xlu0 0
  %667 = vperm.xlu0 %666, %v105
  %v668 = vpop.permute.xlu0 %667
  %671 = vset.pattern.permute.xlu0 0
  %672 = vperm.xlu0 %671, %v106
  %v673 = vpop.permute.xlu0 %672
  %v675 = vmul.f32 %v518, %v452
  %v676 = vmul.f32 %v523, %v454
  %v677 = vmul.f32 %v528, %v456
  %v678 = vmul.f32 %v533, %v458
  %v679 = vmul.f32 %v538, %v460
  %v680 = vmul.f32 %v543, %v462
  %v681 = vmul.f32 %v548, %v464
  %v682 = vmul.f32 %v553, %v466
  %v683 = vmul.f32 %v558, %v468
  %v684 = vmul.f32 %v563, %v470
  %v685 = vmul.f32 %v568, %v472
  %v686 = vmul.f32 %v573, %v474
  %v687 = vmul.f32 %v578, %v476
  %v688 = vmul.f32 %v583, %v478
  %v689 = vmul.f32 %v588, %v480
  %v690 = vmul.f32 %v593, %v482
  %v691 = vmul.f32 %v598, %v484
  %v692 = vmul.f32 %v603, %v486
  %v693 = vmul.f32 %v608, %v488
  %v694 = vmul.f32 %v613, %v490
  %v695 = vmul.f32 %v618, %v492
  %v696 = vmul.f32 %v623, %v494
  %v697 = vmul.f32 %v628, %v496
  %v698 = vmul.f32 %v633, %v498
  %v699 = vmul.f32 %v638, %v500
  %v700 = vmul.f32 %v643, %v502
  %v701 = vmul.f32 %v648, %v504
  %v702 = vmul.f32 %v653, %v506
  %v703 = vmul.f32 %v658, %v508
  %v704 = vmul.f32 %v663, %v510
  %v705 = vmul.f32 %v668, %v512
  %v706 = vmul.f32 %v673, %v514
  %v707 = vld [vmem:[%s0] sm:$0x1]
  %v708 = vld [vmem:[%s0 + $0x1] sm:$0x1]
  %v711 = vlaneseq
  %v712 = vshrl.u32 %v711, 7
  %v713 = vsub.s32 0, %v712
  %v714 = vrot.slane %v707, %v713
  %v715 = vlaneseq
  %v716 = vshrl.u32 %v715, 7
  %v717 = vsub.s32 0, %v716
  %v718 = vrot.slane %v708, %v717
  %719 = vset.pattern.permute.xlu0 0
  %720 = vperm.xlu0 %719, %v714
  %v721 = vpop.permute.xlu0 %720
  %723 = vset.pattern.permute.xlu0 0
  %724 = vperm.xlu0 %723, %v718
  %v725 = vpop.permute.xlu0 %724
  %v727 = vmul.f32 %v675, %v721
  %v728 = vmul.f32 %v676, %v721
  %v729 = vmul.f32 %v677, %v721
  %v730 = vmul.f32 %v678, %v721
  %v731 = vmul.f32 %v679, %v721
  %v732 = vmul.f32 %v680, %v721
  %v733 = vmul.f32 %v681, %v721
  %v734 = vmul.f32 %v682, %v721
  %v735 = vmul.f32 %v683, %v721
  %v736 = vmul.f32 %v684, %v721
  %v737 = vmul.f32 %v685, %v721
  %v738 = vmul.f32 %v686, %v721
  %v739 = vmul.f32 %v687, %v721
  %v740 = vmul.f32 %v688, %v721
  %v741 = vmul.f32 %v689, %v721
  %v742 = vmul.f32 %v690, %v721
  %v743 = vmul.f32 %v691, %v725
  %v744 = vmul.f32 %v692, %v725
  %v745 = vmul.f32 %v693, %v725
  %v746 = vmul.f32 %v694, %v725
  %v747 = vmul.f32 %v695, %v725
  %v748 = vmul.f32 %v696, %v725
  %v749 = vmul.f32 %v697, %v725
  %v750 = vmul.f32 %v698, %v725
  %v751 = vmul.f32 %v699, %v725
  %v752 = vmul.f32 %v700, %v725
  %v753 = vmul.f32 %v701, %v725
  %v754 = vmul.f32 %v702, %v725
  %v755 = vmul.f32 %v703, %v725
  %v756 = vmul.f32 %v704, %v725
  %v757 = vmul.f32 %v705, %v725
  %v758 = vmul.f32 %v706, %v725
  %759 = vst [vmem:[%s2] sm:$0xff] %v727
  %760 = vst [vmem:[%s2 + $0x8] sm:$0xff] %v728
  %761 = vst [vmem:[%s2 + $0x10] sm:$0xff] %v729
  %762 = vst [vmem:[%s2 + $0x18] sm:$0xff] %v730
  %763 = vst [vmem:[%s2 + $0x20] sm:$0xff] %v731
  %764 = vst [vmem:[%s2 + $0x28] sm:$0xff] %v732
  %765 = vst [vmem:[%s2 + $0x30] sm:$0xff] %v733
  %766 = vst [vmem:[%s2 + $0x38] sm:$0xff] %v734
  %767 = vst [vmem:[%s2 + $0x40] sm:$0xff] %v735
  %768 = vst [vmem:[%s2 + $0x48] sm:$0xff] %v736
  %769 = vst [vmem:[%s2 + $0x50] sm:$0xff] %v737
  %770 = vst [vmem:[%s2 + $0x58] sm:$0xff] %v738
  %771 = vst [vmem:[%s2 + $0x60] sm:$0xff] %v739
  %772 = vst [vmem:[%s2 + $0x68] sm:$0xff] %v740
  %773 = vst [vmem:[%s2 + $0x70] sm:$0xff] %v741
  %774 = vst [vmem:[%s2 + $0x78] sm:$0xff] %v742
  %775 = vst [vmem:[%s2 + $0x80] sm:$0xff] %v743
  %776 = vst [vmem:[%s2 + $0x88] sm:$0xff] %v744
  %777 = vst [vmem:[%s2 + $0x90] sm:$0xff] %v745
  %778 = vst [vmem:[%s2 + $0x98] sm:$0xff] %v746
  %779 = vst [vmem:[%s2 + $0xa0] sm:$0xff] %v747
  %780 = vst [vmem:[%s2 + $0xa8] sm:$0xff] %v748
  %781 = vst [vmem:[%s2 + $0xb0] sm:$0xff] %v749
  %782 = vst [vmem:[%s2 + $0xb8] sm:$0xff] %v750
  %783 = vst [vmem:[%s2 + $0xc0] sm:$0xff] %v751
  %784 = vst [vmem:[%s2 + $0xc8] sm:$0xff] %v752
  %785 = vst [vmem:[%s2 + $0xd0] sm:$0xff] %v753
  %786 = vst [vmem:[%s2 + $0xd8] sm:$0xff] %v754
  %787 = vst [vmem:[%s2 + $0xe0] sm:$0xff] %v755
  %788 = vst [vmem:[%s2 + $0xe8] sm:$0xff] %v756
  %789 = vst [vmem:[%s2 + $0xf0] sm:$0xff] %v757
  %790 = vst [vmem:[%s2 + $0xf8] sm:$0xff] %v758
  // Predicated region
  $region10: #{anomaly_attention.7} parent=0 // pred_check
    _
  $region11: #{anomaly_attention.7} parent=0 // pred_check_branch
    %792 = sbr.rel (0) target = $region13
  $region12: #{anomaly_attention.7} parent=0 // pred_region
    _
  $region13: #{anomaly_attention.7} parent=0 // pred_fallthru
    _
  // Predicated region
  $region14: #{anomaly_attention.7} parent=0 // pred_check
    _
  $region15: #{anomaly_attention.7} parent=0 // pred_check_branch
    %794 = sbr.rel (0) target = $region17
  $region16: #{anomaly_attention.7} parent=0 // pred_region
    _
  $region17: #{anomaly_attention.7} parent=0 // pred_fallthru
    _

// kernel: anomaly_attention.4
$region0: #{anomaly_attention.4}
  #allocation0 [shape = 'u32[]', space=smem, size = 0x4, offset = 0x4, fixed_abs, tag = 'smem constant byte address 0x4 - core index']
  #allocation1 [shape = 'u32[144,128]{1,0:T(1,128)}', space=vmem, size = 0x12000, scoped, tag = 'internal scratch']
  %s0 = inlined_call_operand.vmem [shape: bf16[256,32], index: 0, kind: input, shape index: {}]
  %s1 = inlined_call_operand.vmem [shape: bf16[32,128], index: 1, kind: input, shape index: {}]
  %s2 = inlined_call_operand.vmem [shape: bf16[256,32], index: 2, kind: output, shape index: {0}]
  %s3 = inlined_call_operand.vmem [shape: bf16[256,32], index: 3, kind: output, shape index: {1}]
  %s4 = inlined_call_operand.vmem [shape: bf16[256,32], index: 4, kind: output, shape index: {2}]
  %s5 = inlined_call_operand.vmem [shape: f32[256,1], index: 5, kind: output, shape index: {3}]
  %6 = xla_tuple %s2, %s3, %s4, %s5
  %s7 = sld [smem:[#allocation0]]
  $region42: #{anomaly_attention.4} parent=0
    _
  %s9 = ssub.s32 1, %s7
  %s10 = scalar_select 0, %s9, %s7
  // Predicated region
  $region2: #{anomaly_attention.4} parent=0 // pred_check
    _
  $region3: #{anomaly_attention.4} parent=0 // pred_check_branch
    %12 = sbr.rel (0) target = $region5
  $region4: #{anomaly_attention.4} parent=0 // pred_region
    _
  $region5: #{anomaly_attention.4} parent=0 // pred_fallthru
    _
  // Predicated region
  $region6: #{anomaly_attention.4} parent=0 // pred_check
    _
  $region7: #{anomaly_attention.4} parent=0 // pred_check_branch
    %14 = sbr.rel (0) target = $region9
  $region8: #{anomaly_attention.4} parent=0 // pred_region
    _
  $region9: #{anomaly_attention.4} parent=0 // pred_fallthru
    _
  %v16 = vld [vmem:[%s0] sm:$0xf]
  %v17 = vld [vmem:[%s0 + $0x4] sm:$0xf]
  %v18 = vld [vmem:[%s0 + $0x8] sm:$0xf]
  %v19 = vld [vmem:[%s0 + $0xc] sm:$0xf]
  %v20 = vld [vmem:[%s0 + $0x10] sm:$0xf]
  %v21 = vld [vmem:[%s0 + $0x14] sm:$0xf]
  %v22 = vld [vmem:[%s0 + $0x18] sm:$0xf]
  %v23 = vld [vmem:[%s0 + $0x1c] sm:$0xf]
  %v24 = vld [vmem:[%s0 + $0x20] sm:$0xf]
  %v25 = vld [vmem:[%s0 + $0x24] sm:$0xf]
  %v26 = vld [vmem:[%s0 + $0x28] sm:$0xf]
  %v27 = vld [vmem:[%s0 + $0x2c] sm:$0xf]
  %v28 = vld [vmem:[%s0 + $0x30] sm:$0xf]
  %v29 = vld [vmem:[%s0 + $0x34] sm:$0xf]
  %v30 = vld [vmem:[%s0 + $0x38] sm:$0xf]
  %v31 = vld [vmem:[%s0 + $0x3c] sm:$0xf]
  %v32 = vld [vmem:[%s0 + $0x40] sm:$0xf]
  %v33 = vld [vmem:[%s0 + $0x44] sm:$0xf]
  %v34 = vld [vmem:[%s0 + $0x48] sm:$0xf]
  %v35 = vld [vmem:[%s0 + $0x4c] sm:$0xf]
  %v36 = vld [vmem:[%s0 + $0x50] sm:$0xf]
  %v37 = vld [vmem:[%s0 + $0x54] sm:$0xf]
  %v38 = vld [vmem:[%s0 + $0x58] sm:$0xf]
  %v39 = vld [vmem:[%s0 + $0x5c] sm:$0xf]
  %v40 = vld [vmem:[%s0 + $0x60] sm:$0xf]
  %v41 = vld [vmem:[%s0 + $0x64] sm:$0xf]
  %v42 = vld [vmem:[%s0 + $0x68] sm:$0xf]
  %v43 = vld [vmem:[%s0 + $0x6c] sm:$0xf]
  %v44 = vld [vmem:[%s0 + $0x70] sm:$0xf]
  %v45 = vld [vmem:[%s0 + $0x74] sm:$0xf]
  %v46 = vld [vmem:[%s0 + $0x78] sm:$0xf]
  %v47 = vld [vmem:[%s0 + $0x7c] sm:$0xf]
  %v48 = vld [vmem:[%s1] sm:$0xf]
  %v49 = vld [vmem:[%s1 + $0x4] sm:$0xf]
  %v50 = vld [vmem:[%s1 + $0x8] sm:$0xf]
  %v51 = vld [vmem:[%s1 + $0xc] sm:$0xf]
  %v84 = vunpack.c.l.b16 %v16
  %v85 = vunpack.c.l.b16 %v17
  %v86 = vunpack.c.l.b16 %v18
  %v87 = vunpack.c.l.b16 %v19
  %v88 = vunpack.c.l.b16 %v20
  %v89 = vunpack.c.l.b16 %v21
  %v90 = vunpack.c.l.b16 %v22
  %v91 = vunpack.c.l.b16 %v23
  %v92 = vunpack.c.l.b16 %v24
  %v93 = vunpack.c.l.b16 %v25
  %v94 = vunpack.c.l.b16 %v26
  %v95 = vunpack.c.l.b16 %v27
  %v96 = vunpack.c.l.b16 %v28
  %v97 = vunpack.c.l.b16 %v29
  %v98 = vunpack.c.l.b16 %v30
  %v99 = vunpack.c.l.b16 %v31
  %v100 = vunpack.c.l.b16 %v32
  %v101 = vunpack.c.l.b16 %v33
  %v102 = vunpack.c.l.b16 %v34
  %v103 = vunpack.c.l.b16 %v35
  %v104 = vunpack.c.l.b16 %v36
  %v105 = vunpack.c.l.b16 %v37
  %v106 = vunpack.c.l.b16 %v38
  %v107 = vunpack.c.l.b16 %v39
  %v108 = vunpack.c.l.b16 %v40
  %v109 = vunpack.c.l.b16 %v41
  %v110 = vunpack.c.l.b16 %v42
  %v111 = vunpack.c.l.b16 %v43
  %v112 = vunpack.c.l.b16 %v44
  %v113 = vunpack.c.l.b16 %v45
  %v114 = vunpack.c.l.b16 %v46
  %v115 = vunpack.c.l.b16 %v47
  %v116 = vpack.c.b16 %v85, %v84
  %v117 = vpack.c.b16 %v87, %v86
  %v118 = vpack.c.b16 %v89, %v88
  %v119 = vpack.c.b16 %v91, %v90
  %v120 = vpack.c.b16 %v93, %v92
  %v121 = vpack.c.b16 %v95, %v94
  %v122 = vpack.c.b16 %v97, %v96
  %v123 = vpack.c.b16 %v99, %v98
  %v124 = vpack.c.b16 %v101, %v100
  %v125 = vpack.c.b16 %v103, %v102
  %v126 = vpack.c.b16 %v105, %v104
  %v127 = vpack.c.b16 %v107, %v106
  %v128 = vpack.c.b16 %v109, %v108
  %v129 = vpack.c.b16 %v111, %v110
  %v130 = vpack.c.b16 %v113, %v112
  %v131 = vpack.c.b16 %v115, %v114
  %v136 = vunpack.c.l.b16 %v48
  %v137 = vunpack.c.l.b16 %v49
  %v138 = vunpack.c.l.b16 %v50
  %v139 = vunpack.c.l.b16 %v51
  %v140 = vpack.c.b16 %v137, %v136
  %v141 = vpack.c.b16 %v139, %v138
  %vm144 = vcmask 261120
  %v146 = vsel %vm144, %v116, 0
  %v149 = vsel %vm144, %v117, 0
  %v152 = vsel %vm144, %v118, 0
  %v155 = vsel %vm144, %v119, 0
  %v158 = vsel %vm144, %v120, 0
  %v161 = vsel %vm144, %v121, 0
  %v164 = vsel %vm144, %v122, 0
  %v167 = vsel %vm144, %v123, 0
  %v170 = vsel %vm144, %v124, 0
  %v173 = vsel %vm144, %v125, 0
  %v176 = vsel %vm144, %v126, 0
  %v179 = vsel %vm144, %v127, 0
  %v182 = vsel %vm144, %v128, 0
  %v185 = vsel %vm144, %v129, 0
  %v188 = vsel %vm144, %v130, 0
  %v191 = vsel %vm144, %v131, 0
  %193 = vmatprep.subr.bf16.mxu0 0
  %194 = vmatpush1.bf16.msra.mxu0 %v140
  %195 = vmatprep.subr.bf16.mxu0 0
  %196 = vmatpush1.bf16.msra.mxu0 %v141
  %197 = vmatprep.subr.bf16.mxu0 0
  %198 = vmatpush1.bf16.msra.mxu0 0
  %199 = vmatprep.subr.bf16.mxu0 0
  %200 = vmatpush1.bf16.msra.mxu0 0
  %201 = vmatprep.subr.bf16.mxu0 0
  %202 = vmatpush1.bf16.msra.mxu0 0
  %203 = vmatprep.subr.bf16.mxu0 0
  %204 = vmatpush1.bf16.msra.mxu0 0
  %205 = vmatprep.subr.bf16.mxu0 0
  %206 = vmatpush1.bf16.msra.mxu0 0
  %207 = vmatprep.subr.bf16.mxu0 0
  %208 = vmatpush1.bf16.msra.mxu0 0
  %209 = vmatprep.subr.bf16.mxu0 0
  %210 = vmatpush1.bf16.msra.mxu0 0
  %211 = vmatprep.subr.bf16.mxu0 0
  %212 = vmatpush1.bf16.msra.mxu0 0
  %213 = vmatprep.subr.bf16.mxu0 0
  %214 = vmatpush1.bf16.msra.mxu0 0
  %215 = vmatprep.subr.bf16.mxu0 0
  %216 = vmatpush1.bf16.msra.mxu0 0
  %217 = vmatprep.subr.bf16.mxu0 0
  %218 = vmatpush1.bf16.msra.mxu0 0
  %219 = vmatprep.subr.bf16.mxu0 0
  %220 = vmatpush1.bf16.msra.mxu0 0
  %221 = vmatprep.subr.bf16.mxu0 0
  %222 = vmatpush1.bf16.msra.mxu0 0
  %223 = vmatprep.subr.bf16.mxu0 0
  %224 = vmatpush1.bf16.msra.mxu0 0
  %225 = vmatprep.mubr.bf16.mxu0 0
  %226 = vmatmul.mubr.bf16.gmra.mrb[0].mxu0 %v146
  %v227 = vpop.f32.mrb[0].mxu0
  %v228 = vadd.f32 0.0, %v227
  %v229 = vpop.f32.mrb[0].mxu0
  %v230 = vpop.f32.mrb[0].mxu0
  %v231 = vadd.f32 0.0, %v230
  %v232 = vpop.f32.mrb[0].mxu0
  %233 = vmatprep.mubr.bf16.mxu0 0
  %234 = vmatmul.mubr.bf16.gmra.mrb[0].mxu0 %v149
  %v235 = vpop.f32.mrb[0].mxu0
  %v236 = vadd.f32 0.0, %v235
  %v237 = vpop.f32.mrb[0].mxu0
  %v238 = vpop.f32.mrb[0].mxu0
  %v239 = vadd.f32 0.0, %v238
  %v240 = vpop.f32.mrb[0].mxu0
  %241 = vmatprep.mubr.bf16.mxu0 0
  %242 = vmatmul.mubr.bf16.gmra.mrb[0].mxu0 %v152
  %v243 = vpop.f32.mrb[0].mxu0
  %v244 = vadd.f32 0.0, %v243
  %v245 = vpop.f32.mrb[0].mxu0
  %v246 = vpop.f32.mrb[0].mxu0
  %v247 = vadd.f32 0.0, %v246
  %v248 = vpop.f32.mrb[0].mxu0
  %249 = vmatprep.mubr.bf16.mxu0 0
  %250 = vmatmul.mubr.bf16.gmra.mrb[0].mxu0 %v155
  %v251 = vpop.f32.mrb[0].mxu0
  %v252 = vadd.f32 0.0, %v251
  %v253 = vpop.f32.mrb[0].mxu0
  %v254 = vpop.f32.mrb[0].mxu0
  %v255 = vadd.f32 0.0, %v254
  %v256 = vpop.f32.mrb[0].mxu0
  %257 = vmatprep.mubr.bf16.mxu0 0
  %258 = vmatmul.mubr.bf16.gmra.mrb[0].mxu0 %v158
  %v259 = vpop.f32.mrb[0].mxu0
  %v260 = vadd.f32 0.0, %v259
  %v261 = vpop.f32.mrb[0].mxu0
  %v262 = vpop.f32.mrb[0].mxu0
  %v263 = vadd.f32 0.0, %v262
  %v264 = vpop.f32.mrb[0].mxu0
  %265 = vmatprep.mubr.bf16.mxu0 0
  %266 = vmatmul.mubr.bf16.gmra.mrb[0].mxu0 %v161
  %v267 = vpop.f32.mrb[0].mxu0
  %v268 = vadd.f32 0.0, %v267
  %v269 = vpop.f32.mrb[0].mxu0
  %v270 = vpop.f32.mrb[0].mxu0
  %v271 = vadd.f32 0.0, %v270
  %v272 = vpop.f32.mrb[0].mxu0
  %273 = vmatprep.mubr.bf16.mxu0 0
  %274 = vmatmul.mubr.bf16.gmra.mrb[0].mxu0 %v164
  %v275 = vpop.f32.mrb[0].mxu0
  %v276 = vadd.f32 0.0, %v275
  %v277 = vpop.f32.mrb[0].mxu0
  %v278 = vpop.f32.mrb[0].mxu0
  %v279 = vadd.f32 0.0, %v278
  %v280 = vpop.f32.mrb[0].mxu0
  %281 = vmatprep.mubr.bf16.mxu0 0
  %282 = vmatmul.mubr.bf16.gmra.mrb[0].mxu0 %v167
  %v283 = vpop.f32.mrb[0].mxu0
  %v284 = vadd.f32 0.0, %v283
  %v285 = vpop.f32.mrb[0].mxu0
  %v286 = vpop.f32.mrb[0].mxu0
  %v287 = vadd.f32 0.0, %v286
  %v288 = vpop.f32.mrb[0].mxu0
  %289 = vmatprep.mubr.bf16.mxu0 0
  %290 = vmatmul.mubr.bf16.gmra.mrb[0].mxu0 %v170
  %v291 = vpop.f32.mrb[0].mxu0
  %v292 = vadd.f32 0.0, %v291
  %v293 = vpop.f32.mrb[0].mxu0
  %v294 = vpop.f32.mrb[0].mxu0
  %v295 = vadd.f32 0.0, %v294
  %v296 = vpop.f32.mrb[0].mxu0
  %297 = vmatprep.mubr.bf16.mxu0 0
  %298 = vmatmul.mubr.bf16.gmra.mrb[0].mxu0 %v173
  %v299 = vpop.f32.mrb[0].mxu0
  %v300 = vadd.f32 0.0, %v299
  %v301 = vpop.f32.mrb[0].mxu0
  %v302 = vpop.f32.mrb[0].mxu0
  %v303 = vadd.f32 0.0, %v302
  %v304 = vpop.f32.mrb[0].mxu0
  %305 = vmatprep.mubr.bf16.mxu0 0
  %306 = vmatmul.mubr.bf16.gmra.mrb[0].mxu0 %v176
  %v307 = vpop.f32.mrb[0].mxu0
  %v308 = vadd.f32 0.0, %v307
  %v309 = vpop.f32.mrb[0].mxu0
  %v310 = vpop.f32.mrb[0].mxu0
  %v311 = vadd.f32 0.0, %v310
  %v312 = vpop.f32.mrb[0].mxu0
  %313 = vmatprep.mubr.bf16.mxu0 0
  %314 = vmatmul.mubr.bf16.gmra.mrb[0].mxu0 %v179
  %v315 = vpop.f32.mrb[0].mxu0
  %v316 = vadd.f32 0.0, %v315
  %v317 = vpop.f32.mrb[0].mxu0
  %v318 = vpop.f32.mrb[0].mxu0
  %v319 = vadd.f32 0.0, %v318
  %v320 = vpop.f32.mrb[0].mxu0
  %321 = vmatprep.mubr.bf16.mxu0 0
  %322 = vmatmul.mubr.bf16.gmra.mrb[0].mxu0 %v182
  %v323 = vpop.f32.mrb[0].mxu0
  %v324 = vadd.f32 0.0, %v323
  %v325 = vpop.f32.mrb[0].mxu0
  %v326 = vpop.f32.mrb[0].mxu0
  %v327 = vadd.f32 0.0, %v326
  %v328 = vpop.f32.mrb[0].mxu0
  %329 = vmatprep.mubr.bf16.mxu0 0
  %330 = vmatmul.mubr.bf16.gmra.mrb[0].mxu0 %v185
  %v331 = vpop.f32.mrb[0].mxu0
  %v332 = vadd.f32 0.0, %v331
  %v333 = vpop.f32.mrb[0].mxu0
  %v334 = vpop.f32.mrb[0].mxu0
  %v335 = vadd.f32 0.0, %v334
  %v336 = vpop.f32.mrb[0].mxu0
  %337 = vmatprep.mubr.bf16.mxu0 0
  %338 = vmatmul.mubr.bf16.gmra.mrb[0].mxu0 %v188
  %v339 = vpop.f32.mrb[0].mxu0
  %v340 = vadd.f32 0.0, %v339
  %v341 = vpop.f32.mrb[0].mxu0
  %v342 = vpop.f32.mrb[0].mxu0
  %v343 = vadd.f32 0.0, %v342
  %v344 = vpop.f32.mrb[0].mxu0
  %345 = vmatprep.mubr.bf16.mxu0 0
  %346 = vmatmul.mubr.bf16.gmra.mrb[0].mxu0 %v191
  %v347 = vpop.f32.mrb[0].mxu0
  %v348 = vadd.f32 0.0, %v347
  %v349 = vpop.f32.mrb[0].mxu0
  %v350 = vpop.f32.mrb[0].mxu0
  %v351 = vadd.f32 0.0, %v350
  %v352 = vpop.f32.mrb[0].mxu0
  %353 = vdwg.mxu0
  %v354 = vpack.c.bf16 %v231, %v228
  %v355 = vpack.c.bf16 %v239, %v236
  %v356 = vpack.c.bf16 %v247, %v244
  %v357 = vpack.c.bf16 %v255, %v252
  %v358 = vpack.c.bf16 %v263, %v260
  %v359 = vpack.c.bf16 %v271, %v268
  %v360 = vpack.c.bf16 %v279, %v276
  %v361 = vpack.c.bf16 %v287, %v284
  %v362 = vpack.c.bf16 %v295, %v292
  %v363 = vpack.c.bf16 %v303, %v300
  %v364 = vpack.c.bf16 %v311, %v308
  %v365 = vpack.c.bf16 %v319, %v316
  %v366 = vpack.c.bf16 %v327, %v324
  %v367 = vpack.c.bf16 %v335, %v332
  %v368 = vpack.c.bf16 %v343, %v340
  %v369 = vpack.c.bf16 %v351, %v348
  %v386 = vunpack.c.l.b16 %v354
  %v387 = vunpack.c.h.b16 %v354
  %v388 = vunpack.c.l.b16 %v355
  %v389 = vunpack.c.h.b16 %v355
  %v390 = vunpack.c.l.b16 %v356
  %v391 = vunpack.c.h.b16 %v356
  %v392 = vunpack.c.l.b16 %v357
  %v393 = vunpack.c.h.b16 %v357
  %v394 = vunpack.c.l.b16 %v358
  %v395 = vunpack.c.h.b16 %v358
  %v396 = vunpack.c.l.b16 %v359
  %v397 = vunpack.c.h.b16 %v359
  %v398 = vunpack.c.l.b16 %v360
  %v399 = vunpack.c.h.b16 %v360
  %v400 = vunpack.c.l.b16 %v361
  %v401 = vunpack.c.h.b16 %v361
  %v402 = vunpack.c.l.b16 %v362
  %v403 = vunpack.c.h.b16 %v362
  %v404 = vunpack.c.l.b16 %v363
  %v405 = vunpack.c.h.b16 %v363
  %v406 = vunpack.c.l.b16 %v364
  %v407 = vunpack.c.h.b16 %v364
  %v408 = vunpack.c.l.b16 %v365
  %v409 = vunpack.c.h.b16 %v365
  %v410 = vunpack.c.l.b16 %v366
  %v411 = vunpack.c.h.b16 %v366
  %v412 = vunpack.c.l.b16 %v367
  %v413 = vunpack.c.h.b16 %v367
  %v414 = vunpack.c.l.b16 %v368
  %v415 = vunpack.c.h.b16 %v368
  %v416 = vunpack.c.l.b16 %v369
  %v417 = vunpack.c.h.b16 %v369
  %v418 = vpack.c.b16 %v386, %v386
  %v419 = vpack.c.b16 %v387, %v387
  %v420 = vpack.c.b16 %v388, %v388
  %v421 = vpack.c.b16 %v389, %v389
  %v422 = vpack.c.b16 %v390, %v390
  %v423 = vpack.c.b16 %v391, %v391
  %v424 = vpack.c.b16 %v392, %v392
  %v425 = vpack.c.b16 %v393, %v393
  %v426 = vpack.c.b16 %v394, %v394
  %v427 = vpack.c.b16 %v395, %v395
  %v428 = vpack.c.b16 %v396, %v396
  %v429 = vpack.c.b16 %v397, %v397
  %v430 = vpack.c.b16 %v398, %v398
  %v431 = vpack.c.b16 %v399, %v399
  %v432 = vpack.c.b16 %v400, %v400
  %v433 = vpack.c.b16 %v401, %v401
  %v434 = vpack.c.b16 %v402, %v402
  %v435 = vpack.c.b16 %v403, %v403
  %v436 = vpack.c.b16 %v404, %v404
  %v437 = vpack.c.b16 %v405, %v405
  %v438 = vpack.c.b16 %v406, %v406
  %v439 = vpack.c.b16 %v407, %v407
  %v440 = vpack.c.b16 %v408, %v408
  %v441 = vpack.c.b16 %v409, %v409
  %v442 = vpack.c.b16 %v410, %v410
  %v443 = vpack.c.b16 %v411, %v411
  %v444 = vpack.c.b16 %v412, %v412
  %v445 = vpack.c.b16 %v413, %v413
  %v446 = vpack.c.b16 %v414, %v414
  %v447 = vpack.c.b16 %v415, %v415
  %v448 = vpack.c.b16 %v416, %v416
  %v449 = vpack.c.b16 %v417, %v417
  %vm482 = vcmask 257024
  %483 = vst.msk [vmem:[%s2] sm:$0xf] %vm482, %v418
  %484 = vst.msk [vmem:[%s2 + $0x4] sm:$0xf] %vm482, %v419
  %485 = vst.msk [vmem:[%s2 + $0x8] sm:$0xf] %vm482, %v420
  %486 = vst.msk [vmem:[%s2 + $0xc] sm:$0xf] %vm482, %v421
  %487 = vst.msk [vmem:[%s2 + $0x10] sm:$0xf] %vm482, %v422
  %488 = vst.msk [vmem:[%s2 + $0x14] sm:$0xf] %vm482, %v423
  %489 = vst.msk [vmem:[%s2 + $0x18] sm:$0xf] %vm482, %v424
  %490 = vst.msk [vmem:[%s2 + $0x1c] sm:$0xf] %vm482, %v425
  %491 = vst.msk [vmem:[%s2 + $0x20] sm:$0xf] %vm482, %v426
  %492 = vst.msk [vmem:[%s2 + $0x24] sm:$0xf] %vm482, %v427
  %493 = vst.msk [vmem:[%s2 + $0x28] sm:$0xf] %vm482, %v428
  %494 = vst.msk [vmem:[%s2 + $0x2c] sm:$0xf] %vm482, %v429
  %495 = vst.msk [vmem:[%s2 + $0x30] sm:$0xf] %vm482, %v430
  %496 = vst.msk [vmem:[%s2 + $0x34] sm:$0xf] %vm482, %v431
  %497 = vst.msk [vmem:[%s2 + $0x38] sm:$0xf] %vm482, %v432
  %498 = vst.msk [vmem:[%s2 + $0x3c] sm:$0xf] %vm482, %v433
  %499 = vst.msk [vmem:[%s2 + $0x40] sm:$0xf] %vm482, %v434
  %500 = vst.msk [vmem:[%s2 + $0x44] sm:$0xf] %vm482, %v435
  %501 = vst.msk [vmem:[%s2 + $0x48] sm:$0xf] %vm482, %v436
  %502 = vst.msk [vmem:[%s2 + $0x4c] sm:$0xf] %vm482, %v437
  %503 = vst.msk [vmem:[%s2 + $0x50] sm:$0xf] %vm482, %v438
  %504 = vst.msk [vmem:[%s2 + $0x54] sm:$0xf] %vm482, %v439
  %505 = vst.msk [vmem:[%s2 + $0x58] sm:$0xf] %vm482, %v440
  %506 = vst.msk [vmem:[%s2 + $0x5c] sm:$0xf] %vm482, %v441
  %507 = vst.msk [vmem:[%s2 + $0x60] sm:$0xf] %vm482, %v442
  %508 = vst.msk [vmem:[%s2 + $0x64] sm:$0xf] %vm482, %v443
  %509 = vst.msk [vmem:[%s2 + $0x68] sm:$0xf] %vm482, %v444
  %510 = vst.msk [vmem:[%s2 + $0x6c] sm:$0xf] %vm482, %v445
  %511 = vst.msk [vmem:[%s2 + $0x70] sm:$0xf] %vm482, %v446
  %512 = vst.msk [vmem:[%s2 + $0x74] sm:$0xf] %vm482, %v447
  %513 = vst.msk [vmem:[%s2 + $0x78] sm:$0xf] %vm482, %v448
  %514 = vst.msk [vmem:[%s2 + $0x7c] sm:$0xf] %vm482, %v449
  %515 = vrot.lane.b32.xlu0 %v418, 96
  %v516 = vpop.permute.xlu0 %515
  %517 = vrot.lane.b32.xlu0 %v419, 96
  %v518 = vpop.permute.xlu0 %517
  %519 = vrot.lane.b32.xlu0 %v420, 96
  %v520 = vpop.permute.xlu0 %519
  %521 = vrot.lane.b32.xlu0 %v421, 96
  %v522 = vpop.permute.xlu0 %521
  %523 = vrot.lane.b32.xlu0 %v422, 96
  %v524 = vpop.permute.xlu0 %523
  %525 = vrot.lane.b32.xlu0 %v423, 96
  %v526 = vpop.permute.xlu0 %525
  %527 = vrot.lane.b32.xlu0 %v424, 96
  %v528 = vpop.permute.xlu0 %527
  %529 = vrot.lane.b32.xlu0 %v425, 96
  %v530 = vpop.permute.xlu0 %529
  %531 = vrot.lane.b32.xlu0 %v426, 96
  %v532 = vpop.permute.xlu0 %531
  %533 = vrot.lane.b32.xlu0 %v427, 96
  %v534 = vpop.permute.xlu0 %533
  %535 = vrot.lane.b32.xlu0 %v428, 96
  %v536 = vpop.permute.xlu0 %535
  %537 = vrot.lane.b32.xlu0 %v429, 96
  %v538 = vpop.permute.xlu0 %537
  %539 = vrot.lane.b32.xlu0 %v430, 96
  %v540 = vpop.permute.xlu0 %539
  %541 = vrot.lane.b32.xlu0 %v431, 96
  %v542 = vpop.permute.xlu0 %541
  %543 = vrot.lane.b32.xlu0 %v432, 96
  %v544 = vpop.permute.xlu0 %543
  %545 = vrot.lane.b32.xlu0 %v433, 96
  %v546 = vpop.permute.xlu0 %545
  %547 = vrot.lane.b32.xlu0 %v434, 96
  %v548 = vpop.permute.xlu0 %547
  %549 = vrot.lane.b32.xlu0 %v435, 96
  %v550 = vpop.permute.xlu0 %549
  %551 = vrot.lane.b32.xlu0 %v436, 96
  %v552 = vpop.permute.xlu0 %551
  %553 = vrot.lane.b32.xlu0 %v437, 96
  %v554 = vpop.permute.xlu0 %553
  %555 = vrot.lane.b32.xlu0 %v438, 96
  %v556 = vpop.permute.xlu0 %555
  %557 = vrot.lane.b32.xlu0 %v439, 96
  %v558 = vpop.permute.xlu0 %557
  %559 = vrot.lane.b32.xlu0 %v440, 96
  %v560 = vpop.permute.xlu0 %559
  %561 = vrot.lane.b32.xlu0 %v441, 96
  %v562 = vpop.permute.xlu0 %561
  %563 = vrot.lane.b32.xlu0 %v442, 96
  %v564 = vpop.permute.xlu0 %563
  %565 = vrot.lane.b32.xlu0 %v443, 96
  %v566 = vpop.permute.xlu0 %565
  %567 = vrot.lane.b32.xlu0 %v444, 96
  %v568 = vpop.permute.xlu0 %567
  %569 = vrot.lane.b32.xlu0 %v445, 96
  %v570 = vpop.permute.xlu0 %569
  %571 = vrot.lane.b32.xlu0 %v446, 96
  %v572 = vpop.permute.xlu0 %571
  %573 = vrot.lane.b32.xlu0 %v447, 96
  %v574 = vpop.permute.xlu0 %573
  %575 = vrot.lane.b32.xlu0 %v448, 96
  %v576 = vpop.permute.xlu0 %575
  %577 = vrot.lane.b32.xlu0 %v449, 96
  %v578 = vpop.permute.xlu0 %577
  %611 = vst.msk [vmem:[%s3] sm:$0xf] %vm482, %v516
  %612 = vst.msk [vmem:[%s3 + $0x4] sm:$0xf] %vm482, %v518
  %613 = vst.msk [vmem:[%s3 + $0x8] sm:$0xf] %vm482, %v520
  %614 = vst.msk [vmem:[%s3 + $0xc] sm:$0xf] %vm482, %v522
  %615 = vst.msk [vmem:[%s3 + $0x10] sm:$0xf] %vm482, %v524
  %616 = vst.msk [vmem:[%s3 + $0x14] sm:$0xf] %vm482, %v526
  %617 = vst.msk [vmem:[%s3 + $0x18] sm:$0xf] %vm482, %v528
  %618 = vst.msk [vmem:[%s3 + $0x1c] sm:$0xf] %vm482, %v530
  %619 = vst.msk [vmem:[%s3 + $0x20] sm:$0xf] %vm482, %v532
  %620 = vst.msk [vmem:[%s3 + $0x24] sm:$0xf] %vm482, %v534
  %621 = vst.msk [vmem:[%s3 + $0x28] sm:$0xf] %vm482, %v536
  %622 = vst.msk [vmem:[%s3 + $0x2c] sm:$0xf] %vm482, %v538
  %623 = vst.msk [vmem:[%s3 + $0x30] sm:$0xf] %vm482, %v540
  %624 = vst.msk [vmem:[%s3 + $0x34] sm:$0xf] %vm482, %v542
  %625 = vst.msk [vmem:[%s3 + $0x38] sm:$0xf] %vm482, %v544
  %626 = vst.msk [vmem:[%s3 + $0x3c] sm:$0xf] %vm482, %v546
  %627 = vst.msk [vmem:[%s3 + $0x40] sm:$0xf] %vm482, %v548
  %628 = vst.msk [vmem:[%s3 + $0x44] sm:$0xf] %vm482, %v550
  %629 = vst.msk [vmem:[%s3 + $0x48] sm:$0xf] %vm482, %v552
  %630 = vst.msk [vmem:[%s3 + $0x4c] sm:$0xf] %vm482, %v554
  %631 = vst.msk [vmem:[%s3 + $0x50] sm:$0xf] %vm482, %v556
  %632 = vst.msk [vmem:[%s3 + $0x54] sm:$0xf] %vm482, %v558
  %633 = vst.msk [vmem:[%s3 + $0x58] sm:$0xf] %vm482, %v560
  %634 = vst.msk [vmem:[%s3 + $0x5c] sm:$0xf] %vm482, %v562
  %635 = vst.msk [vmem:[%s3 + $0x60] sm:$0xf] %vm482, %v564
  %636 = vst.msk [vmem:[%s3 + $0x64] sm:$0xf] %vm482, %v566
  %637 = vst.msk [vmem:[%s3 + $0x68] sm:$0xf] %vm482, %v568
  %638 = vst.msk [vmem:[%s3 + $0x6c] sm:$0xf] %vm482, %v570
  %639 = vst.msk [vmem:[%s3 + $0x70] sm:$0xf] %vm482, %v572
  %640 = vst.msk [vmem:[%s3 + $0x74] sm:$0xf] %vm482, %v574
  %641 = vst.msk [vmem:[%s3 + $0x78] sm:$0xf] %vm482, %v576
  %642 = vst.msk [vmem:[%s3 + $0x7c] sm:$0xf] %vm482, %v578
  %643 = vrot.lane.b32.xlu0 %v418, 64
  %v644 = vpop.permute.xlu0 %643
  %645 = vrot.lane.b32.xlu0 %v419, 64
  %v646 = vpop.permute.xlu0 %645
  %647 = vrot.lane.b32.xlu0 %v420, 64
  %v648 = vpop.permute.xlu0 %647
  %649 = vrot.lane.b32.xlu0 %v421, 64
  %v650 = vpop.permute.xlu0 %649
  %651 = vrot.lane.b32.xlu0 %v422, 64
  %v652 = vpop.permute.xlu0 %651
  %653 = vrot.lane.b32.xlu0 %v423, 64
  %v654 = vpop.permute.xlu0 %653
  %655 = vrot.lane.b32.xlu0 %v424, 64
  %v656 = vpop.permute.xlu0 %655
  %657 = vrot.lane.b32.xlu0 %v425, 64
  %v658 = vpop.permute.xlu0 %657
  %659 = vrot.lane.b32.xlu0 %v426, 64
  %v660 = vpop.permute.xlu0 %659
  %661 = vrot.lane.b32.xlu0 %v427, 64
  %v662 = vpop.permute.xlu0 %661
  %663 = vrot.lane.b32.xlu0 %v428, 64
  %v664 = vpop.permute.xlu0 %663
  %665 = vrot.lane.b32.xlu0 %v429, 64
  %v666 = vpop.permute.xlu0 %665
  %667 = vrot.lane.b32.xlu0 %v430, 64
  %v668 = vpop.permute.xlu0 %667
  %669 = vrot.lane.b32.xlu0 %v431, 64
  %v670 = vpop.permute.xlu0 %669
  %671 = vrot.lane.b32.xlu0 %v432, 64
  %v672 = vpop.permute.xlu0 %671
  %673 = vrot.lane.b32.xlu0 %v433, 64
  %v674 = vpop.permute.xlu0 %673
  %675 = vrot.lane.b32.xlu0 %v434, 64
  %v676 = vpop.permute.xlu0 %675
  %677 = vrot.lane.b32.xlu0 %v435, 64
  %v678 = vpop.permute.xlu0 %677
  %679 = vrot.lane.b32.xlu0 %v436, 64
  %v680 = vpop.permute.xlu0 %679
  %681 = vrot.lane.b32.xlu0 %v437, 64
  %v682 = vpop.permute.xlu0 %681
  %683 = vrot.lane.b32.xlu0 %v438, 64
  %v684 = vpop.permute.xlu0 %683
  %685 = vrot.lane.b32.xlu0 %v439, 64
  %v686 = vpop.permute.xlu0 %685
  %687 = vrot.lane.b32.xlu0 %v440, 64
  %v688 = vpop.permute.xlu0 %687
  %689 = vrot.lane.b32.xlu0 %v441, 64
  %v690 = vpop.permute.xlu0 %689
  %691 = vrot.lane.b32.xlu0 %v442, 64
  %v692 = vpop.permute.xlu0 %691
  %693 = vrot.lane.b32.xlu0 %v443, 64
  %v694 = vpop.permute.xlu0 %693
  %695 = vrot.lane.b32.xlu0 %v444, 64
  %v696 = vpop.permute.xlu0 %695
  %697 = vrot.lane.b32.xlu0 %v445, 64
  %v698 = vpop.permute.xlu0 %697
  %699 = vrot.lane.b32.xlu0 %v446, 64
  %v700 = vpop.permute.xlu0 %699
  %701 = vrot.lane.b32.xlu0 %v447, 64
  %v702 = vpop.permute.xlu0 %701
  %703 = vrot.lane.b32.xlu0 %v448, 64
  %v704 = vpop.permute.xlu0 %703
  %705 = vrot.lane.b32.xlu0 %v449, 64
  %v706 = vpop.permute.xlu0 %705
  %739 = vst.msk [vmem:[%s4] sm:$0xf] %vm482, %v644
  %740 = vst.msk [vmem:[%s4 + $0x4] sm:$0xf] %vm482, %v646
  %741 = vst.msk [vmem:[%s4 + $0x8] sm:$0xf] %vm482, %v648
  %742 = vst.msk [vmem:[%s4 + $0xc] sm:$0xf] %vm482, %v650
  %743 = vst.msk [vmem:[%s4 + $0x10] sm:$0xf] %vm482, %v652
  %744 = vst.msk [vmem:[%s4 + $0x14] sm:$0xf] %vm482, %v654
  %745 = vst.msk [vmem:[%s4 + $0x18] sm:$0xf] %vm482, %v656
  %746 = vst.msk [vmem:[%s4 + $0x1c] sm:$0xf] %vm482, %v658
  %747 = vst.msk [vmem:[%s4 + $0x20] sm:$0xf] %vm482, %v660
  %748 = vst.msk [vmem:[%s4 + $0x24] sm:$0xf] %vm482, %v662
  %749 = vst.msk [vmem:[%s4 + $0x28] sm:$0xf] %vm482, %v664
  %750 = vst.msk [vmem:[%s4 + $0x2c] sm:$0xf] %vm482, %v666
  %751 = vst.msk [vmem:[%s4 + $0x30] sm:$0xf] %vm482, %v668
  %752 = vst.msk [vmem:[%s4 + $0x34] sm:$0xf] %vm482, %v670
  %753 = vst.msk [vmem:[%s4 + $0x38] sm:$0xf] %vm482, %v672
  %754 = vst.msk [vmem:[%s4 + $0x3c] sm:$0xf] %vm482, %v674
  %755 = vst.msk [vmem:[%s4 + $0x40] sm:$0xf] %vm482, %v676
  %756 = vst.msk [vmem:[%s4 + $0x44] sm:$0xf] %vm482, %v678
  %757 = vst.msk [vmem:[%s4 + $0x48] sm:$0xf] %vm482, %v680
  %758 = vst.msk [vmem:[%s4 + $0x4c] sm:$0xf] %vm482, %v682
  %759 = vst.msk [vmem:[%s4 + $0x50] sm:$0xf] %vm482, %v684
  %760 = vst.msk [vmem:[%s4 + $0x54] sm:$0xf] %vm482, %v686
  %761 = vst.msk [vmem:[%s4 + $0x58] sm:$0xf] %vm482, %v688
  %762 = vst.msk [vmem:[%s4 + $0x5c] sm:$0xf] %vm482, %v690
  %763 = vst.msk [vmem:[%s4 + $0x60] sm:$0xf] %vm482, %v692
  %764 = vst.msk [vmem:[%s4 + $0x64] sm:$0xf] %vm482, %v694
  %765 = vst.msk [vmem:[%s4 + $0x68] sm:$0xf] %vm482, %v696
  %766 = vst.msk [vmem:[%s4 + $0x6c] sm:$0xf] %vm482, %v698
  %767 = vst.msk [vmem:[%s4 + $0x70] sm:$0xf] %vm482, %v700
  %768 = vst.msk [vmem:[%s4 + $0x74] sm:$0xf] %vm482, %v702
  %769 = vst.msk [vmem:[%s4 + $0x78] sm:$0xf] %vm482, %v704
  %770 = vst.msk [vmem:[%s4 + $0x7c] sm:$0xf] %vm482, %v706
  %v771 = vmul.f32 %v228, 5.0
  %v772 = vmul.f32 %v231, 5.0
  %v773 = vmul.f32 %v236, 5.0
  %v774 = vmul.f32 %v239, 5.0
  %v775 = vmul.f32 %v244, 5.0
  %v776 = vmul.f32 %v247, 5.0
  %v777 = vmul.f32 %v252, 5.0
  %v778 = vmul.f32 %v255, 5.0
  %v779 = vmul.f32 %v260, 5.0
  %v780 = vmul.f32 %v263, 5.0
  %v781 = vmul.f32 %v268, 5.0
  %v782 = vmul.f32 %v271, 5.0
  %v783 = vmul.f32 %v276, 5.0
  %v784 = vmul.f32 %v279, 5.0
  %v785 = vmul.f32 %v284, 5.0
  %v786 = vmul.f32 %v287, 5.0
  %v787 = vmul.f32 %v292, 5.0
  %v788 = vmul.f32 %v295, 5.0
  %v789 = vmul.f32 %v300, 5.0
  %v790 = vmul.f32 %v303, 5.0
  %v791 = vmul.f32 %v308, 5.0
  %v792 = vmul.f32 %v311, 5.0
  %v793 = vmul.f32 %v316, 5.0
  %v794 = vmul.f32 %v319, 5.0
  %v795 = vmul.f32 %v324, 5.0
  %v796 = vmul.f32 %v327, 5.0
  %v797 = vmul.f32 %v332, 5.0
  %v798 = vmul.f32 %v335, 5.0
  %v799 = vmul.f32 %v340, 5.0
  %v800 = vmul.f32 %v343, 5.0
  %v801 = vmul.f32 %v348, 5.0
  %v802 = vmul.f32 %v351, 5.0
  %v803 = vxor.u32 %v771, 2147483648
  %v804 = vxor.u32 %v772, 2147483648
  %v805 = vxor.u32 %v773, 2147483648
  %v806 = vxor.u32 %v774, 2147483648
  %v807 = vxor.u32 %v775, 2147483648
  %v808 = vxor.u32 %v776, 2147483648
  %v809 = vxor.u32 %v777, 2147483648
  %v810 = vxor.u32 %v778, 2147483648
  %v811 = vxor.u32 %v779, 2147483648
  %v812 = vxor.u32 %v780, 2147483648
  %v813 = vxor.u32 %v781, 2147483648
  %v814 = vxor.u32 %v782, 2147483648
  %v815 = vxor.u32 %v783, 2147483648
  %v816 = vxor.u32 %v784, 2147483648
  %v817 = vxor.u32 %v785, 2147483648
  %v818 = vxor.u32 %v786, 2147483648
  %v819 = vxor.u32 %v787, 2147483648
  %v820 = vxor.u32 %v788, 2147483648
  %v821 = vxor.u32 %v789, 2147483648
  %v822 = vxor.u32 %v790, 2147483648
  %v823 = vxor.u32 %v791, 2147483648
  %v824 = vxor.u32 %v792, 2147483648
  %v825 = vxor.u32 %v793, 2147483648
  %v826 = vxor.u32 %v794, 2147483648
  %v827 = vxor.u32 %v795, 2147483648
  %v828 = vxor.u32 %v796, 2147483648
  %v829 = vxor.u32 %v797, 2147483648
  %v830 = vxor.u32 %v798, 2147483648
  %v831 = vxor.u32 %v799, 2147483648
  %v832 = vxor.u32 %v800, 2147483648
  %v833 = vxor.u32 %v801, 2147483648
  %v834 = vxor.u32 %v802, 2147483648
  %v835 = vmul.f32 %v803, 1.442695
  %v836 = vpow.pop %v835
  %v837 = vmul.f32 %v804, 1.442695
  %v838 = vpow.pop %v837
  %v839 = vmul.f32 %v805, 1.442695
  %v840 = vpow.pop %v839
  %v841 = vmul.f32 %v806, 1.442695
  %v842 = vpow.pop %v841
  %v843 = vmul.f32 %v807, 1.442695
  %v844 = vpow.pop %v843
  %v845 = vmul.f32 %v808, 1.442695
  %v846 = vpow.pop %v845
  %v847 = vmul.f32 %v809, 1.442695
  %v848 = vpow.pop %v847
  %v849 = vmul.f32 %v810, 1.442695
  %v850 = vpow.pop %v849
  %v851 = vmul.f32 %v811, 1.442695
  %v852 = vpow.pop %v851
  %v853 = vmul.f32 %v812, 1.442695
  %v854 = vpow.pop %v853
  %v855 = vmul.f32 %v813, 1.442695
  %v856 = vpow.pop %v855
  %v857 = vmul.f32 %v814, 1.442695
  %v858 = vpow.pop %v857
  %v859 = vmul.f32 %v815, 1.442695
  %v860 = vpow.pop %v859
  %v861 = vmul.f32 %v816, 1.442695
  %v862 = vpow.pop %v861
  %v863 = vmul.f32 %v817, 1.442695
  %v864 = vpow.pop %v863
  %v865 = vmul.f32 %v818, 1.442695
  %v866 = vpow.pop %v865
  %v867 = vmul.f32 %v819, 1.442695
  %v868 = vpow.pop %v867
  %v869 = vmul.f32 %v820, 1.442695
  %v870 = vpow.pop %v869
  %v871 = vmul.f32 %v821, 1.442695
  %v872 = vpow.pop %v871
  %v873 = vmul.f32 %v822, 1.442695
  %v874 = vpow.pop %v873
  %v875 = vmul.f32 %v823, 1.442695
  %v876 = vpow.pop %v875
  %v877 = vmul.f32 %v824, 1.442695
  %v878 = vpow.pop %v877
  %v879 = vmul.f32 %v825, 1.442695
  %v880 = vpow.pop %v879
  %v881 = vmul.f32 %v826, 1.442695
  %v882 = vpow.pop %v881
  %v883 = vmul.f32 %v827, 1.442695
  %v884 = vpow.pop %v883
  %v885 = vmul.f32 %v828, 1.442695
  %v886 = vpow.pop %v885
  %v887 = vmul.f32 %v829, 1.442695
  %v888 = vpow.pop %v887
  %v889 = vmul.f32 %v830, 1.442695
  %v890 = vpow.pop %v889
  %v891 = vmul.f32 %v831, 1.442695
  %v892 = vpow.pop %v891
  %v893 = vmul.f32 %v832, 1.442695
  %v894 = vpow.pop %v893
  %v895 = vmul.f32 %v833, 1.442695
  %v896 = vpow.pop %v895
  %v897 = vmul.f32 %v834, 1.442695
  %v898 = vpow.pop %v897
  %v899 = vadd.f32 %v836, 1.0
  %v900 = vadd.f32 %v838, 1.0
  %v901 = vadd.f32 %v840, 1.0
  %v902 = vadd.f32 %v842, 1.0
  %v903 = vadd.f32 %v844, 1.0
  %v904 = vadd.f32 %v846, 1.0
  %v905 = vadd.f32 %v848, 1.0
  %v906 = vadd.f32 %v850, 1.0
  %v907 = vadd.f32 %v852, 1.0
  %v908 = vadd.f32 %v854, 1.0
  %v909 = vadd.f32 %v856, 1.0
  %v910 = vadd.f32 %v858, 1.0
  %v911 = vadd.f32 %v860, 1.0
  %v912 = vadd.f32 %v862, 1.0
  %v913 = vadd.f32 %v864, 1.0
  %v914 = vadd.f32 %v866, 1.0
  %v915 = vadd.f32 %v868, 1.0
  %v916 = vadd.f32 %v870, 1.0
  %v917 = vadd.f32 %v872, 1.0
  %v918 = vadd.f32 %v874, 1.0
  %v919 = vadd.f32 %v876, 1.0
  %v920 = vadd.f32 %v878, 1.0
  %v921 = vadd.f32 %v880, 1.0
  %v922 = vadd.f32 %v882, 1.0
  %v923 = vadd.f32 %v884, 1.0
  %v924 = vadd.f32 %v886, 1.0
  %v925 = vadd.f32 %v888, 1.0
  %v926 = vadd.f32 %v890, 1.0
  %v927 = vadd.f32 %v892, 1.0
  %v928 = vadd.f32 %v894, 1.0
  %v929 = vadd.f32 %v896, 1.0
  %v930 = vadd.f32 %v898, 1.0
  %v931 = vrcp.pop %v899
  %v932 = vmul.f32 1.0, %v931
  %v933 = vrcp.pop %v900
  %v934 = vmul.f32 1.0, %v933
  %v935 = vrcp.pop %v901
  %v936 = vmul.f32 1.0, %v935
  %v937 = vrcp.pop %v902
  %v938 = vmul.f32 1.0, %v937
  %v939 = vrcp.pop %v903
  %v940 = vmul.f32 1.0, %v939
  %v941 = vrcp.pop %v904
  %v942 = vmul.f32 1.0, %v941
  %v943 = vrcp.pop %v905
  %v944 = vmul.f32 1.0, %v943
  %v945 = vrcp.pop %v906
  %v946 = vmul.f32 1.0, %v945
  %v947 = vrcp.pop %v907
  %v948 = vmul.f32 1.0, %v947
  %v949 = vrcp.pop %v908
  %v950 = vmul.f32 1.0, %v949
  %v951 = vrcp.pop %v909
  %v952 = vmul.f32 1.0, %v951
  %v953 = vrcp.pop %v910
  %v954 = vmul.f32 1.0, %v953
  %v955 = vrcp.pop %v911
  %v956 = vmul.f32 1.0, %v955
  %v957 = vrcp.pop %v912
  %v958 = vmul.f32 1.0, %v957
  %v959 = vrcp.pop %v913
  %v960 = vmul.f32 1.0, %v959
  %v961 = vrcp.pop %v914
  %v962 = vmul.f32 1.0, %v961
  %v963 = vrcp.pop %v915
  %v964 = vmul.f32 1.0, %v963
  %v965 = vrcp.pop %v916
  %v966 = vmul.f32 1.0, %v965
  %v967 = vrcp.pop %v917
  %v968 = vmul.f32 1.0, %v967
  %v969 = vrcp.pop %v918
  %v970 = vmul.f32 1.0, %v969
  %v971 = vrcp.pop %v919
  %v972 = vmul.f32 1.0, %v971
  %v973 = vrcp.pop %v920
  %v974 = vmul.f32 1.0, %v973
  %v975 = vrcp.pop %v921
  %v976 = vmul.f32 1.0, %v975
  %v977 = vrcp.pop %v922
  %v978 = vmul.f32 1.0, %v977
  %v979 = vrcp.pop %v923
  %v980 = vmul.f32 1.0, %v979
  %v981 = vrcp.pop %v924
  %v982 = vmul.f32 1.0, %v981
  %v983 = vrcp.pop %v925
  %v984 = vmul.f32 1.0, %v983
  %v985 = vrcp.pop %v926
  %v986 = vmul.f32 1.0, %v985
  %v987 = vrcp.pop %v927
  %v988 = vmul.f32 1.0, %v987
  %v989 = vrcp.pop %v928
  %v990 = vmul.f32 1.0, %v989
  %v991 = vrcp.pop %v929
  %v992 = vmul.f32 1.0, %v991
  %v993 = vrcp.pop %v930
  %v994 = vmul.f32 1.0, %v993
  %v995 = vadd.f32 %v932, 1e-05
  %v996 = vadd.f32 %v934, 1e-05
  %v997 = vadd.f32 %v936, 1e-05
  %v998 = vadd.f32 %v938, 1e-05
  %v999 = vadd.f32 %v940, 1e-05
  %v1000 = vadd.f32 %v942, 1e-05
  %v1001 = vadd.f32 %v944, 1e-05
  %v1002 = vadd.f32 %v946, 1e-05
  %v1003 = vadd.f32 %v948, 1e-05
  %v1004 = vadd.f32 %v950, 1e-05
  %v1005 = vadd.f32 %v952, 1e-05
  %v1006 = vadd.f32 %v954, 1e-05
  %v1007 = vadd.f32 %v956, 1e-05
  %v1008 = vadd.f32 %v958, 1e-05
  %v1009 = vadd.f32 %v960, 1e-05
  %v1010 = vadd.f32 %v962, 1e-05
  %v1011 = vadd.f32 %v964, 1e-05
  %v1012 = vadd.f32 %v966, 1e-05
  %v1013 = vadd.f32 %v968, 1e-05
  %v1014 = vadd.f32 %v970, 1e-05
  %v1015 = vadd.f32 %v972, 1e-05
  %v1016 = vadd.f32 %v974, 1e-05
  %v1017 = vadd.f32 %v976, 1e-05
  %v1018 = vadd.f32 %v978, 1e-05
  %v1019 = vadd.f32 %v980, 1e-05
  %v1020 = vadd.f32 %v982, 1e-05
  %v1021 = vadd.f32 %v984, 1e-05
  %v1022 = vadd.f32 %v986, 1e-05
  %v1023 = vadd.f32 %v988, 1e-05
  %v1024 = vadd.f32 %v990, 1e-05
  %v1025 = vadd.f32 %v992, 1e-05
  %v1026 = vadd.f32 %v994, 1e-05
  %v1027 = vmul.f32 %v995, 1.0986123
  %v1028 = vmul.f32 %v996, 1.0986123
  %v1029 = vmul.f32 %v997, 1.0986123
  %v1030 = vmul.f32 %v998, 1.0986123
  %v1031 = vmul.f32 %v999, 1.0986123
  %v1032 = vmul.f32 %v1000, 1.0986123
  %v1033 = vmul.f32 %v1001, 1.0986123
  %v1034 = vmul.f32 %v1002, 1.0986123
  %v1035 = vmul.f32 %v1003, 1.0986123
  %v1036 = vmul.f32 %v1004, 1.0986123
  %v1037 = vmul.f32 %v1005, 1.0986123
  %v1038 = vmul.f32 %v1006, 1.0986123
  %v1039 = vmul.f32 %v1007, 1.0986123
  %v1040 = vmul.f32 %v1008, 1.0986123
  %v1041 = vmul.f32 %v1009, 1.0986123
  %v1042 = vmul.f32 %v1010, 1.0986123
  %v1043 = vmul.f32 %v1011, 1.0986123
  %v1044 = vmul.f32 %v1012, 1.0986123
  %v1045 = vmul.f32 %v1013, 1.0986123
  %v1046 = vmul.f32 %v1014, 1.0986123
  %v1047 = vmul.f32 %v1015, 1.0986123
  %v1048 = vmul.f32 %v1016, 1.0986123
  %v1049 = vmul.f32 %v1017, 1.0986123
  %v1050 = vmul.f32 %v1018, 1.0986123
  %v1051 = vmul.f32 %v1019, 1.0986123
  %v1052 = vmul.f32 %v1020, 1.0986123
  %v1053 = vmul.f32 %v1021, 1.0986123
  %v1054 = vmul.f32 %v1022, 1.0986123
  %v1055 = vmul.f32 %v1023, 1.0986123
  %v1056 = vmul.f32 %v1024, 1.0986123
  %v1057 = vmul.f32 %v1025, 1.0986123
  %v1058 = vmul.f32 %v1026, 1.0986123
  %v1059 = vmul.f32 %v1027, 1.442695
  %v1060 = vpow.pop %v1059
  %v1061 = vmul.f32 %v1028, 1.442695
  %v1062 = vpow.pop %v1061
  %v1063 = vmul.f32 %v1029, 1.442695
  %v1064 = vpow.pop %v1063
  %v1065 = vmul.f32 %v1030, 1.442695
  %v1066 = vpow.pop %v1065
  %v1067 = vmul.f32 %v1031, 1.442695
  %v1068 = vpow.pop %v1067
  %v1069 = vmul.f32 %v1032, 1.442695
  %v1070 = vpow.pop %v1069
  %v1071 = vmul.f32 %v1033, 1.442695
  %v1072 = vpow.pop %v1071
  %v1073 = vmul.f32 %v1034, 1.442695
  %v1074 = vpow.pop %v1073
  %v1075 = vmul.f32 %v1035, 1.442695
  %v1076 = vpow.pop %v1075
  %v1077 = vmul.f32 %v1036, 1.442695
  %v1078 = vpow.pop %v1077
  %v1079 = vmul.f32 %v1037, 1.442695
  %v1080 = vpow.pop %v1079
  %v1081 = vmul.f32 %v1038, 1.442695
  %v1082 = vpow.pop %v1081
  %v1083 = vmul.f32 %v1039, 1.442695
  %v1084 = vpow.pop %v1083
  %v1085 = vmul.f32 %v1040, 1.442695
  %v1086 = vpow.pop %v1085
  %v1087 = vmul.f32 %v1041, 1.442695
  %v1088 = vpow.pop %v1087
  %v1089 = vmul.f32 %v1042, 1.442695
  %v1090 = vpow.pop %v1089
  %v1091 = vmul.f32 %v1043, 1.442695
  %v1092 = vpow.pop %v1091
  %v1093 = vmul.f32 %v1044, 1.442695
  %v1094 = vpow.pop %v1093
  %v1095 = vmul.f32 %v1045, 1.442695
  %v1096 = vpow.pop %v1095
  %v1097 = vmul.f32 %v1046, 1.442695
  %v1098 = vpow.pop %v1097
  %v1099 = vmul.f32 %v1047, 1.442695
  %v1100 = vpow.pop %v1099
  %v1101 = vmul.f32 %v1048, 1.442695
  %v1102 = vpow.pop %v1101
  %v1103 = vmul.f32 %v1049, 1.442695
  %v1104 = vpow.pop %v1103
  %v1105 = vmul.f32 %v1050, 1.442695
  %v1106 = vpow.pop %v1105
  %v1107 = vmul.f32 %v1051, 1.442695
  %v1108 = vpow.pop %v1107
  %v1109 = vmul.f32 %v1052, 1.442695
  %v1110 = vpow.pop %v1109
  %v1111 = vmul.f32 %v1053, 1.442695
  %v1112 = vpow.pop %v1111
  %v1113 = vmul.f32 %v1054, 1.442695
  %v1114 = vpow.pop %v1113
  %v1115 = vmul.f32 %v1055, 1.442695
  %v1116 = vpow.pop %v1115
  %v1117 = vmul.f32 %v1056, 1.442695
  %v1118 = vpow.pop %v1117
  %v1119 = vmul.f32 %v1057, 1.442695
  %v1120 = vpow.pop %v1119
  %v1121 = vmul.f32 %v1058, 1.442695
  %v1122 = vpow.pop %v1121
  %v1123 = vsub.f32 %v1060, 1.0
  %v1124 = vsub.f32 %v1062, 1.0
  %v1125 = vsub.f32 %v1064, 1.0
  %v1126 = vsub.f32 %v1066, 1.0
  %v1127 = vsub.f32 %v1068, 1.0
  %v1128 = vsub.f32 %v1070, 1.0
  %v1129 = vsub.f32 %v1072, 1.0
  %v1130 = vsub.f32 %v1074, 1.0
  %v1131 = vsub.f32 %v1076, 1.0
  %v1132 = vsub.f32 %v1078, 1.0
  %v1133 = vsub.f32 %v1080, 1.0
  %v1134 = vsub.f32 %v1082, 1.0
  %v1135 = vsub.f32 %v1084, 1.0
  %v1136 = vsub.f32 %v1086, 1.0
  %v1137 = vsub.f32 %v1088, 1.0
  %v1138 = vsub.f32 %v1090, 1.0
  %v1139 = vsub.f32 %v1092, 1.0
  %v1140 = vsub.f32 %v1094, 1.0
  %v1141 = vsub.f32 %v1096, 1.0
  %v1142 = vsub.f32 %v1098, 1.0
  %v1143 = vsub.f32 %v1100, 1.0
  %v1144 = vsub.f32 %v1102, 1.0
  %v1145 = vsub.f32 %v1104, 1.0
  %v1146 = vsub.f32 %v1106, 1.0
  %v1147 = vsub.f32 %v1108, 1.0
  %v1148 = vsub.f32 %v1110, 1.0
  %v1149 = vsub.f32 %v1112, 1.0
  %v1150 = vsub.f32 %v1114, 1.0
  %v1151 = vsub.f32 %v1116, 1.0
  %v1152 = vsub.f32 %v1118, 1.0
  %v1153 = vsub.f32 %v1120, 1.0
  %v1154 = vsub.f32 %v1122, 1.0
  %1187 = vrot.lane.b32.xlu0 %v1123, 32
  %v1188 = vpop.permute.xlu0 %1187
  %1189 = vrot.lane.b32.xlu0 %v1124, 32
  %v1190 = vpop.permute.xlu0 %1189
  %1191 = vrot.lane.b32.xlu0 %v1125, 32
  %v1192 = vpop.permute.xlu0 %1191
  %1193 = vrot.lane.b32.xlu0 %v1126, 32
  %v1194 = vpop.permute.xlu0 %1193
  %1195 = vrot.lane.b32.xlu0 %v1127, 32
  %v1196 = vpop.permute.xlu0 %1195
  %1197 = vrot.lane.b32.xlu0 %v1128, 32
  %v1198 = vpop.permute.xlu0 %1197
  %1199 = vrot.lane.b32.xlu0 %v1129, 32
  %v1200 = vpop.permute.xlu0 %1199
  %1201 = vrot.lane.b32.xlu0 %v1130, 32
  %v1202 = vpop.permute.xlu0 %1201
  %1203 = vrot.lane.b32.xlu0 %v1131, 32
  %v1204 = vpop.permute.xlu0 %1203
  %1205 = vrot.lane.b32.xlu0 %v1132, 32
  %v1206 = vpop.permute.xlu0 %1205
  %1207 = vrot.lane.b32.xlu0 %v1133, 32
  %v1208 = vpop.permute.xlu0 %1207
  %1209 = vrot.lane.b32.xlu0 %v1134, 32
  %v1210 = vpop.permute.xlu0 %1209
  %1211 = vrot.lane.b32.xlu0 %v1135, 32
  %v1212 = vpop.permute.xlu0 %1211
  %1213 = vrot.lane.b32.xlu0 %v1136, 32
  %v1214 = vpop.permute.xlu0 %1213
  %1215 = vrot.lane.b32.xlu0 %v1137, 32
  %v1216 = vpop.permute.xlu0 %1215
  %1217 = vrot.lane.b32.xlu0 %v1138, 32
  %v1218 = vpop.permute.xlu0 %1217
  %1219 = vrot.lane.b32.xlu0 %v1139, 32
  %v1220 = vpop.permute.xlu0 %1219
  %1221 = vrot.lane.b32.xlu0 %v1140, 32
  %v1222 = vpop.permute.xlu0 %1221
  %1223 = vrot.lane.b32.xlu0 %v1141, 32
  %v1224 = vpop.permute.xlu0 %1223
  %1225 = vrot.lane.b32.xlu0 %v1142, 32
  %v1226 = vpop.permute.xlu0 %1225
  %1227 = vrot.lane.b32.xlu0 %v1143, 32
  %v1228 = vpop.permute.xlu0 %1227
  %1229 = vrot.lane.b32.xlu0 %v1144, 32
  %v1230 = vpop.permute.xlu0 %1229
  %1231 = vrot.lane.b32.xlu0 %v1145, 32
  %v1232 = vpop.permute.xlu0 %1231
  %1233 = vrot.lane.b32.xlu0 %v1146, 32
  %v1234 = vpop.permute.xlu0 %1233
  %1235 = vrot.lane.b32.xlu0 %v1147, 32
  %v1236 = vpop.permute.xlu0 %1235
  %1237 = vrot.lane.b32.xlu0 %v1148, 32
  %v1238 = vpop.permute.xlu0 %1237
  %1239 = vrot.lane.b32.xlu0 %v1149, 32
  %v1240 = vpop.permute.xlu0 %1239
  %1241 = vrot.lane.b32.xlu0 %v1150, 32
  %v1242 = vpop.permute.xlu0 %1241
  %1243 = vrot.lane.b32.xlu0 %v1151, 32
  %v1244 = vpop.permute.xlu0 %1243
  %1245 = vrot.lane.b32.xlu0 %v1152, 32
  %v1246 = vpop.permute.xlu0 %1245
  %1247 = vrot.lane.b32.xlu0 %v1153, 32
  %v1248 = vpop.permute.xlu0 %1247
  %1249 = vrot.lane.b32.xlu0 %v1154, 32
  %v1250 = vpop.permute.xlu0 %1249
  %vm1283 = vcmask 7168
  %1284 = vst.msk [vmem:[%s5] sm:$0xff] %vm1283, %v1188
  %1285 = vst.msk [vmem:[%s5 + $0x8] sm:$0xff] %vm1283, %v1190
  %1286 = vst.msk [vmem:[%s5 + $0x10] sm:$0xff] %vm1283, %v1192
  %1287 = vst.msk [vmem:[%s5 + $0x18] sm:$0xff] %vm1283, %v1194
  %1288 = vst.msk [vmem:[%s5 + $0x20] sm:$0xff] %vm1283, %v1196
  %1289 = vst.msk [vmem:[%s5 + $0x28] sm:$0xff] %vm1283, %v1198
  %1290 = vst.msk [vmem:[%s5 + $0x30] sm:$0xff] %vm1283, %v1200
  %1291 = vst.msk [vmem:[%s5 + $0x38] sm:$0xff] %vm1283, %v1202
  %1292 = vst.msk [vmem:[%s5 + $0x40] sm:$0xff] %vm1283, %v1204
  %1293 = vst.msk [vmem:[%s5 + $0x48] sm:$0xff] %vm1283, %v1206
  %1294 = vst.msk [vmem:[%s5 + $0x50] sm:$0xff] %vm1283, %v1208
  %1295 = vst.msk [vmem:[%s5 + $0x58] sm:$0xff] %vm1283, %v1210
  %1296 = vst.msk [vmem:[%s5 + $0x60] sm:$0xff] %vm1283, %v1212
  %1297 = vst.msk [vmem:[%s5 + $0x68] sm:$0xff] %vm1283, %v1214
  %1298 = vst.msk [vmem:[%s5 + $0x70] sm:$0xff] %vm1283, %v1216
  %1299 = vst.msk [vmem:[%s5 + $0x78] sm:$0xff] %vm1283, %v1218
  %1300 = vst.msk [vmem:[%s5 + $0x80] sm:$0xff] %vm1283, %v1220
  %1301 = vst.msk [vmem:[%s5 + $0x88] sm:$0xff] %vm1283, %v1222
  %1302 = vst.msk [vmem:[%s5 + $0x90] sm:$0xff] %vm1283, %v1224
  %1303 = vst.msk [vmem:[%s5 + $0x98] sm:$0xff] %vm1283, %v1226
  %1304 = vst.msk [vmem:[%s5 + $0xa0] sm:$0xff] %vm1283, %v1228
  %1305 = vst.msk [vmem:[%s5 + $0xa8] sm:$0xff] %vm1283, %v1230
  %1306 = vst.msk [vmem:[%s5 + $0xb0] sm:$0xff] %vm1283, %v1232
  %1307 = vst.msk [vmem:[%s5 + $0xb8] sm:$0xff] %vm1283, %v1234
  %1308 = vst.msk [vmem:[%s5 + $0xc0] sm:$0xff] %vm1283, %v1236
  %1309 = vst.msk [vmem:[%s5 + $0xc8] sm:$0xff] %vm1283, %v1238
  %1310 = vst.msk [vmem:[%s5 + $0xd0] sm:$0xff] %vm1283, %v1240
  %1311 = vst.msk [vmem:[%s5 + $0xd8] sm:$0xff] %vm1283, %v1242
  %1312 = vst.msk [vmem:[%s5 + $0xe0] sm:$0xff] %vm1283, %v1244
  %1313 = vst.msk [vmem:[%s5 + $0xe8] sm:$0xff] %vm1283, %v1246
  %1314 = vst.msk [vmem:[%s5 + $0xf0] sm:$0xff] %vm1283, %v1248
  %1315 = vst.msk [vmem:[%s5 + $0xf8] sm:$0xff] %vm1283, %v1250
  // Predicated region
  $region10: #{anomaly_attention.4} parent=0 // pred_check
    _
  $region11: #{anomaly_attention.4} parent=0 // pred_check_branch
    %1317 = sbr.rel (0) target = $region13
  $region12: #{anomaly_attention.4} parent=0 // pred_region
    _
  $region13: #{anomaly_attention.4} parent=0 // pred_fallthru
    _
  // Predicated region
  $region14: #{anomaly_attention.4} parent=0 // pred_check
    _
  $region15: #{anomaly_attention.4} parent=0 // pred_check_branch
    %1319 = sbr.rel (0) target = $region17
  $region16: #{anomaly_attention.4} parent=0 // pred_region
    _
  $region17: #{anomaly_attention.4} parent=0 // pred_fallthru
    _
  // Predicated region
  $region18: #{anomaly_attention.4} parent=0 // pred_check
    _
  $region19: #{anomaly_attention.4} parent=0 // pred_check_branch
    %1321 = sbr.rel (0) target = $region21
  $region20: #{anomaly_attention.4} parent=0 // pred_region
    _
  $region21: #{anomaly_attention.4} parent=0 // pred_fallthru
    _
  // Predicated region
  $region22: #{anomaly_attention.4} parent=0 // pred_check
    _
  $region23: #{anomaly_attention.4} parent=0 // pred_check_branch
    %1323 = sbr.rel (0) target = $region25
  $region24: #{anomaly_attention.4} parent=0 // pred_region
    _
  $region25: #{anomaly_attention.4} parent=0 // pred_fallthru
    _
  // Predicated region
  $region26: #{anomaly_attention.4} parent=0 // pred_check
    _
  $region27: #{anomaly_attention.4} parent=0 // pred_check_branch
    %1325 = sbr.rel (0) target = $region29
  $region28: #{anomaly_attention.4} parent=0 // pred_region
    _
  $region29: #{anomaly_attention.4} parent=0 // pred_fallthru
    _
  // Predicated region
  $region30: #{anomaly_attention.4} parent=0 // pred_check
    _
  $region31: #{anomaly_attention.4} parent=0 // pred_check_branch
    %1327 = sbr.rel (0) target = $region33
  $region32: #{anomaly_attention.4} parent=0 // pred_region
    _
  $region33: #{anomaly_attention.4} parent=0 // pred_fallthru
    _
  // Predicated region
  $region34: #{anomaly_attention.4} parent=0 // pred_check
    _
  $region35: #{anomaly_attention.4} parent=0 // pred_check_branch
    %1329 = sbr.rel (0) target = $region37
  $region36: #{anomaly_attention.4} parent=0 // pred_region
    _
  $region37: #{anomaly_attention.4} parent=0 // pred_fallthru
    _
  // Predicated region
  $region38: #{anomaly_attention.4} parent=0 // pred_check
    _
  $region39: #{anomaly_attention.4} parent=0 // pred_check_branch
    %1331 = sbr.rel (0) target = $region41
  $region40: #{anomaly_attention.4} parent=0 // pred_region
    _
  $region41: #{anomaly_attention.4} parent=0 // pred_fallthru
    _

// kernel: anomaly_attention.5
$region0: #{anomaly_attention.5}
  #allocation0 [shape = 'u32[]', space=smem, size = 0x4, offset = 0x4, fixed_abs, tag = 'smem constant byte address 0x4 - core index']
  #allocation1 [shape = 'u32[144,128]{1,0:T(1,128)}', space=vmem, size = 0x12000, scoped, tag = 'internal scratch']
  #allocation2 [shape = 'f32[2,128,32]{2,1,0:T(8,128)}', space=vmem, size = 0x20000, scoped, tag = 'scratch operand']
  %s0 = inlined_call_operand.vmem [shape: bf16[2,128,32], index: 0, kind: input, shape index: {}]
  %s1 = inlined_call_operand.vmem [shape: bf16[2,128,32], index: 1, kind: input, shape index: {}]
  %s2 = inlined_call_operand.vmem [shape: bf16[2,128,32], index: 2, kind: input, shape index: {}]
  %s3 = inlined_call_operand.vmem [shape: f32[2,128,32], index: 3, kind: output, shape index: {}]
  %s4 = sld [smem:[#allocation0]]
  $region30: #{anomaly_attention.5} parent=0
    _
  %s6 = ssub.s32 1, %s4
  %s7 = scalar_select 0, %s6, %s4
  // Predicated region
  $region2: #{anomaly_attention.5} parent=0 // pred_check
    _
  $region3: #{anomaly_attention.5} parent=0 // pred_check_branch
    %9 = sbr.rel (0) target = $region5
  $region4: #{anomaly_attention.5} parent=0 // pred_region
    _
  $region5: #{anomaly_attention.5} parent=0 // pred_fallthru
    _
  // Predicated region
  $region6: #{anomaly_attention.5} parent=0 // pred_check
    _
  $region7: #{anomaly_attention.5} parent=0 // pred_check_branch
    %11 = sbr.rel (0) target = $region9
  $region8: #{anomaly_attention.5} parent=0 // pred_region
    _
  $region9: #{anomaly_attention.5} parent=0 // pred_fallthru
    _
  // Predicated region
  $region10: #{anomaly_attention.5} parent=0 // pred_check
    _
  $region11: #{anomaly_attention.5} parent=0 // pred_check_branch
    %13 = sbr.rel (0) target = $region13
  $region12: #{anomaly_attention.5} parent=0 // pred_region
    _
  $region13: #{anomaly_attention.5} parent=0 // pred_fallthru
    _
  %p15 = scmp.eq.s32.totalorder 0, 0
  // Predicated region
  $region14: #{anomaly_attention.5} parent=0 // pred_check
    %p16 = pneg %p15
  $region15: #{anomaly_attention.5} parent=0 // pred_check_branch
    %18 = sbr.rel (%p16) target = $region17
  $region16: #{anomaly_attention.5} parent=0 // pred_region
    %vm19 = vcmask 261120
    %20 = vst.msk [vmem:[#allocation2] sm:$0xff] %vm19, 0.0
    %21 = vst.msk [vmem:[#allocation2 + $0x8] sm:$0xff] %vm19, 0.0
    %22 = vst.msk [vmem:[#allocation2 + $0x10] sm:$0xff] %vm19, 0.0
    %23 = vst.msk [vmem:[#allocation2 + $0x18] sm:$0xff] %vm19, 0.0
    %24 = vst.msk [vmem:[#allocation2 + $0x20] sm:$0xff] %vm19, 0.0
    %25 = vst.msk [vmem:[#allocation2 + $0x28] sm:$0xff] %vm19, 0.0
    %26 = vst.msk [vmem:[#allocation2 + $0x30] sm:$0xff] %vm19, 0.0
    %27 = vst.msk [vmem:[#allocation2 + $0x38] sm:$0xff] %vm19, 0.0
    %28 = vst.msk [vmem:[#allocation2 + $0x40] sm:$0xff] %vm19, 0.0
    %29 = vst.msk [vmem:[#allocation2 + $0x48] sm:$0xff] %vm19, 0.0
    %30 = vst.msk [vmem:[#allocation2 + $0x50] sm:$0xff] %vm19, 0.0
    %31 = vst.msk [vmem:[#allocation2 + $0x58] sm:$0xff] %vm19, 0.0
    %32 = vst.msk [vmem:[#allocation2 + $0x60] sm:$0xff] %vm19, 0.0
    %33 = vst.msk [vmem:[#allocation2 + $0x68] sm:$0xff] %vm19, 0.0
    %34 = vst.msk [vmem:[#allocation2 + $0x70] sm:$0xff] %vm19, 0.0
    %35 = vst.msk [vmem:[#allocation2 + $0x78] sm:$0xff] %vm19, 0.0
    %36 = vst.msk [vmem:[#allocation2 + $0x80] sm:$0xff] %vm19, 0.0
    %37 = vst.msk [vmem:[#allocation2 + $0x88] sm:$0xff] %vm19, 0.0
    %38 = vst.msk [vmem:[#allocation2 + $0x90] sm:$0xff] %vm19, 0.0
    %39 = vst.msk [vmem:[#allocation2 + $0x98] sm:$0xff] %vm19, 0.0
    %40 = vst.msk [vmem:[#allocation2 + $0xa0] sm:$0xff] %vm19, 0.0
    %41 = vst.msk [vmem:[#allocation2 + $0xa8] sm:$0xff] %vm19, 0.0
    %42 = vst.msk [vmem:[#allocation2 + $0xb0] sm:$0xff] %vm19, 0.0
    %43 = vst.msk [vmem:[#allocation2 + $0xb8] sm:$0xff] %vm19, 0.0
    %44 = vst.msk [vmem:[#allocation2 + $0xc0] sm:$0xff] %vm19, 0.0
    %45 = vst.msk [vmem:[#allocation2 + $0xc8] sm:$0xff] %vm19, 0.0
    %46 = vst.msk [vmem:[#allocation2 + $0xd0] sm:$0xff] %vm19, 0.0
    %47 = vst.msk [vmem:[#allocation2 + $0xd8] sm:$0xff] %vm19, 0.0
    %48 = vst.msk [vmem:[#allocation2 + $0xe0] sm:$0xff] %vm19, 0.0
    %49 = vst.msk [vmem:[#allocation2 + $0xe8] sm:$0xff] %vm19, 0.0
    %50 = vst.msk [vmem:[#allocation2 + $0xf0] sm:$0xff] %vm19, 0.0
    %51 = vst.msk [vmem:[#allocation2 + $0xf8] sm:$0xff] %vm19, 0.0
  $region17: #{anomaly_attention.5} parent=0 // pred_fallthru
    _
  %v52 = vld [vmem:[%s0] sm:$0xf]
  %v53 = vld [vmem:[%s0 + $0x4] sm:$0xf]
  %v54 = vld [vmem:[%s0 + $0x8] sm:$0xf]
  %v55 = vld [vmem:[%s0 + $0xc] sm:$0xf]
  %v56 = vld [vmem:[%s0 + $0x10] sm:$0xf]
  %v57 = vld [vmem:[%s0 + $0x14] sm:$0xf]
  %v58 = vld [vmem:[%s0 + $0x18] sm:$0xf]
  %v59 = vld [vmem:[%s0 + $0x1c] sm:$0xf]
  %v60 = vld [vmem:[%s0 + $0x20] sm:$0xf]
  %v61 = vld [vmem:[%s0 + $0x24] sm:$0xf]
  %v62 = vld [vmem:[%s0 + $0x28] sm:$0xf]
  %v63 = vld [vmem:[%s0 + $0x2c] sm:$0xf]
  %v64 = vld [vmem:[%s0 + $0x30] sm:$0xf]
  %v65 = vld [vmem:[%s0 + $0x34] sm:$0xf]
  %v66 = vld [vmem:[%s0 + $0x38] sm:$0xf]
  %v67 = vld [vmem:[%s0 + $0x3c] sm:$0xf]
  %v68 = vld [vmem:[%s0 + $0x40] sm:$0xf]
  %v69 = vld [vmem:[%s0 + $0x44] sm:$0xf]
  %v70 = vld [vmem:[%s0 + $0x48] sm:$0xf]
  %v71 = vld [vmem:[%s0 + $0x4c] sm:$0xf]
  %v72 = vld [vmem:[%s0 + $0x50] sm:$0xf]
  %v73 = vld [vmem:[%s0 + $0x54] sm:$0xf]
  %v74 = vld [vmem:[%s0 + $0x58] sm:$0xf]
  %v75 = vld [vmem:[%s0 + $0x5c] sm:$0xf]
  %v76 = vld [vmem:[%s0 + $0x60] sm:$0xf]
  %v77 = vld [vmem:[%s0 + $0x64] sm:$0xf]
  %v78 = vld [vmem:[%s0 + $0x68] sm:$0xf]
  %v79 = vld [vmem:[%s0 + $0x6c] sm:$0xf]
  %v80 = vld [vmem:[%s0 + $0x70] sm:$0xf]
  %v81 = vld [vmem:[%s0 + $0x74] sm:$0xf]
  %v82 = vld [vmem:[%s0 + $0x78] sm:$0xf]
  %v83 = vld [vmem:[%s0 + $0x7c] sm:$0xf]
  %v84 = vld [vmem:[%s1] sm:$0xf]
  %v85 = vld [vmem:[%s1 + $0x4] sm:$0xf]
  %v86 = vld [vmem:[%s1 + $0x8] sm:$0xf]
  %v87 = vld [vmem:[%s1 + $0xc] sm:$0xf]
  %v88 = vld [vmem:[%s1 + $0x10] sm:$0xf]
  %v89 = vld [vmem:[%s1 + $0x14] sm:$0xf]
  %v90 = vld [vmem:[%s1 + $0x18] sm:$0xf]
  %v91 = vld [vmem:[%s1 + $0x1c] sm:$0xf]
  %v92 = vld [vmem:[%s1 + $0x20] sm:$0xf]
  %v93 = vld [vmem:[%s1 + $0x24] sm:$0xf]
  %v94 = vld [vmem:[%s1 + $0x28] sm:$0xf]
  %v95 = vld [vmem:[%s1 + $0x2c] sm:$0xf]
  %v96 = vld [vmem:[%s1 + $0x30] sm:$0xf]
  %v97 = vld [vmem:[%s1 + $0x34] sm:$0xf]
  %v98 = vld [vmem:[%s1 + $0x38] sm:$0xf]
  %v99 = vld [vmem:[%s1 + $0x3c] sm:$0xf]
  %v100 = vld [vmem:[%s1 + $0x40] sm:$0xf]
  %v101 = vld [vmem:[%s1 + $0x44] sm:$0xf]
  %v102 = vld [vmem:[%s1 + $0x48] sm:$0xf]
  %v103 = vld [vmem:[%s1 + $0x4c] sm:$0xf]
  %v104 = vld [vmem:[%s1 + $0x50] sm:$0xf]
  %v105 = vld [vmem:[%s1 + $0x54] sm:$0xf]
  %v106 = vld [vmem:[%s1 + $0x58] sm:$0xf]
  %v107 = vld [vmem:[%s1 + $0x5c] sm:$0xf]
  %v108 = vld [vmem:[%s1 + $0x60] sm:$0xf]
  %v109 = vld [vmem:[%s1 + $0x64] sm:$0xf]
  %v110 = vld [vmem:[%s1 + $0x68] sm:$0xf]
  %v111 = vld [vmem:[%s1 + $0x6c] sm:$0xf]
  %v112 = vld [vmem:[%s1 + $0x70] sm:$0xf]
  %v113 = vld [vmem:[%s1 + $0x74] sm:$0xf]
  %v114 = vld [vmem:[%s1 + $0x78] sm:$0xf]
  %v115 = vld [vmem:[%s1 + $0x7c] sm:$0xf]
  %v116 = vld [vmem:[%s2] sm:$0xf]
  %v117 = vld [vmem:[%s2 + $0x4] sm:$0xf]
  %v118 = vld [vmem:[%s2 + $0x8] sm:$0xf]
  %v119 = vld [vmem:[%s2 + $0xc] sm:$0xf]
  %v120 = vld [vmem:[%s2 + $0x10] sm:$0xf]
  %v121 = vld [vmem:[%s2 + $0x14] sm:$0xf]
  %v122 = vld [vmem:[%s2 + $0x18] sm:$0xf]
  %v123 = vld [vmem:[%s2 + $0x1c] sm:$0xf]
  %v124 = vld [vmem:[%s2 + $0x20] sm:$0xf]
  %v125 = vld [vmem:[%s2 + $0x24] sm:$0xf]
  %v126 = vld [vmem:[%s2 + $0x28] sm:$0xf]
  %v127 = vld [vmem:[%s2 + $0x2c] sm:$0xf]
  %v128 = vld [vmem:[%s2 + $0x30] sm:$0xf]
  %v129 = vld [vmem:[%s2 + $0x34] sm:$0xf]
  %v130 = vld [vmem:[%s2 + $0x38] sm:$0xf]
  %v131 = vld [vmem:[%s2 + $0x3c] sm:$0xf]
  %v132 = vld [vmem:[%s2 + $0x40] sm:$0xf]
  %v133 = vld [vmem:[%s2 + $0x44] sm:$0xf]
  %v134 = vld [vmem:[%s2 + $0x48] sm:$0xf]
  %v135 = vld [vmem:[%s2 + $0x4c] sm:$0xf]
  %v136 = vld [vmem:[%s2 + $0x50] sm:$0xf]
  %v137 = vld [vmem:[%s2 + $0x54] sm:$0xf]
  %v138 = vld [vmem:[%s2 + $0x58] sm:$0xf]
  %v139 = vld [vmem:[%s2 + $0x5c] sm:$0xf]
  %v140 = vld [vmem:[%s2 + $0x60] sm:$0xf]
  %v141 = vld [vmem:[%s2 + $0x64] sm:$0xf]
  %v142 = vld [vmem:[%s2 + $0x68] sm:$0xf]
  %v143 = vld [vmem:[%s2 + $0x6c] sm:$0xf]
  %v144 = vld [vmem:[%s2 + $0x70] sm:$0xf]
  %v145 = vld [vmem:[%s2 + $0x74] sm:$0xf]
  %v146 = vld [vmem:[%s2 + $0x78] sm:$0xf]
  %v147 = vld [vmem:[%s2 + $0x7c] sm:$0xf]
  %v164 = vunpack.c.l.b16 %v52
  %v165 = vunpack.c.l.b16 %v53
  %v166 = vunpack.c.l.b16 %v54
  %v167 = vunpack.c.l.b16 %v55
  %v168 = vunpack.c.l.b16 %v56
  %v169 = vunpack.c.l.b16 %v57
  %v170 = vunpack.c.l.b16 %v58
  %v171 = vunpack.c.l.b16 %v59
  %v172 = vunpack.c.l.b16 %v60
  %v173 = vunpack.c.l.b16 %v61
  %v174 = vunpack.c.l.b16 %v62
  %v175 = vunpack.c.l.b16 %v63
  %v176 = vunpack.c.l.b16 %v64
  %v177 = vunpack.c.l.b16 %v65
  %v178 = vunpack.c.l.b16 %v66
  %v179 = vunpack.c.l.b16 %v67
  %v180 = vpack.c.b16 %v165, %v164
  %v181 = vpack.c.b16 %v167, %v166
  %v182 = vpack.c.b16 %v169, %v168
  %v183 = vpack.c.b16 %v171, %v170
  %v184 = vpack.c.b16 %v173, %v172
  %v185 = vpack.c.b16 %v175, %v174
  %v186 = vpack.c.b16 %v177, %v176
  %v187 = vpack.c.b16 %v179, %v178
  %v204 = vunpack.c.l.b16 %v84
  %v205 = vunpack.c.l.b16 %v85
  %v206 = vunpack.c.l.b16 %v86
  %v207 = vunpack.c.l.b16 %v87
  %v208 = vunpack.c.l.b16 %v88
  %v209 = vunpack.c.l.b16 %v89
  %v210 = vunpack.c.l.b16 %v90
  %v211 = vunpack.c.l.b16 %v91
  %v212 = vunpack.c.l.b16 %v92
  %v213 = vunpack.c.l.b16 %v93
  %v214 = vunpack.c.l.b16 %v94
  %v215 = vunpack.c.l.b16 %v95
  %v216 = vunpack.c.l.b16 %v96
  %v217 = vunpack.c.l.b16 %v97
  %v218 = vunpack.c.l.b16 %v98
  %v219 = vunpack.c.l.b16 %v99
  %v220 = vpack.c.b16 %v205, %v204
  %v221 = vpack.c.b16 %v207, %v206
  %v222 = vpack.c.b16 %v209, %v208
  %v223 = vpack.c.b16 %v211, %v210
  %v224 = vpack.c.b16 %v213, %v212
  %v225 = vpack.c.b16 %v215, %v214
  %v226 = vpack.c.b16 %v217, %v216
  %v227 = vpack.c.b16 %v219, %v218
  %vm228 = vcmask 261120
  %v230 = vsel %vm228, %v180, 0
  %v233 = vsel %vm228, %v181, 0
  %v236 = vsel %vm228, %v182, 0
  %v239 = vsel %vm228, %v183, 0
  %v242 = vsel %vm228, %v184, 0
  %v245 = vsel %vm228, %v185, 0
  %v248 = vsel %vm228, %v186, 0
  %v251 = vsel %vm228, %v187, 0
  %v254 = vsel %vm228, %v220, 0
  %v257 = vsel %vm228, %v221, 0
  %v260 = vsel %vm228, %v222, 0
  %v263 = vsel %vm228, %v223, 0
  %v266 = vsel %vm228, %v224, 0
  %v269 = vsel %vm228, %v225, 0
  %v272 = vsel %vm228, %v226, 0
  %v275 = vsel %vm228, %v227, 0
  %277 = vmatprep.subr.bf16.mxu0 0
  %278 = vmatpush1.bf16.xpose.msra.mxu0 %v254
  %279 = vmatprep.subr.bf16.mxu0 0
  %280 = vmatpush1.bf16.xpose.msra.mxu0 %v257
  %281 = vmatprep.subr.bf16.mxu0 0
  %282 = vmatpush1.bf16.xpose.msra.mxu0 %v260
  %283 = vmatprep.subr.bf16.mxu0 0
  %284 = vmatpush1.bf16.xpose.msra.mxu0 %v263
  %285 = vmatprep.subr.bf16.mxu0 0
  %286 = vmatpush1.bf16.xpose.msra.mxu0 %v266
  %287 = vmatprep.subr.bf16.mxu0 0
  %288 = vmatpush1.bf16.xpose.msra.mxu0 %v269
  %289 = vmatprep.subr.bf16.mxu0 0
  %290 = vmatpush1.bf16.xpose.msra.mxu0 %v272
  %291 = vmatprep.subr.bf16.mxu0 0
  %292 = vmatpush1.bf16.xpose.msra.mxu0 %v275
  %293 = vmatprep.subr.bf16.mxu0 0
  %294 = vmatpush1.bf16.xpose.msra.mxu0 0
  %295 = vmatprep.subr.bf16.mxu0 0
  %296 = vmatpush1.bf16.xpose.msra.mxu0 0
  %297 = vmatprep.subr.bf16.mxu0 0
  %298 = vmatpush1.bf16.xpose.msra.mxu0 0
  %299 = vmatprep.subr.bf16.mxu0 0
  %300 = vmatpush1.bf16.xpose.msra.mxu0 0
  %301 = vmatprep.subr.bf16.mxu0 0
  %302 = vmatpush1.bf16.xpose.msra.mxu0 0
  %303 = vmatprep.subr.bf16.mxu0 0
  %304 = vmatpush1.bf16.xpose.msra.mxu0 0
  %305 = vmatprep.subr.bf16.mxu0 0
  %306 = vmatpush1.bf16.xpose.msra.mxu0 0
  %307 = vmatprep.subr.bf16.mxu0 0
  %308 = vmatpush1.bf16.xpose.msra.mxu0 0
  %309 = vmatprep.mubr.bf16.mxu0 0
  %310 = vmatmul.mubr.bf16.gmra.mrb[0].mxu0 %v230
  %v311 = vpop.f32.mrb[0].mxu0
  %v312 = vadd.f32 0.0, %v311
  %v313 = vpop.f32.mrb[0].mxu0
  %v314 = vpop.f32.mrb[0].mxu0
  %v315 = vadd.f32 0.0, %v314
  %v316 = vpop.f32.mrb[0].mxu0
  %317 = vmatprep.mubr.bf16.mxu0 0
  %318 = vmatmul.mubr.bf16.gmra.mrb[0].mxu0 %v233
  %v319 = vpop.f32.mrb[0].mxu0
  %v320 = vadd.f32 0.0, %v319
  %v321 = vpop.f32.mrb[0].mxu0
  %v322 = vpop.f32.mrb[0].mxu0
  %v323 = vadd.f32 0.0, %v322
  %v324 = vpop.f32.mrb[0].mxu0
  %325 = vmatprep.mubr.bf16.mxu0 0
  %326 = vmatmul.mubr.bf16.gmra.mrb[0].mxu0 %v236
  %v327 = vpop.f32.mrb[0].mxu0
  %v328 = vadd.f32 0.0, %v327
  %v329 = vpop.f32.mrb[0].mxu0
  %v330 = vpop.f32.mrb[0].mxu0
  %v331 = vadd.f32 0.0, %v330
  %v332 = vpop.f32.mrb[0].mxu0
  %333 = vmatprep.mubr.bf16.mxu0 0
  %334 = vmatmul.mubr.bf16.gmra.mrb[0].mxu0 %v239
  %v335 = vpop.f32.mrb[0].mxu0
  %v336 = vadd.f32 0.0, %v335
  %v337 = vpop.f32.mrb[0].mxu0
  %v338 = vpop.f32.mrb[0].mxu0
  %v339 = vadd.f32 0.0, %v338
  %v340 = vpop.f32.mrb[0].mxu0
  %341 = vmatprep.mubr.bf16.mxu0 0
  %342 = vmatmul.mubr.bf16.gmra.mrb[0].mxu0 %v242
  %v343 = vpop.f32.mrb[0].mxu0
  %v344 = vadd.f32 0.0, %v343
  %v345 = vpop.f32.mrb[0].mxu0
  %v346 = vpop.f32.mrb[0].mxu0
  %v347 = vadd.f32 0.0, %v346
  %v348 = vpop.f32.mrb[0].mxu0
  %349 = vmatprep.mubr.bf16.mxu0 0
  %350 = vmatmul.mubr.bf16.gmra.mrb[0].mxu0 %v245
  %v351 = vpop.f32.mrb[0].mxu0
  %v352 = vadd.f32 0.0, %v351
  %v353 = vpop.f32.mrb[0].mxu0
  %v354 = vpop.f32.mrb[0].mxu0
  %v355 = vadd.f32 0.0, %v354
  %v356 = vpop.f32.mrb[0].mxu0
  %357 = vmatprep.mubr.bf16.mxu0 0
  %358 = vmatmul.mubr.bf16.gmra.mrb[0].mxu0 %v248
  %v359 = vpop.f32.mrb[0].mxu0
  %v360 = vadd.f32 0.0, %v359
  %v361 = vpop.f32.mrb[0].mxu0
  %v362 = vpop.f32.mrb[0].mxu0
  %v363 = vadd.f32 0.0, %v362
  %v364 = vpop.f32.mrb[0].mxu0
  %365 = vmatprep.mubr.bf16.mxu0 0
  %366 = vmatmul.mubr.bf16.gmra.mrb[0].mxu0 %v251
  %v367 = vpop.f32.mrb[0].mxu0
  %v368 = vadd.f32 0.0, %v367
  %v369 = vpop.f32.mrb[0].mxu0
  %v370 = vpop.f32.mrb[0].mxu0
  %v371 = vadd.f32 0.0, %v370
  %v372 = vpop.f32.mrb[0].mxu0
  %373 = vdwg.mxu0
  %v390 = vunpack.c.l.b16 %v68
  %v391 = vunpack.c.l.b16 %v69
  %v392 = vunpack.c.l.b16 %v70
  %v393 = vunpack.c.l.b16 %v71
  %v394 = vunpack.c.l.b16 %v72
  %v395 = vunpack.c.l.b16 %v73
  %v396 = vunpack.c.l.b16 %v74
  %v397 = vunpack.c.l.b16 %v75
  %v398 = vunpack.c.l.b16 %v76
  %v399 = vunpack.c.l.b16 %v77
  %v400 = vunpack.c.l.b16 %v78
  %v401 = vunpack.c.l.b16 %v79
  %v402 = vunpack.c.l.b16 %v80
  %v403 = vunpack.c.l.b16 %v81
  %v404 = vunpack.c.l.b16 %v82
  %v405 = vunpack.c.l.b16 %v83
  %v406 = vpack.c.b16 %v391, %v390
  %v407 = vpack.c.b16 %v393, %v392
  %v408 = vpack.c.b16 %v395, %v394
  %v409 = vpack.c.b16 %v397, %v396
  %v410 = vpack.c.b16 %v399, %v398
  %v411 = vpack.c.b16 %v401, %v400
  %v412 = vpack.c.b16 %v403, %v402
  %v413 = vpack.c.b16 %v405, %v404
  %v430 = vunpack.c.l.b16 %v100
  %v431 = vunpack.c.l.b16 %v101
  %v432 = vunpack.c.l.b16 %v102
  %v433 = vunpack.c.l.b16 %v103
  %v434 = vunpack.c.l.b16 %v104
  %v435 = vunpack.c.l.b16 %v105
  %v436 = vunpack.c.l.b16 %v106
  %v437 = vunpack.c.l.b16 %v107
  %v438 = vunpack.c.l.b16 %v108
  %v439 = vunpack.c.l.b16 %v109
  %v440 = vunpack.c.l.b16 %v110
  %v441 = vunpack.c.l.b16 %v111
  %v442 = vunpack.c.l.b16 %v112
  %v443 = vunpack.c.l.b16 %v113
  %v444 = vunpack.c.l.b16 %v114
  %v445 = vunpack.c.l.b16 %v115
  %v446 = vpack.c.b16 %v431, %v430
  %v447 = vpack.c.b16 %v433, %v432
  %v448 = vpack.c.b16 %v435, %v434
  %v449 = vpack.c.b16 %v437, %v436
  %v450 = vpack.c.b16 %v439, %v438
  %v451 = vpack.c.b16 %v441, %v440
  %v452 = vpack.c.b16 %v443, %v442
  %v453 = vpack.c.b16 %v445, %v444
  %v455 = vsel %vm228, %v406, 0
  %v458 = vsel %vm228, %v407, 0
  %v461 = vsel %vm228, %v408, 0
  %v464 = vsel %vm228, %v409, 0
  %v467 = vsel %vm228, %v410, 0
  %v470 = vsel %vm228, %v411, 0
  %v473 = vsel %vm228, %v412, 0
  %v476 = vsel %vm228, %v413, 0
  %v479 = vsel %vm228, %v446, 0
  %v482 = vsel %vm228, %v447, 0
  %v485 = vsel %vm228, %v448, 0
  %v488 = vsel %vm228, %v449, 0
  %v491 = vsel %vm228, %v450, 0
  %v494 = vsel %vm228, %v451, 0
  %v497 = vsel %vm228, %v452, 0
  %v500 = vsel %vm228, %v453, 0
  %502 = vmatprep.subr.bf16.mxu0 0
  %503 = vmatpush1.bf16.xpose.msra.mxu0 %v479
  %504 = vmatprep.subr.bf16.mxu0 0
  %505 = vmatpush1.bf16.xpose.msra.mxu0 %v482
  %506 = vmatprep.subr.bf16.mxu0 0
  %507 = vmatpush1.bf16.xpose.msra.mxu0 %v485
  %508 = vmatprep.subr.bf16.mxu0 0
  %509 = vmatpush1.bf16.xpose.msra.mxu0 %v488
  %510 = vmatprep.subr.bf16.mxu0 0
  %511 = vmatpush1.bf16.xpose.msra.mxu0 %v491
  %512 = vmatprep.subr.bf16.mxu0 0
  %513 = vmatpush1.bf16.xpose.msra.mxu0 %v494
  %514 = vmatprep.subr.bf16.mxu0 0
  %515 = vmatpush1.bf16.xpose.msra.mxu0 %v497
  %516 = vmatprep.subr.bf16.mxu0 0
  %517 = vmatpush1.bf16.xpose.msra.mxu0 %v500
  %518 = vmatprep.subr.bf16.mxu0 0
  %519 = vmatpush1.bf16.xpose.msra.mxu0 0
  %520 = vmatprep.subr.bf16.mxu0 0
  %521 = vmatpush1.bf16.xpose.msra.mxu0 0
  %522 = vmatprep.subr.bf16.mxu0 0
  %523 = vmatpush1.bf16.xpose.msra.mxu0 0
  %524 = vmatprep.subr.bf16.mxu0 0
  %525 = vmatpush1.bf16.xpose.msra.mxu0 0
  %526 = vmatprep.subr.bf16.mxu0 0
  %527 = vmatpush1.bf16.xpose.msra.mxu0 0
  %528 = vmatprep.subr.bf16.mxu0 0
  %529 = vmatpush1.bf16.xpose.msra.mxu0 0
  %530 = vmatprep.subr.bf16.mxu0 0
  %531 = vmatpush1.bf16.xpose.msra.mxu0 0
  %532 = vmatprep.subr.bf16.mxu0 0
  %533 = vmatpush1.bf16.xpose.msra.mxu0 0
  %534 = vmatprep.mubr.bf16.mxu0 0
  %535 = vmatmul.mubr.bf16.gmra.mrb[0].mxu0 %v455
  %v536 = vpop.f32.mrb[0].mxu0
  %v537 = vadd.f32 0.0, %v536
  %v538 = vpop.f32.mrb[0].mxu0
  %v539 = vpop.f32.mrb[0].mxu0
  %v540 = vadd.f32 0.0, %v539
  %v541 = vpop.f32.mrb[0].mxu0
  %542 = vmatprep.mubr.bf16.mxu0 0
  %543 = vmatmul.mubr.bf16.gmra.mrb[0].mxu0 %v458
  %v544 = vpop.f32.mrb[0].mxu0
  %v545 = vadd.f32 0.0, %v544
  %v546 = vpop.f32.mrb[0].mxu0
  %v547 = vpop.f32.mrb[0].mxu0
  %v548 = vadd.f32 0.0, %v547
  %v549 = vpop.f32.mrb[0].mxu0
  %550 = vmatprep.mubr.bf16.mxu0 0
  %551 = vmatmul.mubr.bf16.gmra.mrb[0].mxu0 %v461
  %v552 = vpop.f32.mrb[0].mxu0
  %v553 = vadd.f32 0.0, %v552
  %v554 = vpop.f32.mrb[0].mxu0
  %v555 = vpop.f32.mrb[0].mxu0
  %v556 = vadd.f32 0.0, %v555
  %v557 = vpop.f32.mrb[0].mxu0
  %558 = vmatprep.mubr.bf16.mxu0 0
  %559 = vmatmul.mubr.bf16.gmra.mrb[0].mxu0 %v464
  %v560 = vpop.f32.mrb[0].mxu0
  %v561 = vadd.f32 0.0, %v560
  %v562 = vpop.f32.mrb[0].mxu0
  %v563 = vpop.f32.mrb[0].mxu0
  %v564 = vadd.f32 0.0, %v563
  %v565 = vpop.f32.mrb[0].mxu0
  %566 = vmatprep.mubr.bf16.mxu0 0
  %567 = vmatmul.mubr.bf16.gmra.mrb[0].mxu0 %v467
  %v568 = vpop.f32.mrb[0].mxu0
  %v569 = vadd.f32 0.0, %v568
  %v570 = vpop.f32.mrb[0].mxu0
  %v571 = vpop.f32.mrb[0].mxu0
  %v572 = vadd.f32 0.0, %v571
  %v573 = vpop.f32.mrb[0].mxu0
  %574 = vmatprep.mubr.bf16.mxu0 0
  %575 = vmatmul.mubr.bf16.gmra.mrb[0].mxu0 %v470
  %v576 = vpop.f32.mrb[0].mxu0
  %v577 = vadd.f32 0.0, %v576
  %v578 = vpop.f32.mrb[0].mxu0
  %v579 = vpop.f32.mrb[0].mxu0
  %v580 = vadd.f32 0.0, %v579
  %v581 = vpop.f32.mrb[0].mxu0
  %582 = vmatprep.mubr.bf16.mxu0 0
  %583 = vmatmul.mubr.bf16.gmra.mrb[0].mxu0 %v473
  %v584 = vpop.f32.mrb[0].mxu0
  %v585 = vadd.f32 0.0, %v584
  %v586 = vpop.f32.mrb[0].mxu0
  %v587 = vpop.f32.mrb[0].mxu0
  %v588 = vadd.f32 0.0, %v587
  %v589 = vpop.f32.mrb[0].mxu0
  %590 = vmatprep.mubr.bf16.mxu0 0
  %591 = vmatmul.mubr.bf16.gmra.mrb[0].mxu0 %v476
  %v592 = vpop.f32.mrb[0].mxu0
  %v593 = vadd.f32 0.0, %v592
  %v594 = vpop.f32.mrb[0].mxu0
  %v595 = vpop.f32.mrb[0].mxu0
  %v596 = vadd.f32 0.0, %v595
  %v597 = vpop.f32.mrb[0].mxu0
  %598 = vdwg.mxu0
  %v599 = vmul.f32 %v312, 0.17677669
  %v600 = vmul.f32 %v315, 0.17677669
  %v601 = vmul.f32 %v320, 0.17677669
  %v602 = vmul.f32 %v323, 0.17677669
  %v603 = vmul.f32 %v328, 0.17677669
  %v604 = vmul.f32 %v331, 0.17677669
  %v605 = vmul.f32 %v336, 0.17677669
  %v606 = vmul.f32 %v339, 0.17677669
  %v607 = vmul.f32 %v344, 0.17677669
  %v608 = vmul.f32 %v347, 0.17677669
  %v609 = vmul.f32 %v352, 0.17677669
  %v610 = vmul.f32 %v355, 0.17677669
  %v611 = vmul.f32 %v360, 0.17677669
  %v612 = vmul.f32 %v363, 0.17677669
  %v613 = vmul.f32 %v368, 0.17677669
  %v614 = vmul.f32 %v371, 0.17677669
  %v615 = vmul.f32 %v537, 0.17677669
  %v616 = vmul.f32 %v540, 0.17677669
  %v617 = vmul.f32 %v545, 0.17677669
  %v618 = vmul.f32 %v548, 0.17677669
  %v619 = vmul.f32 %v553, 0.17677669
  %v620 = vmul.f32 %v556, 0.17677669
  %v621 = vmul.f32 %v561, 0.17677669
  %v622 = vmul.f32 %v564, 0.17677669
  %v623 = vmul.f32 %v569, 0.17677669
  %v624 = vmul.f32 %v572, 0.17677669
  %v625 = vmul.f32 %v577, 0.17677669
  %v626 = vmul.f32 %v580, 0.17677669
  %v627 = vmul.f32 %v585, 0.17677669
  %v628 = vmul.f32 %v588, 0.17677669
  %v629 = vmul.f32 %v593, 0.17677669
  %v630 = vmul.f32 %v596, 0.17677669
  %v631 = vmax.f32 %v599, %v615
  %v632 = vmax.f32 %v600, %v616
  %v633 = vmax.f32 %v601, %v617
  %v634 = vmax.f32 %v602, %v618
  %v635 = vmax.f32 %v603, %v619
  %v636 = vmax.f32 %v604, %v620
  %v637 = vmax.f32 %v605, %v621
  %v638 = vmax.f32 %v606, %v622
  %v639 = vmax.f32 %v607, %v623
  %v640 = vmax.f32 %v608, %v624
  %v641 = vmax.f32 %v609, %v625
  %v642 = vmax.f32 %v610, %v626
  %v643 = vmax.f32 %v611, %v627
  %v644 = vmax.f32 %v612, %v628
  %v645 = vmax.f32 %v613, %v629
  %v646 = vmax.f32 %v614, %v630
  %v647 = vsub.f32 %v599, %v631
  %v648 = vsub.f32 %v600, %v632
  %v649 = vsub.f32 %v601, %v633
  %v650 = vsub.f32 %v602, %v634
  %v651 = vsub.f32 %v603, %v635
  %v652 = vsub.f32 %v604, %v636
  %v653 = vsub.f32 %v605, %v637
  %v654 = vsub.f32 %v606, %v638
  %v655 = vsub.f32 %v607, %v639
  %v656 = vsub.f32 %v608, %v640
  %v657 = vsub.f32 %v609, %v641
  %v658 = vsub.f32 %v610, %v642
  %v659 = vsub.f32 %v611, %v643
  %v660 = vsub.f32 %v612, %v644
  %v661 = vsub.f32 %v613, %v645
  %v662 = vsub.f32 %v614, %v646
  %v663 = vsub.f32 %v615, %v631
  %v664 = vsub.f32 %v616, %v632
  %v665 = vsub.f32 %v617, %v633
  %v666 = vsub.f32 %v618, %v634
  %v667 = vsub.f32 %v619, %v635
  %v668 = vsub.f32 %v620, %v636
  %v669 = vsub.f32 %v621, %v637
  %v670 = vsub.f32 %v622, %v638
  %v671 = vsub.f32 %v623, %v639
  %v672 = vsub.f32 %v624, %v640
  %v673 = vsub.f32 %v625, %v641
  %v674 = vsub.f32 %v626, %v642
  %v675 = vsub.f32 %v627, %v643
  %v676 = vsub.f32 %v628, %v644
  %v677 = vsub.f32 %v629, %v645
  %v678 = vsub.f32 %v630, %v646
  %v679 = vmul.f32 %v647, 1.442695
  %v680 = vpow.pop %v679
  %v681 = vmul.f32 %v648, 1.442695
  %v682 = vpow.pop %v681
  %v683 = vmul.f32 %v649, 1.442695
  %v684 = vpow.pop %v683
  %v685 = vmul.f32 %v650, 1.442695
  %v686 = vpow.pop %v685
  %v687 = vmul.f32 %v651, 1.442695
  %v688 = vpow.pop %v687
  %v689 = vmul.f32 %v652, 1.442695
  %v690 = vpow.pop %v689
  %v691 = vmul.f32 %v653, 1.442695
  %v692 = vpow.pop %v691
  %v693 = vmul.f32 %v654, 1.442695
  %v694 = vpow.pop %v693
  %v695 = vmul.f32 %v655, 1.442695
  %v696 = vpow.pop %v695
  %v697 = vmul.f32 %v656, 1.442695
  %v698 = vpow.pop %v697
  %v699 = vmul.f32 %v657, 1.442695
  %v700 = vpow.pop %v699
  %v701 = vmul.f32 %v658, 1.442695
  %v702 = vpow.pop %v701
  %v703 = vmul.f32 %v659, 1.442695
  %v704 = vpow.pop %v703
  %v705 = vmul.f32 %v660, 1.442695
  %v706 = vpow.pop %v705
  %v707 = vmul.f32 %v661, 1.442695
  %v708 = vpow.pop %v707
  %v709 = vmul.f32 %v662, 1.442695
  %v710 = vpow.pop %v709
  %v711 = vmul.f32 %v663, 1.442695
  %v712 = vpow.pop %v711
  %v713 = vmul.f32 %v664, 1.442695
  %v714 = vpow.pop %v713
  %v715 = vmul.f32 %v665, 1.442695
  %v716 = vpow.pop %v715
  %v717 = vmul.f32 %v666, 1.442695
  %v718 = vpow.pop %v717
  %v719 = vmul.f32 %v667, 1.442695
  %v720 = vpow.pop %v719
  %v721 = vmul.f32 %v668, 1.442695
  %v722 = vpow.pop %v721
  %v723 = vmul.f32 %v669, 1.442695
  %v724 = vpow.pop %v723
  %v725 = vmul.f32 %v670, 1.442695
  %v726 = vpow.pop %v725
  %v727 = vmul.f32 %v671, 1.442695
  %v728 = vpow.pop %v727
  %v729 = vmul.f32 %v672, 1.442695
  %v730 = vpow.pop %v729
  %v731 = vmul.f32 %v673, 1.442695
  %v732 = vpow.pop %v731
  %v733 = vmul.f32 %v674, 1.442695
  %v734 = vpow.pop %v733
  %v735 = vmul.f32 %v675, 1.442695
  %v736 = vpow.pop %v735
  %v737 = vmul.f32 %v676, 1.442695
  %v738 = vpow.pop %v737
  %v739 = vmul.f32 %v677, 1.442695
  %v740 = vpow.pop %v739
  %v741 = vmul.f32 %v678, 1.442695
  %v742 = vpow.pop %v741
  %v743 = vadd.f32 %v680, %v712
  %v744 = vadd.f32 %v682, %v714
  %v745 = vadd.f32 %v684, %v716
  %v746 = vadd.f32 %v686, %v718
  %v747 = vadd.f32 %v688, %v720
  %v748 = vadd.f32 %v690, %v722
  %v749 = vadd.f32 %v692, %v724
  %v750 = vadd.f32 %v694, %v726
  %v751 = vadd.f32 %v696, %v728
  %v752 = vadd.f32 %v698, %v730
  %v753 = vadd.f32 %v700, %v732
  %v754 = vadd.f32 %v702, %v734
  %v755 = vadd.f32 %v704, %v736
  %v756 = vadd.f32 %v706, %v738
  %v757 = vadd.f32 %v708, %v740
  %v758 = vadd.f32 %v710, %v742
  %v759 = vrcp.pop %v743
  %v760 = vrcp.pop %v744
  %v761 = vrcp.pop %v745
  %v762 = vrcp.pop %v746
  %v763 = vrcp.pop %v747
  %v764 = vrcp.pop %v748
  %v765 = vrcp.pop %v749
  %v766 = vrcp.pop %v750
  %v767 = vrcp.pop %v751
  %v768 = vrcp.pop %v752
  %v769 = vrcp.pop %v753
  %v770 = vrcp.pop %v754
  %v771 = vrcp.pop %v755
  %v772 = vrcp.pop %v756
  %v773 = vrcp.pop %v757
  %v774 = vrcp.pop %v758
  %v775 = vmul.f32 %v680, %v759
  %v776 = vmul.f32 %v682, %v760
  %v777 = vmul.f32 %v684, %v761
  %v778 = vmul.f32 %v686, %v762
  %v779 = vmul.f32 %v688, %v763
  %v780 = vmul.f32 %v690, %v764
  %v781 = vmul.f32 %v692, %v765
  %v782 = vmul.f32 %v694, %v766
  %v783 = vmul.f32 %v696, %v767
  %v784 = vmul.f32 %v698, %v768
  %v785 = vmul.f32 %v700, %v769
  %v786 = vmul.f32 %v702, %v770
  %v787 = vmul.f32 %v704, %v771
  %v788 = vmul.f32 %v706, %v772
  %v789 = vmul.f32 %v708, %v773
  %v790 = vmul.f32 %v710, %v774
  %v791 = vmul.f32 %v712, %v759
  %v792 = vmul.f32 %v714, %v760
  %v793 = vmul.f32 %v716, %v761
  %v794 = vmul.f32 %v718, %v762
  %v795 = vmul.f32 %v720, %v763
  %v796 = vmul.f32 %v722, %v764
  %v797 = vmul.f32 %v724, %v765
  %v798 = vmul.f32 %v726, %v766
  %v799 = vmul.f32 %v728, %v767
  %v800 = vmul.f32 %v730, %v768
  %v801 = vmul.f32 %v732, %v769
  %v802 = vmul.f32 %v734, %v770
  %v803 = vmul.f32 %v736, %v771
  %v804 = vmul.f32 %v738, %v772
  %v805 = vmul.f32 %v740, %v773
  %v806 = vmul.f32 %v742, %v774
  %v807 = vld [vmem:[#allocation2] sm:$0xff]
  %v808 = vld [vmem:[#allocation2 + $0x8] sm:$0xff]
  %v809 = vld [vmem:[#allocation2 + $0x10] sm:$0xff]
  %v810 = vld [vmem:[#allocation2 + $0x18] sm:$0xff]
  %v811 = vld [vmem:[#allocation2 + $0x20] sm:$0xff]
  %v812 = vld [vmem:[#allocation2 + $0x28] sm:$0xff]
  %v813 = vld [vmem:[#allocation2 + $0x30] sm:$0xff]
  %v814 = vld [vmem:[#allocation2 + $0x38] sm:$0xff]
  %v815 = vld [vmem:[#allocation2 + $0x40] sm:$0xff]
  %v816 = vld [vmem:[#allocation2 + $0x48] sm:$0xff]
  %v817 = vld [vmem:[#allocation2 + $0x50] sm:$0xff]
  %v818 = vld [vmem:[#allocation2 + $0x58] sm:$0xff]
  %v819 = vld [vmem:[#allocation2 + $0x60] sm:$0xff]
  %v820 = vld [vmem:[#allocation2 + $0x68] sm:$0xff]
  %v821 = vld [vmem:[#allocation2 + $0x70] sm:$0xff]
  %v822 = vld [vmem:[#allocation2 + $0x78] sm:$0xff]
  %v823 = vld [vmem:[#allocation2 + $0x80] sm:$0xff]
  %v824 = vld [vmem:[#allocation2 + $0x88] sm:$0xff]
  %v825 = vld [vmem:[#allocation2 + $0x90] sm:$0xff]
  %v826 = vld [vmem:[#allocation2 + $0x98] sm:$0xff]
  %v827 = vld [vmem:[#allocation2 + $0xa0] sm:$0xff]
  %v828 = vld [vmem:[#allocation2 + $0xa8] sm:$0xff]
  %v829 = vld [vmem:[#allocation2 + $0xb0] sm:$0xff]
  %v830 = vld [vmem:[#allocation2 + $0xb8] sm:$0xff]
  %v831 = vld [vmem:[#allocation2 + $0xc0] sm:$0xff]
  %v832 = vld [vmem:[#allocation2 + $0xc8] sm:$0xff]
  %v833 = vld [vmem:[#allocation2 + $0xd0] sm:$0xff]
  %v834 = vld [vmem:[#allocation2 + $0xd8] sm:$0xff]
  %v835 = vld [vmem:[#allocation2 + $0xe0] sm:$0xff]
  %v836 = vld [vmem:[#allocation2 + $0xe8] sm:$0xff]
  %v837 = vld [vmem:[#allocation2 + $0xf0] sm:$0xff]
  %v838 = vld [vmem:[#allocation2 + $0xf8] sm:$0xff]
  %v839 = vpack.c.bf16 %v776, %v775
  %v840 = vpack.c.bf16 %v778, %v777
  %v841 = vpack.c.bf16 %v780, %v779
  %v842 = vpack.c.bf16 %v782, %v781
  %v843 = vpack.c.bf16 %v784, %v783
  %v844 = vpack.c.bf16 %v786, %v785
  %v845 = vpack.c.bf16 %v788, %v787
  %v846 = vpack.c.bf16 %v790, %v789
  %v847 = vpack.c.bf16 %v792, %v791
  %v848 = vpack.c.bf16 %v794, %v793
  %v849 = vpack.c.bf16 %v796, %v795
  %v850 = vpack.c.bf16 %v798, %v797
  %v851 = vpack.c.bf16 %v800, %v799
  %v852 = vpack.c.bf16 %v802, %v801
  %v853 = vpack.c.bf16 %v804, %v803
  %v854 = vpack.c.bf16 %v806, %v805
  %v871 = vunpack.c.l.b16 %v116
  %v872 = vunpack.c.l.b16 %v117
  %v873 = vunpack.c.l.b16 %v118
  %v874 = vunpack.c.l.b16 %v119
  %v875 = vunpack.c.l.b16 %v120
  %v876 = vunpack.c.l.b16 %v121
  %v877 = vunpack.c.l.b16 %v122
  %v878 = vunpack.c.l.b16 %v123
  %v879 = vunpack.c.l.b16 %v124
  %v880 = vunpack.c.l.b16 %v125
  %v881 = vunpack.c.l.b16 %v126
  %v882 = vunpack.c.l.b16 %v127
  %v883 = vunpack.c.l.b16 %v128
  %v884 = vunpack.c.l.b16 %v129
  %v885 = vunpack.c.l.b16 %v130
  %v886 = vunpack.c.l.b16 %v131
  %v887 = vpack.c.b16 %v872, %v871
  %v888 = vpack.c.b16 %v874, %v873
  %v889 = vpack.c.b16 %v876, %v875
  %v890 = vpack.c.b16 %v878, %v877
  %v891 = vpack.c.b16 %v880, %v879
  %v892 = vpack.c.b16 %v882, %v881
  %v893 = vpack.c.b16 %v884, %v883
  %v894 = vpack.c.b16 %v886, %v885
  %903 = vmatprep.subr.bf16.mxu0 0
  %904 = vmatpush1.bf16.msra.mxu0 %v887
  %905 = vmatprep.subr.bf16.mxu0 0
  %906 = vmatpush1.bf16.msra.mxu0 %v888
  %907 = vmatprep.subr.bf16.mxu0 0
  %908 = vmatpush1.bf16.msra.mxu0 %v889
  %909 = vmatprep.subr.bf16.mxu0 0
  %910 = vmatpush1.bf16.msra.mxu0 %v890
  %911 = vmatprep.subr.bf16.mxu0 0
  %912 = vmatpush1.bf16.msra.mxu0 %v891
  %913 = vmatprep.subr.bf16.mxu0 0
  %914 = vmatpush1.bf16.msra.mxu0 %v892
  %915 = vmatprep.subr.bf16.mxu0 0
  %916 = vmatpush1.bf16.msra.mxu0 %v893
  %917 = vmatprep.subr.bf16.mxu0 0
  %918 = vmatpush1.bf16.msra.mxu0 %v894
  %919 = vmatprep.subr.bf16.mxu0 0
  %920 = vmatpush1.bf16.msra.mxu0 0
  %921 = vmatprep.subr.bf16.mxu0 0
  %922 = vmatpush1.bf16.msra.mxu0 0
  %923 = vmatprep.subr.bf16.mxu0 0
  %924 = vmatpush1.bf16.msra.mxu0 0
  %925 = vmatprep.subr.bf16.mxu0 0
  %926 = vmatpush1.bf16.msra.mxu0 0
  %927 = vmatprep.subr.bf16.mxu0 0
  %928 = vmatpush1.bf16.msra.mxu0 0
  %929 = vmatprep.subr.bf16.mxu0 0
  %930 = vmatpush1.bf16.msra.mxu0 0
  %931 = vmatprep.subr.bf16.mxu0 0
  %932 = vmatpush1.bf16.msra.mxu0 0
  %933 = vmatprep.subr.bf16.mxu0 0
  %934 = vmatpush1.bf16.msra.mxu0 0
  %935 = vmatprep.mubr.bf16.mxu0 0
  %936 = vmatmul.mubr.bf16.gmra.mrb[0].mxu0 %v839
  %v937 = vpop.f32.mrb[0].mxu0
  %v938 = vadd.f32 0.0, %v937
  %v939 = vpop.f32.mrb[0].mxu0
  %v940 = vpop.f32.mrb[0].mxu0
  %v941 = vadd.f32 0.0, %v940
  %v942 = vpop.f32.mrb[0].mxu0
  %943 = vmatprep.mubr.bf16.mxu0 0
  %944 = vmatmul.mubr.bf16.gmra.mrb[0].mxu0 %v840
  %v945 = vpop.f32.mrb[0].mxu0
  %v946 = vadd.f32 0.0, %v945
  %v947 = vpop.f32.mrb[0].mxu0
  %v948 = vpop.f32.mrb[0].mxu0
  %v949 = vadd.f32 0.0, %v948
  %v950 = vpop.f32.mrb[0].mxu0
  %951 = vmatprep.mubr.bf16.mxu0 0
  %952 = vmatmul.mubr.bf16.gmra.mrb[0].mxu0 %v841
  %v953 = vpop.f32.mrb[0].mxu0
  %v954 = vadd.f32 0.0, %v953
  %v955 = vpop.f32.mrb[0].mxu0
  %v956 = vpop.f32.mrb[0].mxu0
  %v957 = vadd.f32 0.0, %v956
  %v958 = vpop.f32.mrb[0].mxu0
  %959 = vmatprep.mubr.bf16.mxu0 0
  %960 = vmatmul.mubr.bf16.gmra.mrb[0].mxu0 %v842
  %v961 = vpop.f32.mrb[0].mxu0
  %v962 = vadd.f32 0.0, %v961
  %v963 = vpop.f32.mrb[0].mxu0
  %v964 = vpop.f32.mrb[0].mxu0
  %v965 = vadd.f32 0.0, %v964
  %v966 = vpop.f32.mrb[0].mxu0
  %967 = vmatprep.mubr.bf16.mxu0 0
  %968 = vmatmul.mubr.bf16.gmra.mrb[0].mxu0 %v843
  %v969 = vpop.f32.mrb[0].mxu0
  %v970 = vadd.f32 0.0, %v969
  %v971 = vpop.f32.mrb[0].mxu0
  %v972 = vpop.f32.mrb[0].mxu0
  %v973 = vadd.f32 0.0, %v972
  %v974 = vpop.f32.mrb[0].mxu0
  %975 = vmatprep.mubr.bf16.mxu0 0
  %976 = vmatmul.mubr.bf16.gmra.mrb[0].mxu0 %v844
  %v977 = vpop.f32.mrb[0].mxu0
  %v978 = vadd.f32 0.0, %v977
  %v979 = vpop.f32.mrb[0].mxu0
  %v980 = vpop.f32.mrb[0].mxu0
  %v981 = vadd.f32 0.0, %v980
  %v982 = vpop.f32.mrb[0].mxu0
  %983 = vmatprep.mubr.bf16.mxu0 0
  %984 = vmatmul.mubr.bf16.gmra.mrb[0].mxu0 %v845
  %v985 = vpop.f32.mrb[0].mxu0
  %v986 = vadd.f32 0.0, %v985
  %v987 = vpop.f32.mrb[0].mxu0
  %v988 = vpop.f32.mrb[0].mxu0
  %v989 = vadd.f32 0.0, %v988
  %v990 = vpop.f32.mrb[0].mxu0
  %991 = vmatprep.mubr.bf16.mxu0 0
  %992 = vmatmul.mubr.bf16.gmra.mrb[0].mxu0 %v846
  %v993 = vpop.f32.mrb[0].mxu0
  %v994 = vadd.f32 0.0, %v993
  %v995 = vpop.f32.mrb[0].mxu0
  %v996 = vpop.f32.mrb[0].mxu0
  %v997 = vadd.f32 0.0, %v996
  %v998 = vpop.f32.mrb[0].mxu0
  %999 = vdwg.mxu0
  %v1016 = vunpack.c.l.b16 %v132
  %v1017 = vunpack.c.l.b16 %v133
  %v1018 = vunpack.c.l.b16 %v134
  %v1019 = vunpack.c.l.b16 %v135
  %v1020 = vunpack.c.l.b16 %v136
  %v1021 = vunpack.c.l.b16 %v137
  %v1022 = vunpack.c.l.b16 %v138
  %v1023 = vunpack.c.l.b16 %v139
  %v1024 = vunpack.c.l.b16 %v140
  %v1025 = vunpack.c.l.b16 %v141
  %v1026 = vunpack.c.l.b16 %v142
  %v1027 = vunpack.c.l.b16 %v143
  %v1028 = vunpack.c.l.b16 %v144
  %v1029 = vunpack.c.l.b16 %v145
  %v1030 = vunpack.c.l.b16 %v146
  %v1031 = vunpack.c.l.b16 %v147
  %v1032 = vpack.c.b16 %v1017, %v1016
  %v1033 = vpack.c.b16 %v1019, %v1018
  %v1034 = vpack.c.b16 %v1021, %v1020
  %v1035 = vpack.c.b16 %v1023, %v1022
  %v1036 = vpack.c.b16 %v1025, %v1024
  %v1037 = vpack.c.b16 %v1027, %v1026
  %v1038 = vpack.c.b16 %v1029, %v1028
  %v1039 = vpack.c.b16 %v1031, %v1030
  %1048 = vmatprep.subr.bf16.mxu0 0
  %1049 = vmatpush1.bf16.msra.mxu0 %v1032
  %1050 = vmatprep.subr.bf16.mxu0 0
  %1051 = vmatpush1.bf16.msra.mxu0 %v1033
  %1052 = vmatprep.subr.bf16.mxu0 0
  %1053 = vmatpush1.bf16.msra.mxu0 %v1034
  %1054 = vmatprep.subr.bf16.mxu0 0
  %1055 = vmatpush1.bf16.msra.mxu0 %v1035
  %1056 = vmatprep.subr.bf16.mxu0 0
  %1057 = vmatpush1.bf16.msra.mxu0 %v1036
  %1058 = vmatprep.subr.bf16.mxu0 0
  %1059 = vmatpush1.bf16.msra.mxu0 %v1037
  %1060 = vmatprep.subr.bf16.mxu0 0
  %1061 = vmatpush1.bf16.msra.mxu0 %v1038
  %1062 = vmatprep.subr.bf16.mxu0 0
  %1063 = vmatpush1.bf16.msra.mxu0 %v1039
  %1064 = vmatprep.subr.bf16.mxu0 0
  %1065 = vmatpush1.bf16.msra.mxu0 0
  %1066 = vmatprep.subr.bf16.mxu0 0
  %1067 = vmatpush1.bf16.msra.mxu0 0
  %1068 = vmatprep.subr.bf16.mxu0 0
  %1069 = vmatpush1.bf16.msra.mxu0 0
  %1070 = vmatprep.subr.bf16.mxu0 0
  %1071 = vmatpush1.bf16.msra.mxu0 0
  %1072 = vmatprep.subr.bf16.mxu0 0
  %1073 = vmatpush1.bf16.msra.mxu0 0
  %1074 = vmatprep.subr.bf16.mxu0 0
  %1075 = vmatpush1.bf16.msra.mxu0 0
  %1076 = vmatprep.subr.bf16.mxu0 0
  %1077 = vmatpush1.bf16.msra.mxu0 0
  %1078 = vmatprep.subr.bf16.mxu0 0
  %1079 = vmatpush1.bf16.msra.mxu0 0
  %1080 = vmatprep.mubr.bf16.mxu0 0
  %1081 = vmatmul.mubr.bf16.gmra.mrb[0].mxu0 %v847
  %v1082 = vpop.f32.mrb[0].mxu0
  %v1083 = vadd.f32 0.0, %v1082
  %v1084 = vpop.f32.mrb[0].mxu0
  %v1085 = vpop.f32.mrb[0].mxu0
  %v1086 = vadd.f32 0.0, %v1085
  %v1087 = vpop.f32.mrb[0].mxu0
  %1088 = vmatprep.mubr.bf16.mxu0 0
  %1089 = vmatmul.mubr.bf16.gmra.mrb[0].mxu0 %v848
  %v1090 = vpop.f32.mrb[0].mxu0
  %v1091 = vadd.f32 0.0, %v1090
  %v1092 = vpop.f32.mrb[0].mxu0
  %v1093 = vpop.f32.mrb[0].mxu0
  %v1094 = vadd.f32 0.0, %v1093
  %v1095 = vpop.f32.mrb[0].mxu0
  %1096 = vmatprep.mubr.bf16.mxu0 0
  %1097 = vmatmul.mubr.bf16.gmra.mrb[0].mxu0 %v849
  %v1098 = vpop.f32.mrb[0].mxu0
  %v1099 = vadd.f32 0.0, %v1098
  %v1100 = vpop.f32.mrb[0].mxu0
  %v1101 = vpop.f32.mrb[0].mxu0
  %v1102 = vadd.f32 0.0, %v1101
  %v1103 = vpop.f32.mrb[0].mxu0
  %1104 = vmatprep.mubr.bf16.mxu0 0
  %1105 = vmatmul.mubr.bf16.gmra.mrb[0].mxu0 %v850
  %v1106 = vpop.f32.mrb[0].mxu0
  %v1107 = vadd.f32 0.0, %v1106
  %v1108 = vpop.f32.mrb[0].mxu0
  %v1109 = vpop.f32.mrb[0].mxu0
  %v1110 = vadd.f32 0.0, %v1109
  %v1111 = vpop.f32.mrb[0].mxu0
  %1112 = vmatprep.mubr.bf16.mxu0 0
  %1113 = vmatmul.mubr.bf16.gmra.mrb[0].mxu0 %v851
  %v1114 = vpop.f32.mrb[0].mxu0
  %v1115 = vadd.f32 0.0, %v1114
  %v1116 = vpop.f32.mrb[0].mxu0
  %v1117 = vpop.f32.mrb[0].mxu0
  %v1118 = vadd.f32 0.0, %v1117
  %v1119 = vpop.f32.mrb[0].mxu0
  %1120 = vmatprep.mubr.bf16.mxu0 0
  %1121 = vmatmul.mubr.bf16.gmra.mrb[0].mxu0 %v852
  %v1122 = vpop.f32.mrb[0].mxu0
  %v1123 = vadd.f32 0.0, %v1122
  %v1124 = vpop.f32.mrb[0].mxu0
  %v1125 = vpop.f32.mrb[0].mxu0
  %v1126 = vadd.f32 0.0, %v1125
  %v1127 = vpop.f32.mrb[0].mxu0
  %1128 = vmatprep.mubr.bf16.mxu0 0
  %1129 = vmatmul.mubr.bf16.gmra.mrb[0].mxu0 %v853
  %v1130 = vpop.f32.mrb[0].mxu0
  %v1131 = vadd.f32 0.0, %v1130
  %v1132 = vpop.f32.mrb[0].mxu0
  %v1133 = vpop.f32.mrb[0].mxu0
  %v1134 = vadd.f32 0.0, %v1133
  %v1135 = vpop.f32.mrb[0].mxu0
  %1136 = vmatprep.mubr.bf16.mxu0 0
  %1137 = vmatmul.mubr.bf16.gmra.mrb[0].mxu0 %v854
  %v1138 = vpop.f32.mrb[0].mxu0
  %v1139 = vadd.f32 0.0, %v1138
  %v1140 = vpop.f32.mrb[0].mxu0
  %v1141 = vpop.f32.mrb[0].mxu0
  %v1142 = vadd.f32 0.0, %v1141
  %v1143 = vpop.f32.mrb[0].mxu0
  %1144 = vdwg.mxu0
  %v1145 = vadd.f32 %v807, %v938
  %v1146 = vadd.f32 %v808, %v941
  %v1147 = vadd.f32 %v809, %v946
  %v1148 = vadd.f32 %v810, %v949
  %v1149 = vadd.f32 %v811, %v954
  %v1150 = vadd.f32 %v812, %v957
  %v1151 = vadd.f32 %v813, %v962
  %v1152 = vadd.f32 %v814, %v965
  %v1153 = vadd.f32 %v815, %v970
  %v1154 = vadd.f32 %v816, %v973
  %v1155 = vadd.f32 %v817, %v978
  %v1156 = vadd.f32 %v818, %v981
  %v1157 = vadd.f32 %v819, %v986
  %v1158 = vadd.f32 %v820, %v989
  %v1159 = vadd.f32 %v821, %v994
  %v1160 = vadd.f32 %v822, %v997
  %v1161 = vadd.f32 %v823, %v1083
  %v1162 = vadd.f32 %v824, %v1086
  %v1163 = vadd.f32 %v825, %v1091
  %v1164 = vadd.f32 %v826, %v1094
  %v1165 = vadd.f32 %v827, %v1099
  %v1166 = vadd.f32 %v828, %v1102
  %v1167 = vadd.f32 %v829, %v1107
  %v1168 = vadd.f32 %v830, %v1110
  %v1169 = vadd.f32 %v831, %v1115
  %v1170 = vadd.f32 %v832, %v1118
  %v1171 = vadd.f32 %v833, %v1123
  %v1172 = vadd.f32 %v834, %v1126
  %v1173 = vadd.f32 %v835, %v1131
  %v1174 = vadd.f32 %v836, %v1134
  %v1175 = vadd.f32 %v837, %v1139
  %v1176 = vadd.f32 %v838, %v1142
  %1177 = vst.msk [vmem:[#allocation2] sm:$0xff] %vm228, %v1145
  %1178 = vst.msk [vmem:[#allocation2 + $0x8] sm:$0xff] %vm228, %v1146
  %1179 = vst.msk [vmem:[#allocation2 + $0x10] sm:$0xff] %vm228, %v1147
  %1180 = vst.msk [vmem:[#allocation2 + $0x18] sm:$0xff] %vm228, %v1148
  %1181 = vst.msk [vmem:[#allocation2 + $0x20] sm:$0xff] %vm228, %v1149
  %1182 = vst.msk [vmem:[#allocation2 + $0x28] sm:$0xff] %vm228, %v1150
  %1183 = vst.msk [vmem:[#allocation2 + $0x30] sm:$0xff] %vm228, %v1151
  %1184 = vst.msk [vmem:[#allocation2 + $0x38] sm:$0xff] %vm228, %v1152
  %1185 = vst.msk [vmem:[#allocation2 + $0x40] sm:$0xff] %vm228, %v1153
  %1186 = vst.msk [vmem:[#allocation2 + $0x48] sm:$0xff] %vm228, %v1154
  %1187 = vst.msk [vmem:[#allocation2 + $0x50] sm:$0xff] %vm228, %v1155
  %1188 = vst.msk [vmem:[#allocation2 + $0x58] sm:$0xff] %vm228, %v1156
  %1189 = vst.msk [vmem:[#allocation2 + $0x60] sm:$0xff] %vm228, %v1157
  %1190 = vst.msk [vmem:[#allocation2 + $0x68] sm:$0xff] %vm228, %v1158
  %1191 = vst.msk [vmem:[#allocation2 + $0x70] sm:$0xff] %vm228, %v1159
  %1192 = vst.msk [vmem:[#allocation2 + $0x78] sm:$0xff] %vm228, %v1160
  %1193 = vst.msk [vmem:[#allocation2 + $0x80] sm:$0xff] %vm228, %v1161
  %1194 = vst.msk [vmem:[#allocation2 + $0x88] sm:$0xff] %vm228, %v1162
  %1195 = vst.msk [vmem:[#allocation2 + $0x90] sm:$0xff] %vm228, %v1163
  %1196 = vst.msk [vmem:[#allocation2 + $0x98] sm:$0xff] %vm228, %v1164
  %1197 = vst.msk [vmem:[#allocation2 + $0xa0] sm:$0xff] %vm228, %v1165
  %1198 = vst.msk [vmem:[#allocation2 + $0xa8] sm:$0xff] %vm228, %v1166
  %1199 = vst.msk [vmem:[#allocation2 + $0xb0] sm:$0xff] %vm228, %v1167
  %1200 = vst.msk [vmem:[#allocation2 + $0xb8] sm:$0xff] %vm228, %v1168
  %1201 = vst.msk [vmem:[#allocation2 + $0xc0] sm:$0xff] %vm228, %v1169
  %1202 = vst.msk [vmem:[#allocation2 + $0xc8] sm:$0xff] %vm228, %v1170
  %1203 = vst.msk [vmem:[#allocation2 + $0xd0] sm:$0xff] %vm228, %v1171
  %1204 = vst.msk [vmem:[#allocation2 + $0xd8] sm:$0xff] %vm228, %v1172
  %1205 = vst.msk [vmem:[#allocation2 + $0xe0] sm:$0xff] %vm228, %v1173
  %1206 = vst.msk [vmem:[#allocation2 + $0xe8] sm:$0xff] %vm228, %v1174
  %1207 = vst.msk [vmem:[#allocation2 + $0xf0] sm:$0xff] %vm228, %v1175
  %1208 = vst.msk [vmem:[#allocation2 + $0xf8] sm:$0xff] %vm228, %v1176
  // Predicated region
  $region18: #{anomaly_attention.5} parent=0 // pred_check
    %p1209 = pneg %p15
  $region19: #{anomaly_attention.5} parent=0 // pred_check_branch
    %1211 = sbr.rel (%p1209) target = $region21
  $region20: #{anomaly_attention.5} parent=0 // pred_region
    %v1212 = vld [vmem:[#allocation2] sm:$0xff]
    %v1213 = vld [vmem:[#allocation2 + $0x8] sm:$0xff]
    %v1214 = vld [vmem:[#allocation2 + $0x10] sm:$0xff]
    %v1215 = vld [vmem:[#allocation2 + $0x18] sm:$0xff]
    %v1216 = vld [vmem:[#allocation2 + $0x20] sm:$0xff]
    %v1217 = vld [vmem:[#allocation2 + $0x28] sm:$0xff]
    %v1218 = vld [vmem:[#allocation2 + $0x30] sm:$0xff]
    %v1219 = vld [vmem:[#allocation2 + $0x38] sm:$0xff]
    %v1220 = vld [vmem:[#allocation2 + $0x40] sm:$0xff]
    %v1221 = vld [vmem:[#allocation2 + $0x48] sm:$0xff]
    %v1222 = vld [vmem:[#allocation2 + $0x50] sm:$0xff]
    %v1223 = vld [vmem:[#allocation2 + $0x58] sm:$0xff]
    %v1224 = vld [vmem:[#allocation2 + $0x60] sm:$0xff]
    %v1225 = vld [vmem:[#allocation2 + $0x68] sm:$0xff]
    %v1226 = vld [vmem:[#allocation2 + $0x70] sm:$0xff]
    %v1227 = vld [vmem:[#allocation2 + $0x78] sm:$0xff]
    %v1228 = vld [vmem:[#allocation2 + $0x80] sm:$0xff]
    %v1229 = vld [vmem:[#allocation2 + $0x88] sm:$0xff]
    %v1230 = vld [vmem:[#allocation2 + $0x90] sm:$0xff]
    %v1231 = vld [vmem:[#allocation2 + $0x98] sm:$0xff]
    %v1232 = vld [vmem:[#allocation2 + $0xa0] sm:$0xff]
    %v1233 = vld [vmem:[#allocation2 + $0xa8] sm:$0xff]
    %v1234 = vld [vmem:[#allocation2 + $0xb0] sm:$0xff]
    %v1235 = vld [vmem:[#allocation2 + $0xb8] sm:$0xff]
    %v1236 = vld [vmem:[#allocation2 + $0xc0] sm:$0xff]
    %v1237 = vld [vmem:[#allocation2 + $0xc8] sm:$0xff]
    %v1238 = vld [vmem:[#allocation2 + $0xd0] sm:$0xff]
    %v1239 = vld [vmem:[#allocation2 + $0xd8] sm:$0xff]
    %v1240 = vld [vmem:[#allocation2 + $0xe0] sm:$0xff]
    %v1241 = vld [vmem:[#allocation2 + $0xe8] sm:$0xff]
    %v1242 = vld [vmem:[#allocation2 + $0xf0] sm:$0xff]
    %v1243 = vld [vmem:[#allocation2 + $0xf8] sm:$0xff]
    %1244 = vst.msk [vmem:[%s3] sm:$0xff] %vm228, %v1212
    %1245 = vst.msk [vmem:[%s3 + $0x8] sm:$0xff] %vm228, %v1213
    %1246 = vst.msk [vmem:[%s3 + $0x10] sm:$0xff] %vm228, %v1214
    %1247 = vst.msk [vmem:[%s3 + $0x18] sm:$0xff] %vm228, %v1215
    %1248 = vst.msk [vmem:[%s3 + $0x20] sm:$0xff] %vm228, %v1216
    %1249 = vst.msk [vmem:[%s3 + $0x28] sm:$0xff] %vm228, %v1217
    %1250 = vst.msk [vmem:[%s3 + $0x30] sm:$0xff] %vm228, %v1218
    %1251 = vst.msk [vmem:[%s3 + $0x38] sm:$0xff] %vm228, %v1219
    %1252 = vst.msk [vmem:[%s3 + $0x40] sm:$0xff] %vm228, %v1220
    %1253 = vst.msk [vmem:[%s3 + $0x48] sm:$0xff] %vm228, %v1221
    %1254 = vst.msk [vmem:[%s3 + $0x50] sm:$0xff] %vm228, %v1222
    %1255 = vst.msk [vmem:[%s3 + $0x58] sm:$0xff] %vm228, %v1223
    %1256 = vst.msk [vmem:[%s3 + $0x60] sm:$0xff] %vm228, %v1224
    %1257 = vst.msk [vmem:[%s3 + $0x68] sm:$0xff] %vm228, %v1225
    %1258 = vst.msk [vmem:[%s3 + $0x70] sm:$0xff] %vm228, %v1226
    %1259 = vst.msk [vmem:[%s3 + $0x78] sm:$0xff] %vm228, %v1227
    %1260 = vst.msk [vmem:[%s3 + $0x80] sm:$0xff] %vm228, %v1228
    %1261 = vst.msk [vmem:[%s3 + $0x88] sm:$0xff] %vm228, %v1229
    %1262 = vst.msk [vmem:[%s3 + $0x90] sm:$0xff] %vm228, %v1230
    %1263 = vst.msk [vmem:[%s3 + $0x98] sm:$0xff] %vm228, %v1231
    %1264 = vst.msk [vmem:[%s3 + $0xa0] sm:$0xff] %vm228, %v1232
    %1265 = vst.msk [vmem:[%s3 + $0xa8] sm:$0xff] %vm228, %v1233
    %1266 = vst.msk [vmem:[%s3 + $0xb0] sm:$0xff] %vm228, %v1234
    %1267 = vst.msk [vmem:[%s3 + $0xb8] sm:$0xff] %vm228, %v1235
    %1268 = vst.msk [vmem:[%s3 + $0xc0] sm:$0xff] %vm228, %v1236
    %1269 = vst.msk [vmem:[%s3 + $0xc8] sm:$0xff] %vm228, %v1237
    %1270 = vst.msk [vmem:[%s3 + $0xd0] sm:$0xff] %vm228, %v1238
    %1271 = vst.msk [vmem:[%s3 + $0xd8] sm:$0xff] %vm228, %v1239
    %1272 = vst.msk [vmem:[%s3 + $0xe0] sm:$0xff] %vm228, %v1240
    %1273 = vst.msk [vmem:[%s3 + $0xe8] sm:$0xff] %vm228, %v1241
    %1274 = vst.msk [vmem:[%s3 + $0xf0] sm:$0xff] %vm228, %v1242
    %1275 = vst.msk [vmem:[%s3 + $0xf8] sm:$0xff] %vm228, %v1243
  $region21: #{anomaly_attention.5} parent=0 // pred_fallthru
    _
  // Predicated region
  $region22: #{anomaly_attention.5} parent=0 // pred_check
    _
  $region23: #{anomaly_attention.5} parent=0 // pred_check_branch
    %1277 = sbr.rel (0) target = $region25
  $region24: #{anomaly_attention.5} parent=0 // pred_region
    _
  $region25: #{anomaly_attention.5} parent=0 // pred_fallthru
    _
  // Predicated region
  $region26: #{anomaly_attention.5} parent=0 // pred_check
    _
  $region27: #{anomaly_attention.5} parent=0 // pred_check_branch
    %1279 = sbr.rel (0) target = $region29
  $region28: #{anomaly_attention.5} parent=0 // pred_region
    _
  $region29: #{anomaly_attention.5} parent=0 // pred_fallthru
    _

</llo_original>
